<compile_context>
chip_gen: v7x
topology: tpu7x:2x2x1
jax: 0.10.0
libtpu: 0.0.40
codegen_flags: <defaults>
</compile_context>

<pallas_src>
import jax
import jax.numpy as jnp
import numpy as np
from jax.experimental import pallas as pl
from jax.experimental.pallas import tpu as pltpu

# ---- model / example dimensions (obs_dim == latent_dim so the ODE state
#      shapes are consistent) --------------------------------------------------
B, T = 2, 8          # batch, encoder sequence length
LATENT = 4           # latent_dim == obs_dim
HID = 32             # nhidden
AUG = 2              # augment_dim (> 0 so the output slice is non-empty)
D = LATENT + AUG     # ODE state dimension
NT = 8               # number of requested time points (len(flatten(ti)))

H3 = 3 * HID                          # fused gate width (r | z | n)
H3_PAD = ((H3 + 127) // 128) * 128    # lane-tile aligned offset for the fused h0 matmul


def latent_node_kernel(t_ref, traj_ref,
                       wi0_ref, bi0_ref, bhn0_ref, w0c_ref,
                       wh1_ref, bi1_ref, bhn1_ref,
                       lw_ref, lb_ref,
                       f1wt_ref, f1b_ref, f1wxl_ref,
                       f15w_ref, f15b_ref,
                       wf_ref, cf_ref,
                       f2wo_ref, f2bo_ref,
                       out_ref):
    # t_ref: (NT,) in SMEM.  traj_ref: (T*B, LATENT), row s*B+b = traj[b, s, :].
    # out_ref: (B, NT*AUG)  (row-major identical to (B, NT, AUG)).
    f32 = jnp.float32
    H = HID

    def sigmoid(x):
        # Single-EUP sigmoid: 0.5*tanh(0.5*x)+0.5 == 1/(1+exp(-x)).
        return 0.5 * jnp.tanh(0.5 * x) + 0.5

    def cell(gx, gh, h, bhn):
        # gx already carries (b_ir+b_hr | b_iz+b_hz | b_in); gh is h @ Wh only,
        # with b_hn kept separate (it sits inside r*(...)).
        gsum = gx + gh
        rz = sigmoid(gsum[:, 0:2 * H])          # one EUP push for both r and z
        r = rz[:, 0:H]
        z = rz[:, H:2 * H]
        n = jnp.tanh(gx[:, 2 * H:H3] + r * (gh[:, 2 * H:H3] + bhn))
        return n + z * (h - n)                  # == (1-z)*n + z*h

    wi0 = wi0_ref[...]        # (LATENT, 3H)
    bi0 = bi0_ref[...]        # (1, 3H)
    bhn0 = bhn0_ref[...]      # (1, H)
    w0c = w0c_ref[...]        # (H, 2*H3_PAD) = [wh0 @ lanes 0:3H | wi1 @ lanes H3_PAD:H3_PAD+3H]
    wh1 = wh1_ref[...]        # (H, 3H)
    bi1 = bi1_ref[...]
    bhn1 = bhn1_ref[...]

    # All T layer-0 input projections in a single MXU push (independent of the
    # hidden state, so entirely off the serial recurrence).
    gx0_all = jnp.dot(traj_ref[...], wi0, preferred_element_type=f32) + bi0   # (T*B, 3H)

    # ---- 2-layer GRU encoder, fully unrolled (T = 8) -------------------------
    h0 = jnp.zeros((B, H), f32)
    h1 = jnp.zeros((B, H), f32)
    gh0 = jnp.zeros((B, H3), f32)              # h0_{-1} == 0  =>  h0 @ wh0 == 0
    for s in range(T):
        h0 = cell(gx0_all[s * B:(s + 1) * B, :], gh0, h0, bhn0)
        # One fused matmul for both consumers of the fresh h0:
        #   lanes [0:3H)               -> layer-0 hidden projection (next step),
        #   lanes [H3_PAD:H3_PAD+3H)   -> layer-1 input projection (this step).
        comb = jnp.dot(h0, w0c, preferred_element_type=f32)                   # (B, 2*H3_PAD)
        gh0 = comb[:, 0:H3]
        gx1 = comb[:, H3_PAD:H3_PAD + H3] + bi1
        gh1 = jnp.dot(h1, wh1, preferred_element_type=f32)
        h1 = cell(gx1, gh1, h1, bhn1)

    # linear_out on the last top-layer hidden state: latent x0 (B, LATENT).
    # The AUG augmentation of the initial ODE state is exactly zero.
    x0 = jnp.dot(h1, lw_ref[...], preferred_element_type=f32) + lb_ref[...]

    # ODE-func weights loaded only after the GRU so they don't pin vregs earlier.
    f1wt = f1wt_ref[...]
    f1b = f1b_ref[...]
    f15w = f15w_ref[...]
    f15b = f15b_ref[...]
    wf = wf_ref[...]          # f2w @ f1wx   (fc2 folded into next step's fc1)
    cf = cf_ref[...]          # f2b @ f1wx
    f2wo = f2wo_ref[...]      # f2w[:, LATENT:]  (only output columns needed)
    f2bo = f2bo_ref[...]      # f2b[:, LATENT:]

    # Time terms precomputed off the serial path (independent of the ODE state).
    c1 = [t_ref[i] * f1wt + f1b for i in range(NT - 1)]       # (1, H) each
    dts = [t_ref[i + 1] - t_ref[i] for i in range(NT - 1)]    # scalars

    # ---- fixed-step Euler (odeint method='euler', grid == t), unrolled -------
    # Carried state: u = y @ f1wx (fc1 pre-activation).  Per step the critical
    # path is 2 dependent matmuls + 2 tanh; the observed y_aug update hangs off
    # h2 and trails the u chain.
    u = jnp.dot(x0, f1wxl_ref[...], preferred_element_type=f32)               # (B, H)
    y_aug = jnp.zeros((B, AUG), f32)
    out_ref[:, 0:AUG] = y_aug
    for i in range(NT - 1):
        a = jnp.tanh(u + c1[i])
        h2 = jnp.tanh(jnp.dot(a, f15w, preferred_element_type=f32) + f15b)
        u = u + dts[i] * (jnp.dot(h2, wf, preferred_element_type=f32) + cf)
        y_aug = y_aug + dts[i] * (jnp.dot(h2, f2wo, preferred_element_type=f32) + f2bo)
        out_ref[:, (i + 1) * AUG:(i + 2) * AUG] = y_aug
    # TODO(synk): only the fixed-step 'euler' method is implemented; adaptive
    # solvers / adjoint options from torchdiffeq have no Pallas equivalent.
    # TODO(synk): on v7x the gx+gh adds could be done in the MXU result buffer
    # via pltpu.matmul_push_rhs/matmul_acc_lhs/matmul_pop; portable jnp.dot is
    # kept here so the same kernel runs on v5e/v6e (FIFO result path).


def _fuse_gru_layer(wi, wh, bi, bh):
    """Fuse per-gate GRU params (gate order r, z, n) into single matrices.

    wi: (3, in, H), wh: (3, H, H), bi/bh: (3, 1, H)  ->
      wi_f (in, 3H), wh_f (H, 3H), bi_f (1, 3H) with bi_f = (b_ir+b_hr |
      b_iz+b_hz | b_in), and bhn (1, H) kept separate (it sits inside r*(...)).
    """
    wi_f = jnp.concatenate([wi[0], wi[1], wi[2]], axis=-1)
    wh_f = jnp.concatenate([wh[0], wh[1], wh[2]], axis=-1)
    bi_f = jnp.concatenate([bi[0] + bh[0], bi[1] + bh[1], bi[2]], axis=-1)
    bhn = bh[2]
    return wi_f, wh_f, bi_f, bhn


def init_params(key):
    ks = jax.random.split(key, 20)

    def u(k, shape, scale):
        return jax.random.uniform(k, shape, jnp.float32, -scale, scale)

    s_gru = 1.0 / np.sqrt(HID)
    p = {
        # GRU layer 0 (input LATENT -> HID), gate order (r, z, n), weights (in, out)
        "g0wi": u(ks[0], (3, LATENT, HID), s_gru),
        "g0wh": u(ks[1], (3, HID, HID), s_gru),
        "g0bi": u(ks[2], (3, 1, HID), s_gru),
        "g0bh": u(ks[3], (3, 1, HID), s_gru),
        # GRU layer 1 (HID -> HID)
        "g1wi": u(ks[4], (3, HID, HID), s_gru),
        "g1wh": u(ks[5], (3, HID, HID), s_gru),
        "g1bi": u(ks[6], (3, 1, HID), s_gru),
        "g1bh": u(ks[7], (3, 1, HID), s_gru),
        # linear_out (HID -> LATENT), xavier-uniform-like range
        "lw": u(ks[8], (HID, LATENT), np.sqrt(6.0 / (HID + LATENT))),
        "lb": u(ks[9], (1, LATENT), 1.0 / np.sqrt(HID)),
        # OdeFunc fc1: Linear(D + 1, HID) split into time column + state block
        "f1wt": u(ks[10], (1, HID), 1.0 / np.sqrt(D + 1)),
        "f1wx": u(ks[11], (D, HID), 1.0 / np.sqrt(D + 1)),
        "f1b": u(ks[12], (1, HID), 1.0 / np.sqrt(D + 1)),
        # fc1_5: Linear(HID, HID)
        "f15w": u(ks[13], (HID, HID), 1.0 / np.sqrt(HID)),
        "f15b": u(ks[14], (1, HID), 1.0 / np.sqrt(HID)),
        # fc2: Linear(HID, D)
        "f2w": u(ks[15], (HID, D), 1.0 / np.sqrt(HID)),
        "f2b": u(ks[16], (1, D), 1.0 / np.sqrt(HID)),
    }
    return p


def prepare_params(params):
    """One-time parameter preprocessing (kept OUT of the per-forward path)."""
    wi0, wh0, bi0, bhn0 = _fuse_gru_layer(params["g0wi"], params["g0wh"],
                                          params["g0bi"], params["g0bh"])
    wi1, wh1, bi1, bhn1 = _fuse_gru_layer(params["g1wi"], params["g1wh"],
                                          params["g1bi"], params["g1bh"])
    # Fuse both consumers of a fresh h0 into one matrix; 128-lane-aligned halves
    # so neither result slice crosses a lane-tile boundary in the kernel.
    w0c = jnp.zeros((HID, 2 * H3_PAD), jnp.float32)
    w0c = w0c.at[:, 0:H3].set(wh0)
    w0c = w0c.at[:, H3_PAD:H3_PAD + H3].set(wi1)

    # fc2 folded into the next Euler step's fc1 (u-recurrence).
    f1wx = params["f1wx"]
    wf = jnp.dot(params["f2w"], f1wx)        # (HID, HID)
    cf = jnp.dot(params["f2b"], f1wx)        # (1, HID)

    return {
        "wi0": wi0, "bi0": bi0, "bhn0": bhn0, "w0c": w0c,
        "wh1": wh1, "bi1": bi1, "bhn1": bhn1,
        "lw": params["lw"], "lb": params["lb"],
        "f1wt": params["f1wt"], "f1b": params["f1b"],
        "f1wxl": f1wx[:LATENT, :],                 # u0 = x0 @ f1wx[:LATENT] (aug cols are 0)
        "f15w": params["f15w"], "f15b": params["f15b"],
        "wf": wf, "cf": cf,
        "f2wo": params["f2w"][:, LATENT:],         # only the observed AUG output columns
        "f2bo": params["f2b"][:, LATENT:],
    }


def latent_node_forward(trajectories, ti, prep):
    """trajectories: (B, T, LATENT) batch-first; ti: any shape, flattened to (NT,);
    prep: output of prepare_params (fused weights, computed once)."""
    t = jnp.reshape(ti, (-1,)).astype(jnp.float32)                          # (NT,)
    traj2d = (jnp.transpose(trajectories, (1, 0, 2))
              .reshape(T * B, LATENT).astype(jnp.float32))                  # row s*B+b

    vmem = pl.BlockSpec(memory_space=pltpu.MemorySpace.VMEM)
    smem = pl.BlockSpec(memory_space=pltpu.MemorySpace.SMEM)

    # Tiny latency-bound serial workload: whole-array VMEM specs, no grid.
    # TODO(synk): for large B on v7x (2 TensorCores), add a parallel batch grid
    # (grid=(B // BLOCK_B,), batch-blocked traj/out BlockSpecs,
    # dimension_semantics=("parallel",)); at B=2 a grid would have a single
    # program and cannot shard, so the kernel is kept grid-less.
    out2d = pl.pallas_call(
        latent_node_kernel,
        out_shape=jax.ShapeDtypeStruct((B, NT * AUG), jnp.float32),
        in_specs=[smem] + [vmem] * 19,
        out_specs=vmem,
    )(t, traj2d,
      prep["wi0"], prep["bi0"], prep["bhn0"], prep["w0c"],
      prep["wh1"], prep["bi1"], prep["bhn1"],
      prep["lw"], prep["lb"],
      prep["f1wt"], prep["f1b"], prep["f1wxl"],
      prep["f15w"], prep["f15b"],
      prep["wf"], prep["cf"],
      prep["f2wo"], prep["f2bo"])

    # (B, NT*AUG) row-major == (B, NT, AUG) row-major: a free reshape, no
    # transpose / slice launches after the kernel.
    return out2d.reshape(B, NT, AUG)


def reference_forward(trajectories, ti, params):
    """Pure-JAX mirror of the PyTorch forward (unfused), for correctness checking."""
    t = jnp.reshape(ti, (-1,))
    sig = lambda x: 1.0 / (1.0 + jnp.exp(-x))

    def cell(x, h, wi, wh, bi, bh):
        r = sig(x @ wi[0] + bi[0] + h @ wh[0] + bh[0])
        z = sig(x @ wi[1] + bi[1] + h @ wh[1] + bh[1])
        n = jnp.tanh(x @ wi[2] + bi[2] + r * (h @ wh[2] + bh[2]))
        return (1.0 - z) * n + z * h

    h0 = jnp.zeros((B, HID), jnp.float32)
    h1 = jnp.zeros((B, HID), jnp.float32)
    for s in range(T):
        x = trajectories[:, s, :]
        h0 = cell(x, h0, params["g0wi"], params["g0wh"], params["g0bi"], params["g0bh"])
        h1 = cell(h0, h1, params["g1wi"], params["g1wh"], params["g1bi"], params["g1bh"])
    x0 = h1 @ params["lw"] + params["lb"]
    y = jnp.concatenate([x0, jnp.zeros((B, AUG), jnp.float32)], axis=-1)

    feats = [y]
    for i in range(NT - 1):
        t_i = t[i]
        dt = t[i + 1] - t[i]
        h = jnp.tanh(y @ params["f1wx"] + t_i * params["f1wt"] + params["f1b"])
        h = jnp.tanh(h @ params["f15w"] + params["f15b"])
        f = h @ params["f2w"] + params["f2b"]
        y = y + dt * f
        feats.append(y)
    feats = jnp.transpose(jnp.stack(feats, axis=0), (1, 0, 2))
    return feats[:, :, D - AUG:]


if __name__ == "__main__":
    key = jax.random.PRNGKey(0)
    kp, kx = jax.random.split(key)
    params = init_params(kp)
    prep = prepare_params(params)          # one-time weight fusion / folding

    trajectories = jax.random.normal(kx, (B, T, LATENT), jnp.float32)
    ti = jnp.linspace(0.0, 1.0, NT, dtype=jnp.float32)

    fwd = jax.jit(latent_node_forward)
    out = fwd(trajectories, ti, prep)
    out = jax.block_until_ready(out)

    ref = reference_forward(trajectories, ti, params)
    np.testing.assert_allclose(np.asarray(out), np.asarray(ref), rtol=1e-3, atol=1e-3)
    assert out.shape == (B, NT, AUG)
    print("KERNEL_OK")
</pallas_src>

<mosaic_0001>
module attributes {stable_mosaic.version = 11 : i64} {
  func.func @latent_node_kernel(%arg0: memref<8xf32, #tpu.memory_space<smem>>, %arg1: memref<16x4xf32, #tpu.memory_space<vmem>>, %arg2: memref<4x96xf32, #tpu.memory_space<vmem>>, %arg3: memref<1x96xf32, #tpu.memory_space<vmem>>, %arg4: memref<1x32xf32, #tpu.memory_space<vmem>>, %arg5: memref<32x256xf32, #tpu.memory_space<vmem>>, %arg6: memref<32x96xf32, #tpu.memory_space<vmem>>, %arg7: memref<1x96xf32, #tpu.memory_space<vmem>>, %arg8: memref<1x32xf32, #tpu.memory_space<vmem>>, %arg9: memref<32x4xf32, #tpu.memory_space<vmem>>, %arg10: memref<1x4xf32, #tpu.memory_space<vmem>>, %arg11: memref<1x32xf32, #tpu.memory_space<vmem>>, %arg12: memref<1x32xf32, #tpu.memory_space<vmem>>, %arg13: memref<4x32xf32, #tpu.memory_space<vmem>>, %arg14: memref<32x32xf32, #tpu.memory_space<vmem>>, %arg15: memref<1x32xf32, #tpu.memory_space<vmem>>, %arg16: memref<32x32xf32, #tpu.memory_space<vmem>>, %arg17: memref<1x32xf32, #tpu.memory_space<vmem>>, %arg18: memref<32x2xf32, #tpu.memory_space<vmem>>, %arg19: memref<1x2xf32, #tpu.memory_space<vmem>>, %arg20: memref<2x16xf32, #tpu.memory_space<vmem>>) attributes {dimension_semantics = [], scalar_prefetch = 0 : i64, scratch_operands = 0 : i64, tpu.core_type = #tpu.core_type<tc>} {
    %c0 = arith.constant 0 : index
    %c0_0 = arith.constant 0 : index
    %0 = vector.load %arg2[%c0, %c0_0] : memref<4x96xf32, #tpu.memory_space<vmem>>, vector<4x96xf32>
    %c0_1 = arith.constant 0 : index
    %c0_2 = arith.constant 0 : index
    %1 = vector.load %arg3[%c0_1, %c0_2] : memref<1x96xf32, #tpu.memory_space<vmem>>, vector<1x96xf32>
    %c0_3 = arith.constant 0 : index
    %c0_4 = arith.constant 0 : index
    %2 = vector.load %arg4[%c0_3, %c0_4] : memref<1x32xf32, #tpu.memory_space<vmem>>, vector<1x32xf32>
    %c0_5 = arith.constant 0 : index
    %c0_6 = arith.constant 0 : index
    %3 = vector.load %arg5[%c0_5, %c0_6] : memref<32x256xf32, #tpu.memory_space<vmem>>, vector<32x256xf32>
    %c0_7 = arith.constant 0 : index
    %c0_8 = arith.constant 0 : index
    %4 = vector.load %arg6[%c0_7, %c0_8] : memref<32x96xf32, #tpu.memory_space<vmem>>, vector<32x96xf32>
    %c0_9 = arith.constant 0 : index
    %c0_10 = arith.constant 0 : index
    %5 = vector.load %arg7[%c0_9, %c0_10] : memref<1x96xf32, #tpu.memory_space<vmem>>, vector<1x96xf32>
    %c0_11 = arith.constant 0 : index
    %c0_12 = arith.constant 0 : index
    %6 = vector.load %arg8[%c0_11, %c0_12] : memref<1x32xf32, #tpu.memory_space<vmem>>, vector<1x32xf32>
    %c0_13 = arith.constant 0 : index
    %c0_14 = arith.constant 0 : index
    %7 = vector.load %arg1[%c0_13, %c0_14] : memref<16x4xf32, #tpu.memory_space<vmem>>, vector<16x4xf32>
    %cst = arith.constant dense<0.000000e+00> : vector<16x96xf32>
    %8 = tpu.matmul %7, %0, %cst {dimension_numbers = #tpu.dot_dimension_numbers<[1], [0], [0], [1], [0, 0, 1, 1], [], []>} : vector<16x4xf32>, vector<4x96xf32>, vector<16x96xf32> -> vector<16x96xf32>
    %9 = vector.broadcast %1 : vector<1x96xf32> to vector<16x96xf32>
    %10 = arith.addf %8, %9 : vector<16x96xf32>
    %cst_15 = arith.constant 0.000000e+00 : f32
    %11 = vector.broadcast %cst_15 : f32 to vector<2x32xf32>
    %cst_16 = arith.constant 0.000000e+00 : f32
    %12 = vector.broadcast %cst_16 : f32 to vector<2x32xf32>
    %cst_17 = arith.constant 0.000000e+00 : f32
    %13 = vector.broadcast %cst_17 : f32 to vector<2x96xf32>
    %14 = vector.extract_strided_slice %10 {offsets = [0, 0], sizes = [2, 96], strides = [1, 1]} : vector<16x96xf32> to vector<2x96xf32>
    %15 = arith.addf %14, %13 : vector<2x96xf32>
    %16 = vector.extract_strided_slice %15 {offsets = [0, 0], sizes = [2, 64], strides = [1, 1]} : vector<2x96xf32> to vector<2x64xf32>
    %cst_18 = arith.constant 5.000000e-01 : f32
    %17 = vector.broadcast %cst_18 : f32 to vector<2x64xf32>
    %18 = arith.mulf %17, %16 : vector<2x64xf32>
    %19 = math.tanh %18 : vector<2x64xf32>
    %cst_19 = arith.constant 5.000000e-01 : f32
    %20 = vector.broadcast %cst_19 : f32 to vector<2x64xf32>
    %21 = arith.mulf %20, %19 : vector<2x64xf32>
    %cst_20 = arith.constant 5.000000e-01 : f32
    %22 = vector.broadcast %cst_20 : f32 to vector<2x64xf32>
    %23 = arith.addf %21, %22 : vector<2x64xf32>
    %24 = vector.extract_strided_slice %23 {offsets = [0, 0], sizes = [2, 32], strides = [1, 1]} : vector<2x64xf32> to vector<2x32xf32>
    %25 = vector.extract_strided_slice %23 {offsets = [0, 32], sizes = [2, 32], strides = [1, 1]} : vector<2x64xf32> to vector<2x32xf32>
    %26 = vector.extract_strided_slice %14 {offsets = [0, 64], sizes = [2, 32], strides = [1, 1]} : vector<2x96xf32> to vector<2x32xf32>
    %27 = vector.extract_strided_slice %13 {offsets = [0, 64], sizes = [2, 32], strides = [1, 1]} : vector<2x96xf32> to vector<2x32xf32>
    %28 = vector.broadcast %2 : vector<1x32xf32> to vector<2x32xf32>
    %29 = arith.addf %27, %28 : vector<2x32xf32>
    %30 = arith.mulf %24, %29 : vector<2x32xf32>
    %31 = arith.addf %26, %30 : vector<2x32xf32>
    %32 = math.tanh %31 : vector<2x32xf32>
    %33 = arith.subf %11, %32 : vector<2x32xf32>
    %34 = arith.mulf %25, %33 : vector<2x32xf32>
    %35 = arith.addf %32, %34 : vector<2x32xf32>
    %cst_21 = arith.constant dense<0.000000e+00> : vector<2x256xf32>
    %36 = tpu.matmul %35, %3, %cst_21 {dimension_numbers = #tpu.dot_dimension_numbers<[1], [0], [0], [1], [0, 0, 1, 1], [], []>} : vector<2x32xf32>, vector<32x256xf32>, vector<2x256xf32> -> vector<2x256xf32>
    %37 = vector.extract_strided_slice %36 {offsets = [0, 0], sizes = [2, 96], strides = [1, 1]} : vector<2x256xf32> to vector<2x96xf32>
    %38 = vector.extract_strided_slice %36 {offsets = [0, 128], sizes = [2, 96], strides = [1, 1]} : vector<2x256xf32> to vector<2x96xf32>
    %39 = vector.broadcast %5 : vector<1x96xf32> to vector<2x96xf32>
    %40 = arith.addf %38, %39 : vector<2x96xf32>
    %cst_22 = arith.constant dense<0.000000e+00> : vector<2x96xf32>
    %41 = tpu.matmul %12, %4, %cst_22 {dimension_numbers = #tpu.dot_dimension_numbers<[1], [0], [0], [1], [0, 0, 1, 1], [], []>} : vector<2x32xf32>, vector<32x96xf32>, vector<2x96xf32> -> vector<2x96xf32>
    %42 = arith.addf %40, %41 : vector<2x96xf32>
    %43 = vector.extract_strided_slice %42 {offsets = [0, 0], sizes = [2, 64], strides = [1, 1]} : vector<2x96xf32> to vector<2x64xf32>
    %cst_23 = arith.constant 5.000000e-01 : f32
    %44 = vector.broadcast %cst_23 : f32 to vector<2x64xf32>
    %45 = arith.mulf %44, %43 : vector<2x64xf32>
    %46 = math.tanh %45 : vector<2x64xf32>
    %cst_24 = arith.constant 5.000000e-01 : f32
    %47 = vector.broadcast %cst_24 : f32 to vector<2x64xf32>
    %48 = arith.mulf %47, %46 : vector<2x64xf32>
    %cst_25 = arith.constant 5.000000e-01 : f32
    %49 = vector.broadcast %cst_25 : f32 to vector<2x64xf32>
    %50 = arith.addf %48, %49 : vector<2x64xf32>
    %51 = vector.extract_strided_slice %50 {offsets = [0, 0], sizes = [2, 32], strides = [1, 1]} : vector<2x64xf32> to vector<2x32xf32>
    %52 = vector.extract_strided_slice %50 {offsets = [0, 32], sizes = [2, 32], strides = [1, 1]} : vector<2x64xf32> to vector<2x32xf32>
    %53 = vector.extract_strided_slice %40 {offsets = [0, 64], sizes = [2, 32], strides = [1, 1]} : vector<2x96xf32> to vector<2x32xf32>
    %54 = vector.extract_strided_slice %41 {offsets = [0, 64], sizes = [2, 32], strides = [1, 1]} : vector<2x96xf32> to vector<2x32xf32>
    %55 = vector.broadcast %6 : vector<1x32xf32> to vector<2x32xf32>
    %56 = arith.addf %54, %55 : vector<2x32xf32>
    %57 = arith.mulf %51, %56 : vector<2x32xf32>
    %58 = arith.addf %53, %57 : vector<2x32xf32>
    %59 = math.tanh %58 : vector<2x32xf32>
    %60 = arith.subf %12, %59 : vector<2x32xf32>
    %61 = arith.mulf %52, %60 : vector<2x32xf32>
    %62 = arith.addf %59, %61 : vector<2x32xf32>
    %63 = vector.extract_strided_slice %10 {offsets = [2, 0], sizes = [2, 96], strides = [1, 1]} : vector<16x96xf32> to vector<2x96xf32>
    %64 = arith.addf %63, %37 : vector<2x96xf32>
    %65 = vector.extract_strided_slice %64 {offsets = [0, 0], sizes = [2, 64], strides = [1, 1]} : vector<2x96xf32> to vector<2x64xf32>
    %cst_26 = arith.constant 5.000000e-01 : f32
    %66 = vector.broadcast %cst_26 : f32 to vector<2x64xf32>
    %67 = arith.mulf %66, %65 : vector<2x64xf32>
    %68 = math.tanh %67 : vector<2x64xf32>
    %cst_27 = arith.constant 5.000000e-01 : f32
    %69 = vector.broadcast %cst_27 : f32 to vector<2x64xf32>
    %70 = arith.mulf %69, %68 : vector<2x64xf32>
    %cst_28 = arith.constant 5.000000e-01 : f32
    %71 = vector.broadcast %cst_28 : f32 to vector<2x64xf32>
    %72 = arith.addf %70, %71 : vector<2x64xf32>
    %73 = vector.extract_strided_slice %72 {offsets = [0, 0], sizes = [2, 32], strides = [1, 1]} : vector<2x64xf32> to vector<2x32xf32>
    %74 = vector.extract_strided_slice %72 {offsets = [0, 32], sizes = [2, 32], strides = [1, 1]} : vector<2x64xf32> to vector<2x32xf32>
    %75 = vector.extract_strided_slice %63 {offsets = [0, 64], sizes = [2, 32], strides = [1, 1]} : vector<2x96xf32> to vector<2x32xf32>
    %76 = vector.extract_strided_slice %37 {offsets = [0, 64], sizes = [2, 32], strides = [1, 1]} : vector<2x96xf32> to vector<2x32xf32>
    %77 = vector.broadcast %2 : vector<1x32xf32> to vector<2x32xf32>
    %78 = arith.addf %76, %77 : vector<2x32xf32>
    %79 = arith.mulf %73, %78 : vector<2x32xf32>
    %80 = arith.addf %75, %79 : vector<2x32xf32>
    %81 = math.tanh %80 : vector<2x32xf32>
    %82 = arith.subf %35, %81 : vector<2x32xf32>
    %83 = arith.mulf %74, %82 : vector<2x32xf32>
    %84 = arith.addf %81, %83 : vector<2x32xf32>
    %cst_29 = arith.constant dense<0.000000e+00> : vector<2x256xf32>
    %85 = tpu.matmul %84, %3, %cst_29 {dimension_numbers = #tpu.dot_dimension_numbers<[1], [0], [0], [1], [0, 0, 1, 1], [], []>} : vector<2x32xf32>, vector<32x256xf32>, vector<2x256xf32> -> vector<2x256xf32>
    %86 = vector.extract_strided_slice %85 {offsets = [0, 0], sizes = [2, 96], strides = [1, 1]} : vector<2x256xf32> to vector<2x96xf32>
    %87 = vector.extract_strided_slice %85 {offsets = [0, 128], sizes = [2, 96], strides = [1, 1]} : vector<2x256xf32> to vector<2x96xf32>
    %88 = vector.broadcast %5 : vector<1x96xf32> to vector<2x96xf32>
    %89 = arith.addf %87, %88 : vector<2x96xf32>
    %cst_30 = arith.constant dense<0.000000e+00> : vector<2x96xf32>
    %90 = tpu.matmul %62, %4, %cst_30 {dimension_numbers = #tpu.dot_dimension_numbers<[1], [0], [0], [1], [0, 0, 1, 1], [], []>} : vector<2x32xf32>, vector<32x96xf32>, vector<2x96xf32> -> vector<2x96xf32>
    %91 = arith.addf %89, %90 : vector<2x96xf32>
    %92 = vector.extract_strided_slice %91 {offsets = [0, 0], sizes = [2, 64], strides = [1, 1]} : vector<2x96xf32> to vector<2x64xf32>
    %cst_31 = arith.constant 5.000000e-01 : f32
    %93 = vector.broadcast %cst_31 : f32 to vector<2x64xf32>
    %94 = arith.mulf %93, %92 : vector<2x64xf32>
    %95 = math.tanh %94 : vector<2x64xf32>
    %cst_32 = arith.constant 5.000000e-01 : f32
    %96 = vector.broadcast %cst_32 : f32 to vector<2x64xf32>
    %97 = arith.mulf %96, %95 : vector<2x64xf32>
    %cst_33 = arith.constant 5.000000e-01 : f32
    %98 = vector.broadcast %cst_33 : f32 to vector<2x64xf32>
    %99 = arith.addf %97, %98 : vector<2x64xf32>
    %100 = vector.extract_strided_slice %99 {offsets = [0, 0], sizes = [2, 32], strides = [1, 1]} : vector<2x64xf32> to vector<2x32xf32>
    %101 = vector.extract_strided_slice %99 {offsets = [0, 32], sizes = [2, 32], strides = [1, 1]} : vector<2x64xf32> to vector<2x32xf32>
    %102 = vector.extract_strided_slice %89 {offsets = [0, 64], sizes = [2, 32], strides = [1, 1]} : vector<2x96xf32> to vector<2x32xf32>
    %103 = vector.extract_strided_slice %90 {offsets = [0, 64], sizes = [2, 32], strides = [1, 1]} : vector<2x96xf32> to vector<2x32xf32>
    %104 = vector.broadcast %6 : vector<1x32xf32> to vector<2x32xf32>
    %105 = arith.addf %103, %104 : vector<2x32xf32>
    %106 = arith.mulf %100, %105 : vector<2x32xf32>
    %107 = arith.addf %102, %106 : vector<2x32xf32>
    %108 = math.tanh %107 : vector<2x32xf32>
    %109 = arith.subf %62, %108 : vector<2x32xf32>
    %110 = arith.mulf %101, %109 : vector<2x32xf32>
    %111 = arith.addf %108, %110 : vector<2x32xf32>
    %112 = vector.extract_strided_slice %10 {offsets = [4, 0], sizes = [2, 96], strides = [1, 1]} : vector<16x96xf32> to vector<2x96xf32>
    %113 = arith.addf %112, %86 : vector<2x96xf32>
    %114 = vector.extract_strided_slice %113 {offsets = [0, 0], sizes = [2, 64], strides = [1, 1]} : vector<2x96xf32> to vector<2x64xf32>
    %cst_34 = arith.constant 5.000000e-01 : f32
    %115 = vector.broadcast %cst_34 : f32 to vector<2x64xf32>
    %116 = arith.mulf %115, %114 : vector<2x64xf32>
    %117 = math.tanh %116 : vector<2x64xf32>
    %cst_35 = arith.constant 5.000000e-01 : f32
    %118 = vector.broadcast %cst_35 : f32 to vector<2x64xf32>
    %119 = arith.mulf %118, %117 : vector<2x64xf32>
    %cst_36 = arith.constant 5.000000e-01 : f32
    %120 = vector.broadcast %cst_36 : f32 to vector<2x64xf32>
    %121 = arith.addf %119, %120 : vector<2x64xf32>
    %122 = vector.extract_strided_slice %121 {offsets = [0, 0], sizes = [2, 32], strides = [1, 1]} : vector<2x64xf32> to vector<2x32xf32>
    %123 = vector.extract_strided_slice %121 {offsets = [0, 32], sizes = [2, 32], strides = [1, 1]} : vector<2x64xf32> to vector<2x32xf32>
    %124 = vector.extract_strided_slice %112 {offsets = [0, 64], sizes = [2, 32], strides = [1, 1]} : vector<2x96xf32> to vector<2x32xf32>
    %125 = vector.extract_strided_slice %86 {offsets = [0, 64], sizes = [2, 32], strides = [1, 1]} : vector<2x96xf32> to vector<2x32xf32>
    %126 = vector.broadcast %2 : vector<1x32xf32> to vector<2x32xf32>
    %127 = arith.addf %125, %126 : vector<2x32xf32>
    %128 = arith.mulf %122, %127 : vector<2x32xf32>
    %129 = arith.addf %124, %128 : vector<2x32xf32>
    %130 = math.tanh %129 : vector<2x32xf32>
    %131 = arith.subf %84, %130 : vector<2x32xf32>
    %132 = arith.mulf %123, %131 : vector<2x32xf32>
    %133 = arith.addf %130, %132 : vector<2x32xf32>
    %cst_37 = arith.constant dense<0.000000e+00> : vector<2x256xf32>
    %134 = tpu.matmul %133, %3, %cst_37 {dimension_numbers = #tpu.dot_dimension_numbers<[1], [0], [0], [1], [0, 0, 1, 1], [], []>} : vector<2x32xf32>, vector<32x256xf32>, vector<2x256xf32> -> vector<2x256xf32>
    %135 = vector.extract_strided_slice %134 {offsets = [0, 0], sizes = [2, 96], strides = [1, 1]} : vector<2x256xf32> to vector<2x96xf32>
    %136 = vector.extract_strided_slice %134 {offsets = [0, 128], sizes = [2, 96], strides = [1, 1]} : vector<2x256xf32> to vector<2x96xf32>
    %137 = vector.broadcast %5 : vector<1x96xf32> to vector<2x96xf32>
    %138 = arith.addf %136, %137 : vector<2x96xf32>
    %cst_38 = arith.constant dense<0.000000e+00> : vector<2x96xf32>
    %139 = tpu.matmul %111, %4, %cst_38 {dimension_numbers = #tpu.dot_dimension_numbers<[1], [0], [0], [1], [0, 0, 1, 1], [], []>} : vector<2x32xf32>, vector<32x96xf32>, vector<2x96xf32> -> vector<2x96xf32>
    %140 = arith.addf %138, %139 : vector<2x96xf32>
    %141 = vector.extract_strided_slice %140 {offsets = [0, 0], sizes = [2, 64], strides = [1, 1]} : vector<2x96xf32> to vector<2x64xf32>
    %cst_39 = arith.constant 5.000000e-01 : f32
    %142 = vector.broadcast %cst_39 : f32 to vector<2x64xf32>
    %143 = arith.mulf %142, %141 : vector<2x64xf32>
    %144 = math.tanh %143 : vector<2x64xf32>
    %cst_40 = arith.constant 5.000000e-01 : f32
    %145 = vector.broadcast %cst_40 : f32 to vector<2x64xf32>
    %146 = arith.mulf %145, %144 : vector<2x64xf32>
    %cst_41 = arith.constant 5.000000e-01 : f32
    %147 = vector.broadcast %cst_41 : f32 to vector<2x64xf32>
    %148 = arith.addf %146, %147 : vector<2x64xf32>
    %149 = vector.extract_strided_slice %148 {offsets = [0, 0], sizes = [2, 32], strides = [1, 1]} : vector<2x64xf32> to vector<2x32xf32>
    %150 = vector.extract_strided_slice %148 {offsets = [0, 32], sizes = [2, 32], strides = [1, 1]} : vector<2x64xf32> to vector<2x32xf32>
    %151 = vector.extract_strided_slice %138 {offsets = [0, 64], sizes = [2, 32], strides = [1, 1]} : vector<2x96xf32> to vector<2x32xf32>
    %152 = vector.extract_strided_slice %139 {offsets = [0, 64], sizes = [2, 32], strides = [1, 1]} : vector<2x96xf32> to vector<2x32xf32>
    %153 = vector.broadcast %6 : vector<1x32xf32> to vector<2x32xf32>
    %154 = arith.addf %152, %153 : vector<2x32xf32>
    %155 = arith.mulf %149, %154 : vector<2x32xf32>
    %156 = arith.addf %151, %155 : vector<2x32xf32>
    %157 = math.tanh %156 : vector<2x32xf32>
    %158 = arith.subf %111, %157 : vector<2x32xf32>
    %159 = arith.mulf %150, %158 : vector<2x32xf32>
    %160 = arith.addf %157, %159 : vector<2x32xf32>
    %161 = vector.extract_strided_slice %10 {offsets = [6, 0], sizes = [2, 96], strides = [1, 1]} : vector<16x96xf32> to vector<2x96xf32>
    %162 = arith.addf %161, %135 : vector<2x96xf32>
    %163 = vector.extract_strided_slice %162 {offsets = [0, 0], sizes = [2, 64], strides = [1, 1]} : vector<2x96xf32> to vector<2x64xf32>
    %cst_42 = arith.constant 5.000000e-01 : f32
    %164 = vector.broadcast %cst_42 : f32 to vector<2x64xf32>
    %165 = arith.mulf %164, %163 : vector<2x64xf32>
    %166 = math.tanh %165 : vector<2x64xf32>
    %cst_43 = arith.constant 5.000000e-01 : f32
    %167 = vector.broadcast %cst_43 : f32 to vector<2x64xf32>
    %168 = arith.mulf %167, %166 : vector<2x64xf32>
    %cst_44 = arith.constant 5.000000e-01 : f32
    %169 = vector.broadcast %cst_44 : f32 to vector<2x64xf32>
    %170 = arith.addf %168, %169 : vector<2x64xf32>
    %171 = vector.extract_strided_slice %170 {offsets = [0, 0], sizes = [2, 32], strides = [1, 1]} : vector<2x64xf32> to vector<2x32xf32>
    %172 = vector.extract_strided_slice %170 {offsets = [0, 32], sizes = [2, 32], strides = [1, 1]} : vector<2x64xf32> to vector<2x32xf32>
    %173 = vector.extract_strided_slice %161 {offsets = [0, 64], sizes = [2, 32], strides = [1, 1]} : vector<2x96xf32> to vector<2x32xf32>
    %174 = vector.extract_strided_slice %135 {offsets = [0, 64], sizes = [2, 32], strides = [1, 1]} : vector<2x96xf32> to vector<2x32xf32>
    %175 = vector.broadcast %2 : vector<1x32xf32> to vector<2x32xf32>
    %176 = arith.addf %174, %175 : vector<2x32xf32>
    %177 = arith.mulf %171, %176 : vector<2x32xf32>
    %178 = arith.addf %173, %177 : vector<2x32xf32>
    %179 = math.tanh %178 : vector<2x32xf32>
    %180 = arith.subf %133, %179 : vector<2x32xf32>
    %181 = arith.mulf %172, %180 : vector<2x32xf32>
    %182 = arith.addf %179, %181 : vector<2x32xf32>
    %cst_45 = arith.constant dense<0.000000e+00> : vector<2x256xf32>
    %183 = tpu.matmul %182, %3, %cst_45 {dimension_numbers = #tpu.dot_dimension_numbers<[1], [0], [0], [1], [0, 0, 1, 1], [], []>} : vector<2x32xf32>, vector<32x256xf32>, vector<2x256xf32> -> vector<2x256xf32>
    %184 = vector.extract_strided_slice %183 {offsets = [0, 0], sizes = [2, 96], strides = [1, 1]} : vector<2x256xf32> to vector<2x96xf32>
    %185 = vector.extract_strided_slice %183 {offsets = [0, 128], sizes = [2, 96], strides = [1, 1]} : vector<2x256xf32> to vector<2x96xf32>
    %186 = vector.broadcast %5 : vector<1x96xf32> to vector<2x96xf32>
    %187 = arith.addf %185, %186 : vector<2x96xf32>
    %cst_46 = arith.constant dense<0.000000e+00> : vector<2x96xf32>
    %188 = tpu.matmul %160, %4, %cst_46 {dimension_numbers = #tpu.dot_dimension_numbers<[1], [0], [0], [1], [0, 0, 1, 1], [], []>} : vector<2x32xf32>, vector<32x96xf32>, vector<2x96xf32> -> vector<2x96xf32>
    %189 = arith.addf %187, %188 : vector<2x96xf32>
    %190 = vector.extract_strided_slice %189 {offsets = [0, 0], sizes = [2, 64], strides = [1, 1]} : vector<2x96xf32> to vector<2x64xf32>
    %cst_47 = arith.constant 5.000000e-01 : f32
    %191 = vector.broadcast %cst_47 : f32 to vector<2x64xf32>
    %192 = arith.mulf %191, %190 : vector<2x64xf32>
    %193 = math.tanh %192 : vector<2x64xf32>
    %cst_48 = arith.constant 5.000000e-01 : f32
    %194 = vector.broadcast %cst_48 : f32 to vector<2x64xf32>
    %195 = arith.mulf %194, %193 : vector<2x64xf32>
    %cst_49 = arith.constant 5.000000e-01 : f32
    %196 = vector.broadcast %cst_49 : f32 to vector<2x64xf32>
    %197 = arith.addf %195, %196 : vector<2x64xf32>
    %198 = vector.extract_strided_slice %197 {offsets = [0, 0], sizes = [2, 32], strides = [1, 1]} : vector<2x64xf32> to vector<2x32xf32>
    %199 = vector.extract_strided_slice %197 {offsets = [0, 32], sizes = [2, 32], strides = [1, 1]} : vector<2x64xf32> to vector<2x32xf32>
    %200 = vector.extract_strided_slice %187 {offsets = [0, 64], sizes = [2, 32], strides = [1, 1]} : vector<2x96xf32> to vector<2x32xf32>
    %201 = vector.extract_strided_slice %188 {offsets = [0, 64], sizes = [2, 32], strides = [1, 1]} : vector<2x96xf32> to vector<2x32xf32>
    %202 = vector.broadcast %6 : vector<1x32xf32> to vector<2x32xf32>
    %203 = arith.addf %201, %202 : vector<2x32xf32>
    %204 = arith.mulf %198, %203 : vector<2x32xf32>
    %205 = arith.addf %200, %204 : vector<2x32xf32>
    %206 = math.tanh %205 : vector<2x32xf32>
    %207 = arith.subf %160, %206 : vector<2x32xf32>
    %208 = arith.mulf %199, %207 : vector<2x32xf32>
    %209 = arith.addf %206, %208 : vector<2x32xf32>
    %210 = vector.extract_strided_slice %10 {offsets = [8, 0], sizes = [2, 96], strides = [1, 1]} : vector<16x96xf32> to vector<2x96xf32>
    %211 = arith.addf %210, %184 : vector<2x96xf32>
    %212 = vector.extract_strided_slice %211 {offsets = [0, 0], sizes = [2, 64], strides = [1, 1]} : vector<2x96xf32> to vector<2x64xf32>
    %cst_50 = arith.constant 5.000000e-01 : f32
    %213 = vector.broadcast %cst_50 : f32 to vector<2x64xf32>
    %214 = arith.mulf %213, %212 : vector<2x64xf32>
    %215 = math.tanh %214 : vector<2x64xf32>
    %cst_51 = arith.constant 5.000000e-01 : f32
    %216 = vector.broadcast %cst_51 : f32 to vector<2x64xf32>
    %217 = arith.mulf %216, %215 : vector<2x64xf32>
    %cst_52 = arith.constant 5.000000e-01 : f32
    %218 = vector.broadcast %cst_52 : f32 to vector<2x64xf32>
    %219 = arith.addf %217, %218 : vector<2x64xf32>
    %220 = vector.extract_strided_slice %219 {offsets = [0, 0], sizes = [2, 32], strides = [1, 1]} : vector<2x64xf32> to vector<2x32xf32>
    %221 = vector.extract_strided_slice %219 {offsets = [0, 32], sizes = [2, 32], strides = [1, 1]} : vector<2x64xf32> to vector<2x32xf32>
    %222 = vector.extract_strided_slice %210 {offsets = [0, 64], sizes = [2, 32], strides = [1, 1]} : vector<2x96xf32> to vector<2x32xf32>
    %223 = vector.extract_strided_slice %184 {offsets = [0, 64], sizes = [2, 32], strides = [1, 1]} : vector<2x96xf32> to vector<2x32xf32>
    %224 = vector.broadcast %2 : vector<1x32xf32> to vector<2x32xf32>
    %225 = arith.addf %223, %224 : vector<2x32xf32>
    %226 = arith.mulf %220, %225 : vector<2x32xf32>
    %227 = arith.addf %222, %226 : vector<2x32xf32>
    %228 = math.tanh %227 : vector<2x32xf32>
    %229 = arith.subf %182, %228 : vector<2x32xf32>
    %230 = arith.mulf %221, %229 : vector<2x32xf32>
    %231 = arith.addf %228, %230 : vector<2x32xf32>
    %cst_53 = arith.constant dense<0.000000e+00> : vector<2x256xf32>
    %232 = tpu.matmul %231, %3, %cst_53 {dimension_numbers = #tpu.dot_dimension_numbers<[1], [0], [0], [1], [0, 0, 1, 1], [], []>} : vector<2x32xf32>, vector<32x256xf32>, vector<2x256xf32> -> vector<2x256xf32>
    %233 = vector.extract_strided_slice %232 {offsets = [0, 0], sizes = [2, 96], strides = [1, 1]} : vector<2x256xf32> to vector<2x96xf32>
    %234 = vector.extract_strided_slice %232 {offsets = [0, 128], sizes = [2, 96], strides = [1, 1]} : vector<2x256xf32> to vector<2x96xf32>
    %235 = vector.broadcast %5 : vector<1x96xf32> to vector<2x96xf32>
    %236 = arith.addf %234, %235 : vector<2x96xf32>
    %cst_54 = arith.constant dense<0.000000e+00> : vector<2x96xf32>
    %237 = tpu.matmul %209, %4, %cst_54 {dimension_numbers = #tpu.dot_dimension_numbers<[1], [0], [0], [1], [0, 0, 1, 1], [], []>} : vector<2x32xf32>, vector<32x96xf32>, vector<2x96xf32> -> vector<2x96xf32>
    %238 = arith.addf %236, %237 : vector<2x96xf32>
    %239 = vector.extract_strided_slice %238 {offsets = [0, 0], sizes = [2, 64], strides = [1, 1]} : vector<2x96xf32> to vector<2x64xf32>
    %cst_55 = arith.constant 5.000000e-01 : f32
    %240 = vector.broadcast %cst_55 : f32 to vector<2x64xf32>
    %241 = arith.mulf %240, %239 : vector<2x64xf32>
    %242 = math.tanh %241 : vector<2x64xf32>
    %cst_56 = arith.constant 5.000000e-01 : f32
    %243 = vector.broadcast %cst_56 : f32 to vector<2x64xf32>
    %244 = arith.mulf %243, %242 : vector<2x64xf32>
    %cst_57 = arith.constant 5.000000e-01 : f32
    %245 = vector.broadcast %cst_57 : f32 to vector<2x64xf32>
    %246 = arith.addf %244, %245 : vector<2x64xf32>
    %247 = vector.extract_strided_slice %246 {offsets = [0, 0], sizes = [2, 32], strides = [1, 1]} : vector<2x64xf32> to vector<2x32xf32>
    %248 = vector.extract_strided_slice %246 {offsets = [0, 32], sizes = [2, 32], strides = [1, 1]} : vector<2x64xf32> to vector<2x32xf32>
    %249 = vector.extract_strided_slice %236 {offsets = [0, 64], sizes = [2, 32], strides = [1, 1]} : vector<2x96xf32> to vector<2x32xf32>
    %250 = vector.extract_strided_slice %237 {offsets = [0, 64], sizes = [2, 32], strides = [1, 1]} : vector<2x96xf32> to vector<2x32xf32>
    %251 = vector.broadcast %6 : vector<1x32xf32> to vector<2x32xf32>
    %252 = arith.addf %250, %251 : vector<2x32xf32>
    %253 = arith.mulf %247, %252 : vector<2x32xf32>
    %254 = arith.addf %249, %253 : vector<2x32xf32>
    %255 = math.tanh %254 : vector<2x32xf32>
    %256 = arith.subf %209, %255 : vector<2x32xf32>
    %257 = arith.mulf %248, %256 : vector<2x32xf32>
    %258 = arith.addf %255, %257 : vector<2x32xf32>
    %259 = vector.extract_strided_slice %10 {offsets = [10, 0], sizes = [2, 96], strides = [1, 1]} : vector<16x96xf32> to vector<2x96xf32>
    %260 = arith.addf %259, %233 : vector<2x96xf32>
    %261 = vector.extract_strided_slice %260 {offsets = [0, 0], sizes = [2, 64], strides = [1, 1]} : vector<2x96xf32> to vector<2x64xf32>
    %cst_58 = arith.constant 5.000000e-01 : f32
    %262 = vector.broadcast %cst_58 : f32 to vector<2x64xf32>
    %263 = arith.mulf %262, %261 : vector<2x64xf32>
    %264 = math.tanh %263 : vector<2x64xf32>
    %cst_59 = arith.constant 5.000000e-01 : f32
    %265 = vector.broadcast %cst_59 : f32 to vector<2x64xf32>
    %266 = arith.mulf %265, %264 : vector<2x64xf32>
    %cst_60 = arith.constant 5.000000e-01 : f32
    %267 = vector.broadcast %cst_60 : f32 to vector<2x64xf32>
    %268 = arith.addf %266, %267 : vector<2x64xf32>
    %269 = vector.extract_strided_slice %268 {offsets = [0, 0], sizes = [2, 32], strides = [1, 1]} : vector<2x64xf32> to vector<2x32xf32>
    %270 = vector.extract_strided_slice %268 {offsets = [0, 32], sizes = [2, 32], strides = [1, 1]} : vector<2x64xf32> to vector<2x32xf32>
    %271 = vector.extract_strided_slice %259 {offsets = [0, 64], sizes = [2, 32], strides = [1, 1]} : vector<2x96xf32> to vector<2x32xf32>
    %272 = vector.extract_strided_slice %233 {offsets = [0, 64], sizes = [2, 32], strides = [1, 1]} : vector<2x96xf32> to vector<2x32xf32>
    %273 = vector.broadcast %2 : vector<1x32xf32> to vector<2x32xf32>
    %274 = arith.addf %272, %273 : vector<2x32xf32>
    %275 = arith.mulf %269, %274 : vector<2x32xf32>
    %276 = arith.addf %271, %275 : vector<2x32xf32>
    %277 = math.tanh %276 : vector<2x32xf32>
    %278 = arith.subf %231, %277 : vector<2x32xf32>
    %279 = arith.mulf %270, %278 : vector<2x32xf32>
    %280 = arith.addf %277, %279 : vector<2x32xf32>
    %cst_61 = arith.constant dense<0.000000e+00> : vector<2x256xf32>
    %281 = tpu.matmul %280, %3, %cst_61 {dimension_numbers = #tpu.dot_dimension_numbers<[1], [0], [0], [1], [0, 0, 1, 1], [], []>} : vector<2x32xf32>, vector<32x256xf32>, vector<2x256xf32> -> vector<2x256xf32>
    %282 = vector.extract_strided_slice %281 {offsets = [0, 0], sizes = [2, 96], strides = [1, 1]} : vector<2x256xf32> to vector<2x96xf32>
    %283 = vector.extract_strided_slice %281 {offsets = [0, 128], sizes = [2, 96], strides = [1, 1]} : vector<2x256xf32> to vector<2x96xf32>
    %284 = vector.broadcast %5 : vector<1x96xf32> to vector<2x96xf32>
    %285 = arith.addf %283, %284 : vector<2x96xf32>
    %cst_62 = arith.constant dense<0.000000e+00> : vector<2x96xf32>
    %286 = tpu.matmul %258, %4, %cst_62 {dimension_numbers = #tpu.dot_dimension_numbers<[1], [0], [0], [1], [0, 0, 1, 1], [], []>} : vector<2x32xf32>, vector<32x96xf32>, vector<2x96xf32> -> vector<2x96xf32>
    %287 = arith.addf %285, %286 : vector<2x96xf32>
    %288 = vector.extract_strided_slice %287 {offsets = [0, 0], sizes = [2, 64], strides = [1, 1]} : vector<2x96xf32> to vector<2x64xf32>
    %cst_63 = arith.constant 5.000000e-01 : f32
    %289 = vector.broadcast %cst_63 : f32 to vector<2x64xf32>
    %290 = arith.mulf %289, %288 : vector<2x64xf32>
    %291 = math.tanh %290 : vector<2x64xf32>
    %cst_64 = arith.constant 5.000000e-01 : f32
    %292 = vector.broadcast %cst_64 : f32 to vector<2x64xf32>
    %293 = arith.mulf %292, %291 : vector<2x64xf32>
    %cst_65 = arith.constant 5.000000e-01 : f32
    %294 = vector.broadcast %cst_65 : f32 to vector<2x64xf32>
    %295 = arith.addf %293, %294 : vector<2x64xf32>
    %296 = vector.extract_strided_slice %295 {offsets = [0, 0], sizes = [2, 32], strides = [1, 1]} : vector<2x64xf32> to vector<2x32xf32>
    %297 = vector.extract_strided_slice %295 {offsets = [0, 32], sizes = [2, 32], strides = [1, 1]} : vector<2x64xf32> to vector<2x32xf32>
    %298 = vector.extract_strided_slice %285 {offsets = [0, 64], sizes = [2, 32], strides = [1, 1]} : vector<2x96xf32> to vector<2x32xf32>
    %299 = vector.extract_strided_slice %286 {offsets = [0, 64], sizes = [2, 32], strides = [1, 1]} : vector<2x96xf32> to vector<2x32xf32>
    %300 = vector.broadcast %6 : vector<1x32xf32> to vector<2x32xf32>
    %301 = arith.addf %299, %300 : vector<2x32xf32>
    %302 = arith.mulf %296, %301 : vector<2x32xf32>
    %303 = arith.addf %298, %302 : vector<2x32xf32>
    %304 = math.tanh %303 : vector<2x32xf32>
    %305 = arith.subf %258, %304 : vector<2x32xf32>
    %306 = arith.mulf %297, %305 : vector<2x32xf32>
    %307 = arith.addf %304, %306 : vector<2x32xf32>
    %308 = vector.extract_strided_slice %10 {offsets = [12, 0], sizes = [2, 96], strides = [1, 1]} : vector<16x96xf32> to vector<2x96xf32>
    %309 = arith.addf %308, %282 : vector<2x96xf32>
    %310 = vector.extract_strided_slice %309 {offsets = [0, 0], sizes = [2, 64], strides = [1, 1]} : vector<2x96xf32> to vector<2x64xf32>
    %cst_66 = arith.constant 5.000000e-01 : f32
    %311 = vector.broadcast %cst_66 : f32 to vector<2x64xf32>
    %312 = arith.mulf %311, %310 : vector<2x64xf32>
    %313 = math.tanh %312 : vector<2x64xf32>
    %cst_67 = arith.constant 5.000000e-01 : f32
    %314 = vector.broadcast %cst_67 : f32 to vector<2x64xf32>
    %315 = arith.mulf %314, %313 : vector<2x64xf32>
    %cst_68 = arith.constant 5.000000e-01 : f32
    %316 = vector.broadcast %cst_68 : f32 to vector<2x64xf32>
    %317 = arith.addf %315, %316 : vector<2x64xf32>
    %318 = vector.extract_strided_slice %317 {offsets = [0, 0], sizes = [2, 32], strides = [1, 1]} : vector<2x64xf32> to vector<2x32xf32>
    %319 = vector.extract_strided_slice %317 {offsets = [0, 32], sizes = [2, 32], strides = [1, 1]} : vector<2x64xf32> to vector<2x32xf32>
    %320 = vector.extract_strided_slice %308 {offsets = [0, 64], sizes = [2, 32], strides = [1, 1]} : vector<2x96xf32> to vector<2x32xf32>
    %321 = vector.extract_strided_slice %282 {offsets = [0, 64], sizes = [2, 32], strides = [1, 1]} : vector<2x96xf32> to vector<2x32xf32>
    %322 = vector.broadcast %2 : vector<1x32xf32> to vector<2x32xf32>
    %323 = arith.addf %321, %322 : vector<2x32xf32>
    %324 = arith.mulf %318, %323 : vector<2x32xf32>
    %325 = arith.addf %320, %324 : vector<2x32xf32>
    %326 = math.tanh %325 : vector<2x32xf32>
    %327 = arith.subf %280, %326 : vector<2x32xf32>
    %328 = arith.mulf %319, %327 : vector<2x32xf32>
    %329 = arith.addf %326, %328 : vector<2x32xf32>
    %cst_69 = arith.constant dense<0.000000e+00> : vector<2x256xf32>
    %330 = tpu.matmul %329, %3, %cst_69 {dimension_numbers = #tpu.dot_dimension_numbers<[1], [0], [0], [1], [0, 0, 1, 1], [], []>} : vector<2x32xf32>, vector<32x256xf32>, vector<2x256xf32> -> vector<2x256xf32>
    %331 = vector.extract_strided_slice %330 {offsets = [0, 0], sizes = [2, 96], strides = [1, 1]} : vector<2x256xf32> to vector<2x96xf32>
    %332 = vector.extract_strided_slice %330 {offsets = [0, 128], sizes = [2, 96], strides = [1, 1]} : vector<2x256xf32> to vector<2x96xf32>
    %333 = vector.broadcast %5 : vector<1x96xf32> to vector<2x96xf32>
    %334 = arith.addf %332, %333 : vector<2x96xf32>
    %cst_70 = arith.constant dense<0.000000e+00> : vector<2x96xf32>
    %335 = tpu.matmul %307, %4, %cst_70 {dimension_numbers = #tpu.dot_dimension_numbers<[1], [0], [0], [1], [0, 0, 1, 1], [], []>} : vector<2x32xf32>, vector<32x96xf32>, vector<2x96xf32> -> vector<2x96xf32>
    %336 = arith.addf %334, %335 : vector<2x96xf32>
    %337 = vector.extract_strided_slice %336 {offsets = [0, 0], sizes = [2, 64], strides = [1, 1]} : vector<2x96xf32> to vector<2x64xf32>
    %cst_71 = arith.constant 5.000000e-01 : f32
    %338 = vector.broadcast %cst_71 : f32 to vector<2x64xf32>
    %339 = arith.mulf %338, %337 : vector<2x64xf32>
    %340 = math.tanh %339 : vector<2x64xf32>
    %cst_72 = arith.constant 5.000000e-01 : f32
    %341 = vector.broadcast %cst_72 : f32 to vector<2x64xf32>
    %342 = arith.mulf %341, %340 : vector<2x64xf32>
    %cst_73 = arith.constant 5.000000e-01 : f32
    %343 = vector.broadcast %cst_73 : f32 to vector<2x64xf32>
    %344 = arith.addf %342, %343 : vector<2x64xf32>
    %345 = vector.extract_strided_slice %344 {offsets = [0, 0], sizes = [2, 32], strides = [1, 1]} : vector<2x64xf32> to vector<2x32xf32>
    %346 = vector.extract_strided_slice %344 {offsets = [0, 32], sizes = [2, 32], strides = [1, 1]} : vector<2x64xf32> to vector<2x32xf32>
    %347 = vector.extract_strided_slice %334 {offsets = [0, 64], sizes = [2, 32], strides = [1, 1]} : vector<2x96xf32> to vector<2x32xf32>
    %348 = vector.extract_strided_slice %335 {offsets = [0, 64], sizes = [2, 32], strides = [1, 1]} : vector<2x96xf32> to vector<2x32xf32>
    %349 = vector.broadcast %6 : vector<1x32xf32> to vector<2x32xf32>
    %350 = arith.addf %348, %349 : vector<2x32xf32>
    %351 = arith.mulf %345, %350 : vector<2x32xf32>
    %352 = arith.addf %347, %351 : vector<2x32xf32>
    %353 = math.tanh %352 : vector<2x32xf32>
    %354 = arith.subf %307, %353 : vector<2x32xf32>
    %355 = arith.mulf %346, %354 : vector<2x32xf32>
    %356 = arith.addf %353, %355 : vector<2x32xf32>
    %357 = vector.extract_strided_slice %10 {offsets = [14, 0], sizes = [2, 96], strides = [1, 1]} : vector<16x96xf32> to vector<2x96xf32>
    %358 = arith.addf %357, %331 : vector<2x96xf32>
    %359 = vector.extract_strided_slice %358 {offsets = [0, 0], sizes = [2, 64], strides = [1, 1]} : vector<2x96xf32> to vector<2x64xf32>
    %cst_74 = arith.constant 5.000000e-01 : f32
    %360 = vector.broadcast %cst_74 : f32 to vector<2x64xf32>
    %361 = arith.mulf %360, %359 : vector<2x64xf32>
    %362 = math.tanh %361 : vector<2x64xf32>
    %cst_75 = arith.constant 5.000000e-01 : f32
    %363 = vector.broadcast %cst_75 : f32 to vector<2x64xf32>
    %364 = arith.mulf %363, %362 : vector<2x64xf32>
    %cst_76 = arith.constant 5.000000e-01 : f32
    %365 = vector.broadcast %cst_76 : f32 to vector<2x64xf32>
    %366 = arith.addf %364, %365 : vector<2x64xf32>
    %367 = vector.extract_strided_slice %366 {offsets = [0, 0], sizes = [2, 32], strides = [1, 1]} : vector<2x64xf32> to vector<2x32xf32>
    %368 = vector.extract_strided_slice %366 {offsets = [0, 32], sizes = [2, 32], strides = [1, 1]} : vector<2x64xf32> to vector<2x32xf32>
    %369 = vector.extract_strided_slice %357 {offsets = [0, 64], sizes = [2, 32], strides = [1, 1]} : vector<2x96xf32> to vector<2x32xf32>
    %370 = vector.extract_strided_slice %331 {offsets = [0, 64], sizes = [2, 32], strides = [1, 1]} : vector<2x96xf32> to vector<2x32xf32>
    %371 = vector.broadcast %2 : vector<1x32xf32> to vector<2x32xf32>
    %372 = arith.addf %370, %371 : vector<2x32xf32>
    %373 = arith.mulf %367, %372 : vector<2x32xf32>
    %374 = arith.addf %369, %373 : vector<2x32xf32>
    %375 = math.tanh %374 : vector<2x32xf32>
    %376 = arith.subf %329, %375 : vector<2x32xf32>
    %377 = arith.mulf %368, %376 : vector<2x32xf32>
    %378 = arith.addf %375, %377 : vector<2x32xf32>
    %cst_77 = arith.constant dense<0.000000e+00> : vector<2x256xf32>
    %379 = tpu.matmul %378, %3, %cst_77 {dimension_numbers = #tpu.dot_dimension_numbers<[1], [0], [0], [1], [0, 0, 1, 1], [], []>} : vector<2x32xf32>, vector<32x256xf32>, vector<2x256xf32> -> vector<2x256xf32>
    %380 = vector.extract_strided_slice %379 {offsets = [0, 128], sizes = [2, 96], strides = [1, 1]} : vector<2x256xf32> to vector<2x96xf32>
    %381 = vector.broadcast %5 : vector<1x96xf32> to vector<2x96xf32>
    %382 = arith.addf %380, %381 : vector<2x96xf32>
    %cst_78 = arith.constant dense<0.000000e+00> : vector<2x96xf32>
    %383 = tpu.matmul %356, %4, %cst_78 {dimension_numbers = #tpu.dot_dimension_numbers<[1], [0], [0], [1], [0, 0, 1, 1], [], []>} : vector<2x32xf32>, vector<32x96xf32>, vector<2x96xf32> -> vector<2x96xf32>
    %384 = arith.addf %382, %383 : vector<2x96xf32>
    %385 = vector.extract_strided_slice %384 {offsets = [0, 0], sizes = [2, 64], strides = [1, 1]} : vector<2x96xf32> to vector<2x64xf32>
    %cst_79 = arith.constant 5.000000e-01 : f32
    %386 = vector.broadcast %cst_79 : f32 to vector<2x64xf32>
    %387 = arith.mulf %386, %385 : vector<2x64xf32>
    %388 = math.tanh %387 : vector<2x64xf32>
    %cst_80 = arith.constant 5.000000e-01 : f32
    %389 = vector.broadcast %cst_80 : f32 to vector<2x64xf32>
    %390 = arith.mulf %389, %388 : vector<2x64xf32>
    %cst_81 = arith.constant 5.000000e-01 : f32
    %391 = vector.broadcast %cst_81 : f32 to vector<2x64xf32>
    %392 = arith.addf %390, %391 : vector<2x64xf32>
    %393 = vector.extract_strided_slice %392 {offsets = [0, 0], sizes = [2, 32], strides = [1, 1]} : vector<2x64xf32> to vector<2x32xf32>
    %394 = vector.extract_strided_slice %392 {offsets = [0, 32], sizes = [2, 32], strides = [1, 1]} : vector<2x64xf32> to vector<2x32xf32>
    %395 = vector.extract_strided_slice %382 {offsets = [0, 64], sizes = [2, 32], strides = [1, 1]} : vector<2x96xf32> to vector<2x32xf32>
    %396 = vector.extract_strided_slice %383 {offsets = [0, 64], sizes = [2, 32], strides = [1, 1]} : vector<2x96xf32> to vector<2x32xf32>
    %397 = vector.broadcast %6 : vector<1x32xf32> to vector<2x32xf32>
    %398 = arith.addf %396, %397 : vector<2x32xf32>
    %399 = arith.mulf %393, %398 : vector<2x32xf32>
    %400 = arith.addf %395, %399 : vector<2x32xf32>
    %401 = math.tanh %400 : vector<2x32xf32>
    %402 = arith.subf %356, %401 : vector<2x32xf32>
    %403 = arith.mulf %394, %402 : vector<2x32xf32>
    %404 = arith.addf %401, %403 : vector<2x32xf32>
    %c0_82 = arith.constant 0 : index
    %c0_83 = arith.constant 0 : index
    %405 = vector.load %arg9[%c0_82, %c0_83] : memref<32x4xf32, #tpu.memory_space<vmem>>, vector<32x4xf32>
    %cst_84 = arith.constant dense<0.000000e+00> : vector<2x4xf32>
    %406 = tpu.matmul %404, %405, %cst_84 {dimension_numbers = #tpu.dot_dimension_numbers<[1], [0], [0], [1], [0, 0, 1, 1], [], []>} : vector<2x32xf32>, vector<32x4xf32>, vector<2x4xf32> -> vector<2x4xf32>
    %c0_85 = arith.constant 0 : index
    %c0_86 = arith.constant 0 : index
    %407 = vector.load %arg10[%c0_85, %c0_86] : memref<1x4xf32, #tpu.memory_space<vmem>>, vector<1x4xf32>
    %408 = vector.broadcast %407 : vector<1x4xf32> to vector<2x4xf32>
    %409 = arith.addf %406, %408 : vector<2x4xf32>
    %c0_87 = arith.constant 0 : index
    %c0_88 = arith.constant 0 : index
    %410 = vector.load %arg11[%c0_87, %c0_88] : memref<1x32xf32, #tpu.memory_space<vmem>>, vector<1x32xf32>
    %c0_89 = arith.constant 0 : index
    %c0_90 = arith.constant 0 : index
    %411 = vector.load %arg12[%c0_89, %c0_90] : memref<1x32xf32, #tpu.memory_space<vmem>>, vector<1x32xf32>
    %c0_91 = arith.constant 0 : index
    %c0_92 = arith.constant 0 : index
    %412 = vector.load %arg14[%c0_91, %c0_92] : memref<32x32xf32, #tpu.memory_space<vmem>>, vector<32x32xf32>
    %c0_93 = arith.constant 0 : index
    %c0_94 = arith.constant 0 : index
    %413 = vector.load %arg15[%c0_93, %c0_94] : memref<1x32xf32, #tpu.memory_space<vmem>>, vector<1x32xf32>
    %c0_95 = arith.constant 0 : index
    %c0_96 = arith.constant 0 : index
    %414 = vector.load %arg16[%c0_95, %c0_96] : memref<32x32xf32, #tpu.memory_space<vmem>>, vector<32x32xf32>
    %c0_97 = arith.constant 0 : index
    %c0_98 = arith.constant 0 : index
    %415 = vector.load %arg17[%c0_97, %c0_98] : memref<1x32xf32, #tpu.memory_space<vmem>>, vector<1x32xf32>
    %c0_99 = arith.constant 0 : index
    %c0_100 = arith.constant 0 : index
    %416 = vector.load %arg18[%c0_99, %c0_100] : memref<32x2xf32, #tpu.memory_space<vmem>>, vector<32x2xf32>
    %c0_101 = arith.constant 0 : index
    %c0_102 = arith.constant 0 : index
    %417 = vector.load %arg19[%c0_101, %c0_102] : memref<1x2xf32, #tpu.memory_space<vmem>>, vector<1x2xf32>
    %c0_103 = arith.constant 0 : index
    %418 = memref.load %arg0[%c0_103] : memref<8xf32, #tpu.memory_space<smem>>
    %419 = vector.broadcast %418 : f32 to vector<1x32xf32>
    %420 = arith.mulf %419, %410 : vector<1x32xf32>
    %421 = arith.addf %420, %411 : vector<1x32xf32>
    %c1 = arith.constant 1 : index
    %422 = memref.load %arg0[%c1] : memref<8xf32, #tpu.memory_space<smem>>
    %423 = vector.broadcast %422 : f32 to vector<1x32xf32>
    %424 = arith.mulf %423, %410 : vector<1x32xf32>
    %425 = arith.addf %424, %411 : vector<1x32xf32>
    %c2 = arith.constant 2 : index
    %426 = memref.load %arg0[%c2] : memref<8xf32, #tpu.memory_space<smem>>
    %427 = vector.broadcast %426 : f32 to vector<1x32xf32>
    %428 = arith.mulf %427, %410 : vector<1x32xf32>
    %429 = arith.addf %428, %411 : vector<1x32xf32>
    %c3 = arith.constant 3 : index
    %430 = memref.load %arg0[%c3] : memref<8xf32, #tpu.memory_space<smem>>
    %431 = vector.broadcast %430 : f32 to vector<1x32xf32>
    %432 = arith.mulf %431, %410 : vector<1x32xf32>
    %433 = arith.addf %432, %411 : vector<1x32xf32>
    %c4 = arith.constant 4 : index
    %434 = memref.load %arg0[%c4] : memref<8xf32, #tpu.memory_space<smem>>
    %435 = vector.broadcast %434 : f32 to vector<1x32xf32>
    %436 = arith.mulf %435, %410 : vector<1x32xf32>
    %437 = arith.addf %436, %411 : vector<1x32xf32>
    %c5 = arith.constant 5 : index
    %438 = memref.load %arg0[%c5] : memref<8xf32, #tpu.memory_space<smem>>
    %439 = vector.broadcast %438 : f32 to vector<1x32xf32>
    %440 = arith.mulf %439, %410 : vector<1x32xf32>
    %441 = arith.addf %440, %411 : vector<1x32xf32>
    %c6 = arith.constant 6 : index
    %442 = memref.load %arg0[%c6] : memref<8xf32, #tpu.memory_space<smem>>
    %443 = vector.broadcast %442 : f32 to vector<1x32xf32>
    %444 = arith.mulf %443, %410 : vector<1x32xf32>
    %445 = arith.addf %444, %411 : vector<1x32xf32>
    %c1_104 = arith.constant 1 : index
    %446 = memref.load %arg0[%c1_104] : memref<8xf32, #tpu.memory_space<smem>>
    %c0_105 = arith.constant 0 : index
    %447 = memref.load %arg0[%c0_105] : memref<8xf32, #tpu.memory_space<smem>>
    %448 = arith.subf %446, %447 : f32
    %c2_106 = arith.constant 2 : index
    %449 = memref.load %arg0[%c2_106] : memref<8xf32, #tpu.memory_space<smem>>
    %c1_107 = arith.constant 1 : index
    %450 = memref.load %arg0[%c1_107] : memref<8xf32, #tpu.memory_space<smem>>
    %451 = arith.subf %449, %450 : f32
    %c3_108 = arith.constant 3 : index
    %452 = memref.load %arg0[%c3_108] : memref<8xf32, #tpu.memory_space<smem>>
    %c2_109 = arith.constant 2 : index
    %453 = memref.load %arg0[%c2_109] : memref<8xf32, #tpu.memory_space<smem>>
    %454 = arith.subf %452, %453 : f32
    %c4_110 = arith.constant 4 : index
    %455 = memref.load %arg0[%c4_110] : memref<8xf32, #tpu.memory_space<smem>>
    %c3_111 = arith.constant 3 : index
    %456 = memref.load %arg0[%c3_111] : memref<8xf32, #tpu.memory_space<smem>>
    %457 = arith.subf %455, %456 : f32
    %c5_112 = arith.constant 5 : index
    %458 = memref.load %arg0[%c5_112] : memref<8xf32, #tpu.memory_space<smem>>
    %c4_113 = arith.constant 4 : index
    %459 = memref.load %arg0[%c4_113] : memref<8xf32, #tpu.memory_space<smem>>
    %460 = arith.subf %458, %459 : f32
    %c6_114 = arith.constant 6 : index
    %461 = memref.load %arg0[%c6_114] : memref<8xf32, #tpu.memory_space<smem>>
    %c5_115 = arith.constant 5 : index
    %462 = memref.load %arg0[%c5_115] : memref<8xf32, #tpu.memory_space<smem>>
    %463 = arith.subf %461, %462 : f32
    %c7 = arith.constant 7 : index
    %464 = memref.load %arg0[%c7] : memref<8xf32, #tpu.memory_space<smem>>
    %c6_116 = arith.constant 6 : index
    %465 = memref.load %arg0[%c6_116] : memref<8xf32, #tpu.memory_space<smem>>
    %466 = arith.subf %464, %465 : f32
    %c0_117 = arith.constant 0 : index
    %c0_118 = arith.constant 0 : index
    %467 = vector.load %arg13[%c0_117, %c0_118] : memref<4x32xf32, #tpu.memory_space<vmem>>, vector<4x32xf32>
    %cst_119 = arith.constant dense<0.000000e+00> : vector<2x32xf32>
    %468 = tpu.matmul %409, %467, %cst_119 {dimension_numbers = #tpu.dot_dimension_numbers<[1], [0], [0], [1], [0, 0, 1, 1], [], []>} : vector<2x4xf32>, vector<4x32xf32>, vector<2x32xf32> -> vector<2x32xf32>
    %cst_120 = arith.constant 0.000000e+00 : f32
    %469 = vector.broadcast %cst_120 : f32 to vector<2x2xf32>
    %c0_121 = arith.constant 0 : index
    %c0_122 = arith.constant 0 : index
    %470 = vector.load %arg20[%c0_121, %c0_122] : memref<2x16xf32, #tpu.memory_space<vmem>>, vector<2x2xf32>
    tpu.vector_store %arg20[%c0_121, %c0_122], %469 {strides = array<i32>} : memref<2x16xf32, #tpu.memory_space<vmem>>, vector<2x2xf32>,
    %471 = vector.broadcast %421 : vector<1x32xf32> to vector<2x32xf32>
    %472 = arith.addf %468, %471 : vector<2x32xf32>
    %473 = math.tanh %472 : vector<2x32xf32>
    %cst_123 = arith.constant dense<0.000000e+00> : vector<2x32xf32>
    %474 = tpu.matmul %473, %412, %cst_123 {dimension_numbers = #tpu.dot_dimension_numbers<[1], [0], [0], [1], [0, 0, 1, 1], [], []>} : vector<2x32xf32>, vector<32x32xf32>, vector<2x32xf32> -> vector<2x32xf32>
    %475 = vector.broadcast %413 : vector<1x32xf32> to vector<2x32xf32>
    %476 = arith.addf %474, %475 : vector<2x32xf32>
    %477 = math.tanh %476 : vector<2x32xf32>
    %cst_124 = arith.constant dense<0.000000e+00> : vector<2x32xf32>
    %478 = tpu.matmul %477, %414, %cst_124 {dimension_numbers = #tpu.dot_dimension_numbers<[1], [0], [0], [1], [0, 0, 1, 1], [], []>} : vector<2x32xf32>, vector<32x32xf32>, vector<2x32xf32> -> vector<2x32xf32>
    %479 = vector.broadcast %415 : vector<1x32xf32> to vector<2x32xf32>
    %480 = arith.addf %478, %479 : vector<2x32xf32>
    %481 = vector.broadcast %448 : f32 to vector<2x32xf32>
    %482 = arith.mulf %481, %480 : vector<2x32xf32>
    %483 = arith.addf %468, %482 : vector<2x32xf32>
    %cst_125 = arith.constant dense<0.000000e+00> : vector<2x2xf32>
    %484 = tpu.matmul %477, %416, %cst_125 {dimension_numbers = #tpu.dot_dimension_numbers<[1], [0], [0], [1], [0, 0, 1, 1], [], []>} : vector<2x32xf32>, vector<32x2xf32>, vector<2x2xf32> -> vector<2x2xf32>
    %485 = vector.broadcast %417 : vector<1x2xf32> to vector<2x2xf32>
    %486 = arith.addf %484, %485 : vector<2x2xf32>
    %487 = vector.broadcast %448 : f32 to vector<2x2xf32>
    %488 = arith.mulf %487, %486 : vector<2x2xf32>
    %489 = arith.addf %469, %488 : vector<2x2xf32>
    %c0_126 = arith.constant 0 : index
    %c2_127 = arith.constant 2 : index
    %490 = vector.load %arg20[%c0_126, %c2_127] : memref<2x16xf32, #tpu.memory_space<vmem>>, vector<2x2xf32>
    tpu.vector_store %arg20[%c0_126, %c2_127], %489 {strides = array<i32>} : memref<2x16xf32, #tpu.memory_space<vmem>>, vector<2x2xf32>,
    %491 = vector.broadcast %425 : vector<1x32xf32> to vector<2x32xf32>
    %492 = arith.addf %483, %491 : vector<2x32xf32>
    %493 = math.tanh %492 : vector<2x32xf32>
    %cst_128 = arith.constant dense<0.000000e+00> : vector<2x32xf32>
    %494 = tpu.matmul %493, %412, %cst_128 {dimension_numbers = #tpu.dot_dimension_numbers<[1], [0], [0], [1], [0, 0, 1, 1], [], []>} : vector<2x32xf32>, vector<32x32xf32>, vector<2x32xf32> -> vector<2x32xf32>
    %495 = vector.broadcast %413 : vector<1x32xf32> to vector<2x32xf32>
    %496 = arith.addf %494, %495 : vector<2x32xf32>
    %497 = math.tanh %496 : vector<2x32xf32>
    %cst_129 = arith.constant dense<0.000000e+00> : vector<2x32xf32>
    %498 = tpu.matmul %497, %414, %cst_129 {dimension_numbers = #tpu.dot_dimension_numbers<[1], [0], [0], [1], [0, 0, 1, 1], [], []>} : vector<2x32xf32>, vector<32x32xf32>, vector<2x32xf32> -> vector<2x32xf32>
    %499 = vector.broadcast %415 : vector<1x32xf32> to vector<2x32xf32>
    %500 = arith.addf %498, %499 : vector<2x32xf32>
    %501 = vector.broadcast %451 : f32 to vector<2x32xf32>
    %502 = arith.mulf %501, %500 : vector<2x32xf32>
    %503 = arith.addf %483, %502 : vector<2x32xf32>
    %cst_130 = arith.constant dense<0.000000e+00> : vector<2x2xf32>
    %504 = tpu.matmul %497, %416, %cst_130 {dimension_numbers = #tpu.dot_dimension_numbers<[1], [0], [0], [1], [0, 0, 1, 1], [], []>} : vector<2x32xf32>, vector<32x2xf32>, vector<2x2xf32> -> vector<2x2xf32>
    %505 = vector.broadcast %417 : vector<1x2xf32> to vector<2x2xf32>
    %506 = arith.addf %504, %505 : vector<2x2xf32>
    %507 = vector.broadcast %451 : f32 to vector<2x2xf32>
    %508 = arith.mulf %507, %506 : vector<2x2xf32>
    %509 = arith.addf %489, %508 : vector<2x2xf32>
    %c0_131 = arith.constant 0 : index
    %c4_132 = arith.constant 4 : index
    %510 = vector.load %arg20[%c0_131, %c4_132] : memref<2x16xf32, #tpu.memory_space<vmem>>, vector<2x2xf32>
    tpu.vector_store %arg20[%c0_131, %c4_132], %509 {strides = array<i32>} : memref<2x16xf32, #tpu.memory_space<vmem>>, vector<2x2xf32>,
    %511 = vector.broadcast %429 : vector<1x32xf32> to vector<2x32xf32>
    %512 = arith.addf %503, %511 : vector<2x32xf32>
    %513 = math.tanh %512 : vector<2x32xf32>
    %cst_133 = arith.constant dense<0.000000e+00> : vector<2x32xf32>
    %514 = tpu.matmul %513, %412, %cst_133 {dimension_numbers = #tpu.dot_dimension_numbers<[1], [0], [0], [1], [0, 0, 1, 1], [], []>} : vector<2x32xf32>, vector<32x32xf32>, vector<2x32xf32> -> vector<2x32xf32>
    %515 = vector.broadcast %413 : vector<1x32xf32> to vector<2x32xf32>
    %516 = arith.addf %514, %515 : vector<2x32xf32>
    %517 = math.tanh %516 : vector<2x32xf32>
    %cst_134 = arith.constant dense<0.000000e+00> : vector<2x32xf32>
    %518 = tpu.matmul %517, %414, %cst_134 {dimension_numbers = #tpu.dot_dimension_numbers<[1], [0], [0], [1], [0, 0, 1, 1], [], []>} : vector<2x32xf32>, vector<32x32xf32>, vector<2x32xf32> -> vector<2x32xf32>
    %519 = vector.broadcast %415 : vector<1x32xf32> to vector<2x32xf32>
    %520 = arith.addf %518, %519 : vector<2x32xf32>
    %521 = vector.broadcast %454 : f32 to vector<2x32xf32>
    %522 = arith.mulf %521, %520 : vector<2x32xf32>
    %523 = arith.addf %503, %522 : vector<2x32xf32>
    %cst_135 = arith.constant dense<0.000000e+00> : vector<2x2xf32>
    %524 = tpu.matmul %517, %416, %cst_135 {dimension_numbers = #tpu.dot_dimension_numbers<[1], [0], [0], [1], [0, 0, 1, 1], [], []>} : vector<2x32xf32>, vector<32x2xf32>, vector<2x2xf32> -> vector<2x2xf32>
    %525 = vector.broadcast %417 : vector<1x2xf32> to vector<2x2xf32>
    %526 = arith.addf %524, %525 : vector<2x2xf32>
    %527 = vector.broadcast %454 : f32 to vector<2x2xf32>
    %528 = arith.mulf %527, %526 : vector<2x2xf32>
    %529 = arith.addf %509, %528 : vector<2x2xf32>
    %c0_136 = arith.constant 0 : index
    %c6_137 = arith.constant 6 : index
    %530 = vector.load %arg20[%c0_136, %c6_137] : memref<2x16xf32, #tpu.memory_space<vmem>>, vector<2x2xf32>
    tpu.vector_store %arg20[%c0_136, %c6_137], %529 {strides = array<i32>} : memref<2x16xf32, #tpu.memory_space<vmem>>, vector<2x2xf32>,
    %531 = vector.broadcast %433 : vector<1x32xf32> to vector<2x32xf32>
    %532 = arith.addf %523, %531 : vector<2x32xf32>
    %533 = math.tanh %532 : vector<2x32xf32>
    %cst_138 = arith.constant dense<0.000000e+00> : vector<2x32xf32>
    %534 = tpu.matmul %533, %412, %cst_138 {dimension_numbers = #tpu.dot_dimension_numbers<[1], [0], [0], [1], [0, 0, 1, 1], [], []>} : vector<2x32xf32>, vector<32x32xf32>, vector<2x32xf32> -> vector<2x32xf32>
    %535 = vector.broadcast %413 : vector<1x32xf32> to vector<2x32xf32>
    %536 = arith.addf %534, %535 : vector<2x32xf32>
    %537 = math.tanh %536 : vector<2x32xf32>
    %cst_139 = arith.constant dense<0.000000e+00> : vector<2x32xf32>
    %538 = tpu.matmul %537, %414, %cst_139 {dimension_numbers = #tpu.dot_dimension_numbers<[1], [0], [0], [1], [0, 0, 1, 1], [], []>} : vector<2x32xf32>, vector<32x32xf32>, vector<2x32xf32> -> vector<2x32xf32>
    %539 = vector.broadcast %415 : vector<1x32xf32> to vector<2x32xf32>
    %540 = arith.addf %538, %539 : vector<2x32xf32>
    %541 = vector.broadcast %457 : f32 to vector<2x32xf32>
    %542 = arith.mulf %541, %540 : vector<2x32xf32>
    %543 = arith.addf %523, %542 : vector<2x32xf32>
    %cst_140 = arith.constant dense<0.000000e+00> : vector<2x2xf32>
    %544 = tpu.matmul %537, %416, %cst_140 {dimension_numbers = #tpu.dot_dimension_numbers<[1], [0], [0], [1], [0, 0, 1, 1], [], []>} : vector<2x32xf32>, vector<32x2xf32>, vector<2x2xf32> -> vector<2x2xf32>
    %545 = vector.broadcast %417 : vector<1x2xf32> to vector<2x2xf32>
    %546 = arith.addf %544, %545 : vector<2x2xf32>
    %547 = vector.broadcast %457 : f32 to vector<2x2xf32>
    %548 = arith.mulf %547, %546 : vector<2x2xf32>
    %549 = arith.addf %529, %548 : vector<2x2xf32>
    %c0_141 = arith.constant 0 : index
    %c8 = arith.constant 8 : index
    %550 = vector.load %arg20[%c0_141, %c8] : memref<2x16xf32, #tpu.memory_space<vmem>>, vector<2x2xf32>
    tpu.vector_store %arg20[%c0_141, %c8], %549 {strides = array<i32>} : memref<2x16xf32, #tpu.memory_space<vmem>>, vector<2x2xf32>,
    %551 = vector.broadcast %437 : vector<1x32xf32> to vector<2x32xf32>
    %552 = arith.addf %543, %551 : vector<2x32xf32>
    %553 = math.tanh %552 : vector<2x32xf32>
    %cst_142 = arith.constant dense<0.000000e+00> : vector<2x32xf32>
    %554 = tpu.matmul %553, %412, %cst_142 {dimension_numbers = #tpu.dot_dimension_numbers<[1], [0], [0], [1], [0, 0, 1, 1], [], []>} : vector<2x32xf32>, vector<32x32xf32>, vector<2x32xf32> -> vector<2x32xf32>
    %555 = vector.broadcast %413 : vector<1x32xf32> to vector<2x32xf32>
    %556 = arith.addf %554, %555 : vector<2x32xf32>
    %557 = math.tanh %556 : vector<2x32xf32>
    %cst_143 = arith.constant dense<0.000000e+00> : vector<2x32xf32>
    %558 = tpu.matmul %557, %414, %cst_143 {dimension_numbers = #tpu.dot_dimension_numbers<[1], [0], [0], [1], [0, 0, 1, 1], [], []>} : vector<2x32xf32>, vector<32x32xf32>, vector<2x32xf32> -> vector<2x32xf32>
    %559 = vector.broadcast %415 : vector<1x32xf32> to vector<2x32xf32>
    %560 = arith.addf %558, %559 : vector<2x32xf32>
    %561 = vector.broadcast %460 : f32 to vector<2x32xf32>
    %562 = arith.mulf %561, %560 : vector<2x32xf32>
    %563 = arith.addf %543, %562 : vector<2x32xf32>
    %cst_144 = arith.constant dense<0.000000e+00> : vector<2x2xf32>
    %564 = tpu.matmul %557, %416, %cst_144 {dimension_numbers = #tpu.dot_dimension_numbers<[1], [0], [0], [1], [0, 0, 1, 1], [], []>} : vector<2x32xf32>, vector<32x2xf32>, vector<2x2xf32> -> vector<2x2xf32>
    %565 = vector.broadcast %417 : vector<1x2xf32> to vector<2x2xf32>
    %566 = arith.addf %564, %565 : vector<2x2xf32>
    %567 = vector.broadcast %460 : f32 to vector<2x2xf32>
    %568 = arith.mulf %567, %566 : vector<2x2xf32>
    %569 = arith.addf %549, %568 : vector<2x2xf32>
    %c0_145 = arith.constant 0 : index
    %c10 = arith.constant 10 : index
    %570 = vector.load %arg20[%c0_145, %c10] : memref<2x16xf32, #tpu.memory_space<vmem>>, vector<2x2xf32>
    tpu.vector_store %arg20[%c0_145, %c10], %569 {strides = array<i32>} : memref<2x16xf32, #tpu.memory_space<vmem>>, vector<2x2xf32>,
    %571 = vector.broadcast %441 : vector<1x32xf32> to vector<2x32xf32>
    %572 = arith.addf %563, %571 : vector<2x32xf32>
    %573 = math.tanh %572 : vector<2x32xf32>
    %cst_146 = arith.constant dense<0.000000e+00> : vector<2x32xf32>
    %574 = tpu.matmul %573, %412, %cst_146 {dimension_numbers = #tpu.dot_dimension_numbers<[1], [0], [0], [1], [0, 0, 1, 1], [], []>} : vector<2x32xf32>, vector<32x32xf32>, vector<2x32xf32> -> vector<2x32xf32>
    %575 = vector.broadcast %413 : vector<1x32xf32> to vector<2x32xf32>
    %576 = arith.addf %574, %575 : vector<2x32xf32>
    %577 = math.tanh %576 : vector<2x32xf32>
    %cst_147 = arith.constant dense<0.000000e+00> : vector<2x32xf32>
    %578 = tpu.matmul %577, %414, %cst_147 {dimension_numbers = #tpu.dot_dimension_numbers<[1], [0], [0], [1], [0, 0, 1, 1], [], []>} : vector<2x32xf32>, vector<32x32xf32>, vector<2x32xf32> -> vector<2x32xf32>
    %579 = vector.broadcast %415 : vector<1x32xf32> to vector<2x32xf32>
    %580 = arith.addf %578, %579 : vector<2x32xf32>
    %581 = vector.broadcast %463 : f32 to vector<2x32xf32>
    %582 = arith.mulf %581, %580 : vector<2x32xf32>
    %583 = arith.addf %563, %582 : vector<2x32xf32>
    %cst_148 = arith.constant dense<0.000000e+00> : vector<2x2xf32>
    %584 = tpu.matmul %577, %416, %cst_148 {dimension_numbers = #tpu.dot_dimension_numbers<[1], [0], [0], [1], [0, 0, 1, 1], [], []>} : vector<2x32xf32>, vector<32x2xf32>, vector<2x2xf32> -> vector<2x2xf32>
    %585 = vector.broadcast %417 : vector<1x2xf32> to vector<2x2xf32>
    %586 = arith.addf %584, %585 : vector<2x2xf32>
    %587 = vector.broadcast %463 : f32 to vector<2x2xf32>
    %588 = arith.mulf %587, %586 : vector<2x2xf32>
    %589 = arith.addf %569, %588 : vector<2x2xf32>
    %c0_149 = arith.constant 0 : index
    %c12 = arith.constant 12 : index
    %590 = vector.load %arg20[%c0_149, %c12] : memref<2x16xf32, #tpu.memory_space<vmem>>, vector<2x2xf32>
    tpu.vector_store %arg20[%c0_149, %c12], %589 {strides = array<i32>} : memref<2x16xf32, #tpu.memory_space<vmem>>, vector<2x2xf32>,
    %591 = vector.broadcast %445 : vector<1x32xf32> to vector<2x32xf32>
    %592 = arith.addf %583, %591 : vector<2x32xf32>
    %593 = math.tanh %592 : vector<2x32xf32>
    %cst_150 = arith.constant dense<0.000000e+00> : vector<2x32xf32>
    %594 = tpu.matmul %593, %412, %cst_150 {dimension_numbers = #tpu.dot_dimension_numbers<[1], [0], [0], [1], [0, 0, 1, 1], [], []>} : vector<2x32xf32>, vector<32x32xf32>, vector<2x32xf32> -> vector<2x32xf32>
    %595 = vector.broadcast %413 : vector<1x32xf32> to vector<2x32xf32>
    %596 = arith.addf %594, %595 : vector<2x32xf32>
    %597 = math.tanh %596 : vector<2x32xf32>
    %cst_151 = arith.constant dense<0.000000e+00> : vector<2x2xf32>
    %598 = tpu.matmul %597, %416, %cst_151 {dimension_numbers = #tpu.dot_dimension_numbers<[1], [0], [0], [1], [0, 0, 1, 1], [], []>} : vector<2x32xf32>, vector<32x2xf32>, vector<2x2xf32> -> vector<2x2xf32>
    %599 = vector.broadcast %417 : vector<1x2xf32> to vector<2x2xf32>
    %600 = arith.addf %598, %599 : vector<2x2xf32>
    %601 = vector.broadcast %466 : f32 to vector<2x2xf32>
    %602 = arith.mulf %601, %600 : vector<2x2xf32>
    %603 = arith.addf %589, %602 : vector<2x2xf32>
    %c0_152 = arith.constant 0 : index
    %c14 = arith.constant 14 : index
    %604 = vector.load %arg20[%c0_152, %c14] : memref<2x16xf32, #tpu.memory_space<vmem>>, vector<2x2xf32>
    tpu.vector_store %arg20[%c0_152, %c14], %603 {strides = array<i32>} : memref<2x16xf32, #tpu.memory_space<vmem>>, vector<2x2xf32>,
    return
  }
}

</mosaic_0001>

<llo_original>
// kernel: latent_node_forward.1
$region0: #{latent_node_forward.1}
  #allocation0 [shape = 'u32[]', space=smem, size = 0x4, offset = 0x4, fixed_abs, tag = 'smem constant byte address 0x4 - core index']
  #allocation1 [shape = 'u32[144,128]{1,0:T(1,128)}', space=vmem, size = 0x12000, scoped, tag = 'internal scratch']
  %s0 = inlined_call_operand.hbm [shape: f32[8], index: 0, kind: input, shape index: {}]
  %s1 = inlined_call_operand.vmem [shape: f32[16,4], index: 1, kind: input, shape index: {}]
  %s2 = inlined_call_operand.vmem [shape: f32[4,96], index: 2, kind: input, shape index: {}]
  %s3 = inlined_call_operand.hbm [shape: f32[1,96], index: 3, kind: input, shape index: {}]
  %s4 = inlined_call_operand.hbm [shape: f32[1,32], index: 4, kind: input, shape index: {}]
  %s5 = inlined_call_operand.vmem [shape: f32[32,256], index: 5, kind: input, shape index: {}]
  %s6 = inlined_call_operand.vmem [shape: f32[32,96], index: 6, kind: input, shape index: {}]
  %s7 = inlined_call_operand.hbm [shape: f32[1,96], index: 7, kind: input, shape index: {}]
  %s8 = inlined_call_operand.hbm [shape: f32[1,32], index: 8, kind: input, shape index: {}]
  %s9 = inlined_call_operand.vmem [shape: f32[32,4], index: 9, kind: input, shape index: {}]
  %s10 = inlined_call_operand.vmem [shape: f32[1,4], index: 10, kind: input, shape index: {}]
  %s11 = inlined_call_operand.hbm [shape: f32[1,32], index: 11, kind: input, shape index: {}]
  %s12 = inlined_call_operand.hbm [shape: f32[1,32], index: 12, kind: input, shape index: {}]
  %s13 = inlined_call_operand.hbm [shape: f32[4,32], index: 13, kind: input, shape index: {}]
  %s14 = inlined_call_operand.vmem [shape: f32[32,32], index: 14, kind: input, shape index: {}]
  %s15 = inlined_call_operand.hbm [shape: f32[1,32], index: 15, kind: input, shape index: {}]
  %s16 = inlined_call_operand.vmem [shape: f32[32,32], index: 16, kind: input, shape index: {}]
  %s17 = inlined_call_operand.hbm [shape: f32[1,32], index: 17, kind: input, shape index: {}]
  %s18 = inlined_call_operand.vmem [shape: f32[32,2], index: 18, kind: input, shape index: {}]
  %s19 = inlined_call_operand.hbm [shape: f32[1,2], index: 19, kind: input, shape index: {}]
  %s20 = inlined_call_operand.vmem [shape: f32[2,16], index: 20, kind: output, shape index: {}]
  %s21 = sld [smem:[#allocation0]]
  $region134: #{latent_node_forward.1} parent=0
    _
  %s23 = ssub.s32 1, %s21
  %s24 = scalar_select 0, %s23, %s21
  $region1: #{latent_node_forward.1} parent=0
    #allocation2 [shape = 'u8[512]{0}', space=smem, size = 0x200, scoped, tag = 'input window, operand 0, single buffered']
    #allocation3 [shape = 's32[1]{0}', space=sflag, size = 0x4, scoped, tag = 'scoped memory for latent_node_forward.1']
    #allocation4 [shape = 's32[1]{0}', space=sflag, size = 0x4, scoped, tag = 'scoped memory for latent_node_forward.1']
    #allocation5 [shape = 'u8[512]{0}', space=vmem, size = 0x400, scoped, tag = 'input window, operand 3, single buffered']
    #allocation6 [shape = 'u8[512]{0}', space=vmem, size = 0x400, scoped, tag = 'input window, operand 4, single buffered']
    #allocation7 [shape = 's32[1]{0}', space=sflag, size = 0x4, scoped, tag = 'scoped memory for latent_node_forward.1']
    #allocation8 [shape = 'u8[512]{0}', space=vmem, size = 0x400, scoped, tag = 'input window, operand 7, single buffered']
    #allocation9 [shape = 'u8[512]{0}', space=vmem, size = 0x400, scoped, tag = 'input window, operand 8, single buffered']
    #allocation10 [shape = 's32[1]{0}', space=sflag, size = 0x4, scoped, tag = 'scoped memory for latent_node_forward.1']
    #allocation11 [shape = 'u8[512]{0}', space=vmem, size = 0x400, scoped, tag = 'input window, operand 11, single buffered']
    #allocation12 [shape = 'u8[512]{0}', space=vmem, size = 0x400, scoped, tag = 'input window, operand 12, single buffered']
    #allocation13 [shape = 's32[1]{0}', space=sflag, size = 0x4, scoped, tag = 'scoped memory for latent_node_forward.1']
    #allocation14 [shape = 'u8[2048]{0}', space=vmem, size = 0x800, scoped, tag = 'input window, operand 13, single buffered']
    #allocation15 [shape = 'u8[512]{0}', space=vmem, size = 0x400, scoped, tag = 'input window, operand 15, single buffered']
    #allocation16 [shape = 's32[1]{0}', space=sflag, size = 0x4, scoped, tag = 'scoped memory for latent_node_forward.1']
    #allocation17 [shape = 'u8[512]{0}', space=vmem, size = 0x400, scoped, tag = 'input window, operand 17, single buffered']
    #allocation18 [shape = 'u8[512]{0}', space=vmem, size = 0x400, scoped, tag = 'input window, operand 19, single buffered']
    #allocation19 [shape = 's32[1]{0}', space=sflag, size = 0x4, scoped, tag = 'scoped memory for latent_node_forward.1']
    %25 = vsyncpa [#allocation4], 0
    %26 = vsyncpa [#allocation3], 0
    %27 = vsyncpa [#allocation7], 0
    %28 = vsyncpa [#allocation10], 0
    %29 = vsyncpa [#allocation13], 0
    %30 = vsyncpa [#allocation16], 0
    %31 = vsyncpa [#allocation19], 0
    // Predicated region
    $region2: #{latent_node_forward.1} parent=1 // pred_check
      _
    $region3: #{latent_node_forward.1} parent=1 // pred_check_branch
      %33 = sbr.rel (0) target = $region5
    $region4: #{latent_node_forward.1} parent=1 // pred_region
      %s35 = ssub.s32 16, 16
      %36 = vsyncadd [#allocation4], %s35
      %39 = dma.hbm_to_smem %s0, 16, [#allocation2], [#allocation4]
    $region5: #{latent_node_forward.1} parent=1 // pred_fallthru
      _
    // Predicated region
    $region6: #{latent_node_forward.1} parent=1 // pred_check
      _
    $region7: #{latent_node_forward.1} parent=1 // pred_check_branch
      %41 = sbr.rel (0) target = $region9
    $region8: #{latent_node_forward.1} parent=1 // pred_region
      _
    $region9: #{latent_node_forward.1} parent=1 // pred_fallthru
      _
    // Predicated region
    $region10: #{latent_node_forward.1} parent=1 // pred_check
      _
    $region11: #{latent_node_forward.1} parent=1 // pred_check_branch
      %43 = sbr.rel (0) target = $region13
    $region12: #{latent_node_forward.1} parent=1 // pred_region
      _
    $region13: #{latent_node_forward.1} parent=1 // pred_fallthru
      _
    // Predicated region
    $region14: #{latent_node_forward.1} parent=1 // pred_check
      _
    $region15: #{latent_node_forward.1} parent=1 // pred_check_branch
      %45 = sbr.rel (0) target = $region17
    $region16: #{latent_node_forward.1} parent=1 // pred_region
      %s47 = ssub.s32 16, 16
      %48 = vsyncadd [#allocation3], %s47
      %s50 = sshll.u32 [#allocation5], 4
      %s51 = int_to_ptr.vmem [resolvable:$true] %s50
      %53 = dma.hbm_to_vmem [thread:$0]  %s3, 16, %s51, [#allocation3]
    $region17: #{latent_node_forward.1} parent=1 // pred_fallthru
      _
    // Predicated region
    $region18: #{latent_node_forward.1} parent=1 // pred_check
      _
    $region19: #{latent_node_forward.1} parent=1 // pred_check_branch
      %55 = sbr.rel (0) target = $region21
    $region20: #{latent_node_forward.1} parent=1 // pred_region
      %s57 = ssub.s32 16, 16
      %58 = vsyncadd [#allocation7], %s57
      %s60 = sshll.u32 [#allocation6], 4
      %s61 = int_to_ptr.vmem [resolvable:$true] %s60
      %63 = dma.hbm_to_vmem [thread:$0]  %s4, 16, %s61, [#allocation7]
    $region21: #{latent_node_forward.1} parent=1 // pred_fallthru
      _
    // Predicated region
    $region22: #{latent_node_forward.1} parent=1 // pred_check
      _
    $region23: #{latent_node_forward.1} parent=1 // pred_check_branch
      %65 = sbr.rel (0) target = $region25
    $region24: #{latent_node_forward.1} parent=1 // pred_region
      _
    $region25: #{latent_node_forward.1} parent=1 // pred_fallthru
      _
    // Predicated region
    $region26: #{latent_node_forward.1} parent=1 // pred_check
      _
    $region27: #{latent_node_forward.1} parent=1 // pred_check_branch
      %67 = sbr.rel (0) target = $region29
    $region28: #{latent_node_forward.1} parent=1 // pred_region
      _
    $region29: #{latent_node_forward.1} parent=1 // pred_fallthru
      _
    // Predicated region
    $region30: #{latent_node_forward.1} parent=1 // pred_check
      _
    $region31: #{latent_node_forward.1} parent=1 // pred_check_branch
      %69 = sbr.rel (0) target = $region33
    $region32: #{latent_node_forward.1} parent=1 // pred_region
      %s71 = ssub.s32 16, 16
      %72 = vsyncadd [#allocation7], %s71
      %s74 = sshll.u32 [#allocation8], 4
      %s75 = int_to_ptr.vmem [resolvable:$true] %s74
      %77 = dma.hbm_to_vmem [thread:$0]  %s7, 16, %s75, [#allocation7]
    $region33: #{latent_node_forward.1} parent=1 // pred_fallthru
      _
    // Predicated region
    $region34: #{latent_node_forward.1} parent=1 // pred_check
      _
    $region35: #{latent_node_forward.1} parent=1 // pred_check_branch
      %79 = sbr.rel (0) target = $region37
    $region36: #{latent_node_forward.1} parent=1 // pred_region
      %s81 = ssub.s32 16, 16
      %82 = vsyncadd [#allocation10], %s81
      %s84 = sshll.u32 [#allocation9], 4
      %s85 = int_to_ptr.vmem [resolvable:$true] %s84
      %87 = dma.hbm_to_vmem [thread:$0]  %s8, 16, %s85, [#allocation10]
    $region37: #{latent_node_forward.1} parent=1 // pred_fallthru
      _
    // Predicated region
    $region38: #{latent_node_forward.1} parent=1 // pred_check
      _
    $region39: #{latent_node_forward.1} parent=1 // pred_check_branch
      %89 = sbr.rel (0) target = $region41
    $region40: #{latent_node_forward.1} parent=1 // pred_region
      _
    $region41: #{latent_node_forward.1} parent=1 // pred_fallthru
      _
    // Predicated region
    $region42: #{latent_node_forward.1} parent=1 // pred_check
      _
    $region43: #{latent_node_forward.1} parent=1 // pred_check_branch
      %91 = sbr.rel (0) target = $region45
    $region44: #{latent_node_forward.1} parent=1 // pred_region
      _
    $region45: #{latent_node_forward.1} parent=1 // pred_fallthru
      _
    // Predicated region
    $region46: #{latent_node_forward.1} parent=1 // pred_check
      _
    $region47: #{latent_node_forward.1} parent=1 // pred_check_branch
      %93 = sbr.rel (0) target = $region49
    $region48: #{latent_node_forward.1} parent=1 // pred_region
      %s95 = ssub.s32 16, 16
      %96 = vsyncadd [#allocation10], %s95
      %s98 = sshll.u32 [#allocation11], 4
      %s99 = int_to_ptr.vmem [resolvable:$true] %s98
      %101 = dma.hbm_to_vmem [thread:$0]  %s11, 16, %s99, [#allocation10]
    $region49: #{latent_node_forward.1} parent=1 // pred_fallthru
      _
    // Predicated region
    $region50: #{latent_node_forward.1} parent=1 // pred_check
      _
    $region51: #{latent_node_forward.1} parent=1 // pred_check_branch
      %103 = sbr.rel (0) target = $region53
    $region52: #{latent_node_forward.1} parent=1 // pred_region
      %s105 = ssub.s32 16, 16
      %106 = vsyncadd [#allocation13], %s105
      %s108 = sshll.u32 [#allocation12], 4
      %s109 = int_to_ptr.vmem [resolvable:$true] %s108
      %111 = dma.hbm_to_vmem [thread:$0]  %s12, 16, %s109, [#allocation13]
    $region53: #{latent_node_forward.1} parent=1 // pred_fallthru
      _
    // Predicated region
    $region54: #{latent_node_forward.1} parent=1 // pred_check
      _
    $region55: #{latent_node_forward.1} parent=1 // pred_check_branch
      %113 = sbr.rel (0) target = $region57
    $region56: #{latent_node_forward.1} parent=1 // pred_region
      %s115 = ssub.s32 64, 64
      %116 = vsyncadd [#allocation13], %s115
      %s118 = sshll.u32 [#allocation14], 4
      %s119 = int_to_ptr.vmem [resolvable:$true] %s118
      %121 = dma.hbm_to_vmem [thread:$0]  %s13, 64, %s119, [#allocation13]
    $region57: #{latent_node_forward.1} parent=1 // pred_fallthru
      _
    // Predicated region
    $region58: #{latent_node_forward.1} parent=1 // pred_check
      _
    $region59: #{latent_node_forward.1} parent=1 // pred_check_branch
      %123 = sbr.rel (0) target = $region61
    $region60: #{latent_node_forward.1} parent=1 // pred_region
      _
    $region61: #{latent_node_forward.1} parent=1 // pred_fallthru
      _
    // Predicated region
    $region62: #{latent_node_forward.1} parent=1 // pred_check
      _
    $region63: #{latent_node_forward.1} parent=1 // pred_check_branch
      %125 = sbr.rel (0) target = $region65
    $region64: #{latent_node_forward.1} parent=1 // pred_region
      %s127 = ssub.s32 16, 16
      %128 = vsyncadd [#allocation16], %s127
      %s130 = sshll.u32 [#allocation15], 4
      %s131 = int_to_ptr.vmem [resolvable:$true] %s130
      %133 = dma.hbm_to_vmem [thread:$0]  %s15, 16, %s131, [#allocation16]
    $region65: #{latent_node_forward.1} parent=1 // pred_fallthru
      _
    // Predicated region
    $region66: #{latent_node_forward.1} parent=1 // pred_check
      _
    $region67: #{latent_node_forward.1} parent=1 // pred_check_branch
      %135 = sbr.rel (0) target = $region69
    $region68: #{latent_node_forward.1} parent=1 // pred_region
      _
    $region69: #{latent_node_forward.1} parent=1 // pred_fallthru
      _
    // Predicated region
    $region70: #{latent_node_forward.1} parent=1 // pred_check
      _
    $region71: #{latent_node_forward.1} parent=1 // pred_check_branch
      %137 = sbr.rel (0) target = $region73
    $region72: #{latent_node_forward.1} parent=1 // pred_region
      %s139 = ssub.s32 16, 16
      %140 = vsyncadd [#allocation16], %s139
      %s142 = sshll.u32 [#allocation17], 4
      %s143 = int_to_ptr.vmem [resolvable:$true] %s142
      %145 = dma.hbm_to_vmem [thread:$0]  %s17, 16, %s143, [#allocation16]
    $region73: #{latent_node_forward.1} parent=1 // pred_fallthru
      _
    // Predicated region
    $region74: #{latent_node_forward.1} parent=1 // pred_check
      _
    $region75: #{latent_node_forward.1} parent=1 // pred_check_branch
      %147 = sbr.rel (0) target = $region77
    $region76: #{latent_node_forward.1} parent=1 // pred_region
      _
    $region77: #{latent_node_forward.1} parent=1 // pred_fallthru
      _
    // Predicated region
    $region78: #{latent_node_forward.1} parent=1 // pred_check
      _
    $region79: #{latent_node_forward.1} parent=1 // pred_check_branch
      %149 = sbr.rel (0) target = $region81
    $region80: #{latent_node_forward.1} parent=1 // pred_region
      %s151 = ssub.s32 16, 16
      %152 = vsyncadd [#allocation19], %s151
      %s154 = sshll.u32 [#allocation18], 4
      %s155 = int_to_ptr.vmem [resolvable:$true] %s154
      %157 = dma.hbm_to_vmem [thread:$0]  %s19, 16, %s155, [#allocation19]
    $region81: #{latent_node_forward.1} parent=1 // pred_fallthru
      _
    // Predicated region
    $region82: #{latent_node_forward.1} parent=1 // pred_check
      _
    $region83: #{latent_node_forward.1} parent=1 // pred_check_branch
      %159 = sbr.rel (0) target = $region85
    $region84: #{latent_node_forward.1} parent=1 // pred_region
      %160 = dma.done [#allocation4], 16
    $region85: #{latent_node_forward.1} parent=1 // pred_fallthru
      _
    // Predicated region
    $region86: #{latent_node_forward.1} parent=1 // pred_check
      _
    $region87: #{latent_node_forward.1} parent=1 // pred_check_branch
      %162 = sbr.rel (0) target = $region89
    $region88: #{latent_node_forward.1} parent=1 // pred_region
      %163 = dma.done [#allocation3], 16
    $region89: #{latent_node_forward.1} parent=1 // pred_fallthru
      _
    // Predicated region
    $region90: #{latent_node_forward.1} parent=1 // pred_check
      _
    $region91: #{latent_node_forward.1} parent=1 // pred_check_branch
      %165 = sbr.rel (0) target = $region93
    $region92: #{latent_node_forward.1} parent=1 // pred_region
      %166 = dma.done [#allocation7], 16
    $region93: #{latent_node_forward.1} parent=1 // pred_fallthru
      _
    // Predicated region
    $region94: #{latent_node_forward.1} parent=1 // pred_check
      _
    $region95: #{latent_node_forward.1} parent=1 // pred_check_branch
      %168 = sbr.rel (0) target = $region97
    $region96: #{latent_node_forward.1} parent=1 // pred_region
      %169 = dma.done [#allocation7], 16
    $region97: #{latent_node_forward.1} parent=1 // pred_fallthru
      _
    // Predicated region
    $region98: #{latent_node_forward.1} parent=1 // pred_check
      _
    $region99: #{latent_node_forward.1} parent=1 // pred_check_branch
      %171 = sbr.rel (0) target = $region101
    $region100: #{latent_node_forward.1} parent=1 // pred_region
      %172 = dma.done [#allocation10], 16
    $region101: #{latent_node_forward.1} parent=1 // pred_fallthru
      _
    // Predicated region
    $region102: #{latent_node_forward.1} parent=1 // pred_check
      _
    $region103: #{latent_node_forward.1} parent=1 // pred_check_branch
      %174 = sbr.rel (0) target = $region105
    $region104: #{latent_node_forward.1} parent=1 // pred_region
      %175 = dma.done [#allocation10], 16
    $region105: #{latent_node_forward.1} parent=1 // pred_fallthru
      _
    // Predicated region
    $region106: #{latent_node_forward.1} parent=1 // pred_check
      _
    $region107: #{latent_node_forward.1} parent=1 // pred_check_branch
      %177 = sbr.rel (0) target = $region109
    $region108: #{latent_node_forward.1} parent=1 // pred_region
      %178 = dma.done [#allocation13], 16
    $region109: #{latent_node_forward.1} parent=1 // pred_fallthru
      _
    // Predicated region
    $region110: #{latent_node_forward.1} parent=1 // pred_check
      _
    $region111: #{latent_node_forward.1} parent=1 // pred_check_branch
      %180 = sbr.rel (0) target = $region113
    $region112: #{latent_node_forward.1} parent=1 // pred_region
      %181 = dma.done [#allocation13], 64
    $region113: #{latent_node_forward.1} parent=1 // pred_fallthru
      _
    // Predicated region
    $region114: #{latent_node_forward.1} parent=1 // pred_check
      _
    $region115: #{latent_node_forward.1} parent=1 // pred_check_branch
      %183 = sbr.rel (0) target = $region117
    $region116: #{latent_node_forward.1} parent=1 // pred_region
      %184 = dma.done [#allocation16], 16
    $region117: #{latent_node_forward.1} parent=1 // pred_fallthru
      _
    // Predicated region
    $region118: #{latent_node_forward.1} parent=1 // pred_check
      _
    $region119: #{latent_node_forward.1} parent=1 // pred_check_branch
      %186 = sbr.rel (0) target = $region121
    $region120: #{latent_node_forward.1} parent=1 // pred_region
      %187 = dma.done [#allocation16], 16
    $region121: #{latent_node_forward.1} parent=1 // pred_fallthru
      _
    // Predicated region
    $region122: #{latent_node_forward.1} parent=1 // pred_check
      _
    $region123: #{latent_node_forward.1} parent=1 // pred_check_branch
      %189 = sbr.rel (0) target = $region125
    $region124: #{latent_node_forward.1} parent=1 // pred_region
      %190 = dma.done [#allocation19], 16
    $region125: #{latent_node_forward.1} parent=1 // pred_fallthru
      _
    %191 = sfence
    %v192 = vld [vmem:[%s2] sm:$0xf]
    %v193 = vld [vmem:[#allocation5] sm:$0x1]
    %v194 = vld [vmem:[#allocation6] sm:$0x1]
    %v195 = vld [vmem:[%s5] sm:$0xff]
    %v196 = vld [vmem:[%s5 + $0x8] sm:$0xff]
    %v197 = vld [vmem:[%s5 + $0x10] sm:$0xff]
    %v198 = vld [vmem:[%s5 + $0x18] sm:$0xff]
    %v199 = vld [vmem:[%s5 + $0x20] sm:$0xff]
    %v200 = vld [vmem:[%s5 + $0x28] sm:$0xff]
    %v201 = vld [vmem:[%s5 + $0x30] sm:$0xff]
    %v202 = vld [vmem:[%s5 + $0x38] sm:$0xff]
    %v203 = vld [vmem:[%s6] sm:$0xff]
    %v204 = vld [vmem:[%s6 + $0x8] sm:$0xff]
    %v205 = vld [vmem:[%s6 + $0x10] sm:$0xff]
    %v206 = vld [vmem:[%s6 + $0x18] sm:$0xff]
    %v207 = vld [vmem:[#allocation8] sm:$0x1]
    %v208 = vld [vmem:[#allocation9] sm:$0x1]
    %v209 = vld [vmem:[%s1] sm:$0xff]
    %v210 = vld [vmem:[%s1 + $0x8] sm:$0xff]
    %v212 = vlaneseq
    %v213 = vshrl.u32 %v212, 7
    %v214 = vsub.s32 0, %v213
    %v215 = vrot.slane %v193, %v214
    %vm217 = vcmask 31744
    %v219 = vsel %vm217, %v209, 0
    %v222 = vsel %vm217, %v210, 0
    %vm224 = vcmask 1043456
    %v226 = vsel %vm224, %v192, 0
    %228 = vmatprep.subr.mxu0 0.0
    %229 = vmatpush1.msra.mxu0 %v226
    %230 = vmatprep.subr.mxu0 0.0
    %231 = vmatpush1.msra.mxu0 0.0
    %232 = vmatprep.subr.mxu0 0.0
    %233 = vmatpush1.msra.mxu0 0.0
    %234 = vmatprep.subr.mxu0 0.0
    %235 = vmatpush1.msra.mxu0 0.0
    %236 = vmatprep.subr.mxu0 0.0
    %237 = vmatpush1.msra.mxu0 0.0
    %238 = vmatprep.subr.mxu0 0.0
    %239 = vmatpush1.msra.mxu0 0.0
    %240 = vmatprep.subr.mxu0 0.0
    %241 = vmatpush1.msra.mxu0 0.0
    %242 = vmatprep.subr.mxu0 0.0
    %243 = vmatpush1.msra.mxu0 0.0
    %244 = vmatprep.subr.mxu0 0.0
    %245 = vmatpush1.msra.mxu0 0.0
    %246 = vmatprep.subr.mxu0 0.0
    %247 = vmatpush1.msra.mxu0 0.0
    %248 = vmatprep.subr.mxu0 0.0
    %249 = vmatpush1.msra.mxu0 0.0
    %250 = vmatprep.subr.mxu0 0.0
    %251 = vmatpush1.msra.mxu0 0.0
    %252 = vmatprep.subr.mxu0 0.0
    %253 = vmatpush1.msra.mxu0 0.0
    %254 = vmatprep.subr.mxu0 0.0
    %255 = vmatpush1.msra.mxu0 0.0
    %256 = vmatprep.subr.mxu0 0.0
    %257 = vmatpush1.msra.mxu0 0.0
    %258 = vmatprep.subr.mxu0 0.0
    %259 = vmatpush1.msra.mxu0 0.0
    %260 = vmatprep.subr.mxu0 0.0
    %261 = vmatpush1.msra.mxu0 0.0
    %262 = vmatprep.subr.mxu0 0.0
    %263 = vmatpush1.msra.mxu0 0.0
    %264 = vmatprep.subr.mxu0 0.0
    %265 = vmatpush1.msra.mxu0 0.0
    %266 = vmatprep.subr.mxu0 0.0
    %267 = vmatpush1.msra.mxu0 0.0
    %268 = vmatprep.subr.mxu0 0.0
    %269 = vmatpush1.msra.mxu0 0.0
    %270 = vmatprep.subr.mxu0 0.0
    %271 = vmatpush1.msra.mxu0 0.0
    %272 = vmatprep.subr.mxu0 0.0
    %273 = vmatpush1.msra.mxu0 0.0
    %274 = vmatprep.subr.mxu0 0.0
    %275 = vmatpush1.msra.mxu0 0.0
    %276 = vmatprep.subr.mxu0 0.0
    %277 = vmatpush1.msra.mxu0 0.0
    %278 = vmatprep.subr.mxu0 0.0
    %279 = vmatpush1.msra.mxu0 0.0
    %280 = vmatprep.subr.mxu0 0.0
    %281 = vmatpush1.msra.mxu0 0.0
    %282 = vmatprep.subr.mxu0 0.0
    %283 = vmatpush1.msra.mxu0 0.0
    %284 = vmatprep.subr.mxu0 0.0
    %285 = vmatpush1.msra.mxu0 0.0
    %286 = vmatprep.subr.mxu0 0.0
    %287 = vmatpush1.msra.mxu0 0.0
    %288 = vmatprep.subr.mxu0 0.0
    %289 = vmatpush1.msra.mxu0 0.0
    %290 = vmatprep.subr.mxu0 0.0
    %291 = vmatpush1.msra.mxu0 0.0
    %292 = vmatprep.mubr.f32.mxu0 0.0
    %293 = vmatmul.mubr.f32.gmra.mrb[0].mxu0 %v219
    %v294 = vpop.f32.mrb[0].mxu0
    %v295 = vadd.f32 %v215, %v294
    %v296 = vpop.f32.mrb[0].mxu0
    %297 = vmatprep.mubr.f32.mxu0 0.0
    %298 = vmatmul.mubr.f32.gmra.mrb[0].mxu0 %v222
    %v299 = vpop.f32.mrb[0].mxu0
    %v300 = vadd.f32 %v215, %v299
    %v301 = vpop.f32.mrb[0].mxu0
    %302 = vdwg.mxu0
    %v303 = vadd.f32 %v295, 0.0
    %v304 = vmul.f32 %v303, 0.5
    %v305 = vtanh.pop %v304
    %v306 = vmul.f32 %v305, 0.5
    %v307 = vadd.f32 %v306, 0.5
    %v309 = vlaneseq
    %v310 = vshrl.u32 %v309, 7
    %v311 = vsub.s32 0, %v310
    %v312 = vrot.slane %v194, %v311
    %v314 = vadd.f32 %v312, 0.0
    %v315 = vmul.f32 %v307, %v314
    %317 = vrot.lane.b32.xlu0 %v315, 64
    %v318 = vpop.permute.xlu0 %317
    %v320 = vadd.f32 %v295, %v318
    %v321 = vtanh.pop %v320
    %v322 = vsub.f32 0.0, %v321
    %324 = vrot.lane.b32.xlu0 %v322, 96
    %v325 = vpop.permute.xlu0 %324
    %v327 = vmul.f32 %v307, %v325
    %329 = vrot.lane.b32.xlu0 %v327, 32
    %v330 = vpop.permute.xlu0 %329
    %v332 = vadd.f32 %v321, %v330
    %334 = vrot.lane.b32.xlu0 %v332, 64
    %v335 = vpop.permute.xlu0 %334
    %vm336 = vcmask 261120
    %v337 = vsel %vm336, %v335, 0
    %339 = vmatprep.subr.mxu0 %v196
    %340 = vmatpush1.msra.mxu0 %v195
    %341 = vmatprep.subr.mxu0 %v198
    %342 = vmatpush1.msra.mxu0 %v197
    %343 = vmatprep.subr.mxu0 %v200
    %344 = vmatpush1.msra.mxu0 %v199
    %345 = vmatprep.subr.mxu0 %v202
    %346 = vmatpush1.msra.mxu0 %v201
    %347 = vmatprep.subr.mxu0 0.0
    %348 = vmatpush1.msra.mxu0 0.0
    %349 = vmatprep.subr.mxu0 0.0
    %350 = vmatpush1.msra.mxu0 0.0
    %351 = vmatprep.subr.mxu0 0.0
    %352 = vmatpush1.msra.mxu0 0.0
    %353 = vmatprep.subr.mxu0 0.0
    %354 = vmatpush1.msra.mxu0 0.0
    %355 = vmatprep.subr.mxu0 0.0
    %356 = vmatpush1.msra.mxu0 0.0
    %357 = vmatprep.subr.mxu0 0.0
    %358 = vmatpush1.msra.mxu0 0.0
    %359 = vmatprep.subr.mxu0 0.0
    %360 = vmatpush1.msra.mxu0 0.0
    %361 = vmatprep.subr.mxu0 0.0
    %362 = vmatpush1.msra.mxu0 0.0
    %363 = vmatprep.subr.mxu0 0.0
    %364 = vmatpush1.msra.mxu0 0.0
    %365 = vmatprep.subr.mxu0 0.0
    %366 = vmatpush1.msra.mxu0 0.0
    %367 = vmatprep.subr.mxu0 0.0
    %368 = vmatpush1.msra.mxu0 0.0
    %369 = vmatprep.subr.mxu0 0.0
    %370 = vmatpush1.msra.mxu0 0.0
    %371 = vmatprep.subr.mxu0 0.0
    %372 = vmatpush1.msra.mxu0 0.0
    %373 = vmatprep.subr.mxu0 0.0
    %374 = vmatpush1.msra.mxu0 0.0
    %375 = vmatprep.subr.mxu0 0.0
    %376 = vmatpush1.msra.mxu0 0.0
    %377 = vmatprep.subr.mxu0 0.0
    %378 = vmatpush1.msra.mxu0 0.0
    %379 = vmatprep.subr.mxu0 0.0
    %380 = vmatpush1.msra.mxu0 0.0
    %381 = vmatprep.subr.mxu0 0.0
    %382 = vmatpush1.msra.mxu0 0.0
    %383 = vmatprep.subr.mxu0 0.0
    %384 = vmatpush1.msra.mxu0 0.0
    %385 = vmatprep.subr.mxu0 0.0
    %386 = vmatpush1.msra.mxu0 0.0
    %387 = vmatprep.subr.mxu0 0.0
    %388 = vmatpush1.msra.mxu0 0.0
    %389 = vmatprep.subr.mxu0 0.0
    %390 = vmatpush1.msra.mxu0 0.0
    %391 = vmatprep.subr.mxu0 0.0
    %392 = vmatpush1.msra.mxu0 0.0
    %393 = vmatprep.subr.mxu0 0.0
    %394 = vmatpush1.msra.mxu0 0.0
    %395 = vmatprep.subr.mxu0 0.0
    %396 = vmatpush1.msra.mxu0 0.0
    %397 = vmatprep.subr.mxu0 0.0
    %398 = vmatpush1.msra.mxu0 0.0
    %399 = vmatprep.subr.mxu0 0.0
    %400 = vmatpush1.msra.mxu0 0.0
    %401 = vmatprep.subr.mxu0 0.0
    %402 = vmatpush1.msra.mxu0 0.0
    %403 = vmatprep.mubr.f32.mxu0 0.0
    %404 = vmatmul.mubr.f32.gmra.mrb[0].mxu0 %v337
    %v405 = vpop.f32.mrb[0].mxu0
    %v406 = vadd.f32 0.0, %v405
    %v407 = vpop.f32.mrb[0].mxu0
    %v408 = vadd.f32 0.0, %v407
    %409 = vdwg.mxu0
    %v411 = vlaneseq
    %v412 = vshrl.u32 %v411, 7
    %v413 = vsub.s32 0, %v412
    %v414 = vrot.slane %v207, %v413
    %v416 = vadd.f32 %v408, %v414
    %v418 = vsel %vm336, 0.0, 0
    %420 = vmatprep.subr.mxu0 0.0
    %421 = vmatpush1.msra.mxu0 %v203
    %422 = vmatprep.subr.mxu0 0.0
    %423 = vmatpush1.msra.mxu0 %v204
    %424 = vmatprep.subr.mxu0 0.0
    %425 = vmatpush1.msra.mxu0 %v205
    %426 = vmatprep.subr.mxu0 0.0
    %427 = vmatpush1.msra.mxu0 %v206
    %428 = vmatprep.subr.mxu0 0.0
    %429 = vmatpush1.msra.mxu0 0.0
    %430 = vmatprep.subr.mxu0 0.0
    %431 = vmatpush1.msra.mxu0 0.0
    %432 = vmatprep.subr.mxu0 0.0
    %433 = vmatpush1.msra.mxu0 0.0
    %434 = vmatprep.subr.mxu0 0.0
    %435 = vmatpush1.msra.mxu0 0.0
    %436 = vmatprep.subr.mxu0 0.0
    %437 = vmatpush1.msra.mxu0 0.0
    %438 = vmatprep.subr.mxu0 0.0
    %439 = vmatpush1.msra.mxu0 0.0
    %440 = vmatprep.subr.mxu0 0.0
    %441 = vmatpush1.msra.mxu0 0.0
    %442 = vmatprep.subr.mxu0 0.0
    %443 = vmatpush1.msra.mxu0 0.0
    %444 = vmatprep.subr.mxu0 0.0
    %445 = vmatpush1.msra.mxu0 0.0
    %446 = vmatprep.subr.mxu0 0.0
    %447 = vmatpush1.msra.mxu0 0.0
    %448 = vmatprep.subr.mxu0 0.0
    %449 = vmatpush1.msra.mxu0 0.0
    %450 = vmatprep.subr.mxu0 0.0
    %451 = vmatpush1.msra.mxu0 0.0
    %452 = vmatprep.subr.mxu0 0.0
    %453 = vmatpush1.msra.mxu0 0.0
    %454 = vmatprep.subr.mxu0 0.0
    %455 = vmatpush1.msra.mxu0 0.0
    %456 = vmatprep.subr.mxu0 0.0
    %457 = vmatpush1.msra.mxu0 0.0
    %458 = vmatprep.subr.mxu0 0.0
    %459 = vmatpush1.msra.mxu0 0.0
    %460 = vmatprep.subr.mxu0 0.0
    %461 = vmatpush1.msra.mxu0 0.0
    %462 = vmatprep.subr.mxu0 0.0
    %463 = vmatpush1.msra.mxu0 0.0
    %464 = vmatprep.subr.mxu0 0.0
    %465 = vmatpush1.msra.mxu0 0.0
    %466 = vmatprep.subr.mxu0 0.0
    %467 = vmatpush1.msra.mxu0 0.0
    %468 = vmatprep.subr.mxu0 0.0
    %469 = vmatpush1.msra.mxu0 0.0
    %470 = vmatprep.subr.mxu0 0.0
    %471 = vmatpush1.msra.mxu0 0.0
    %472 = vmatprep.subr.mxu0 0.0
    %473 = vmatpush1.msra.mxu0 0.0
    %474 = vmatprep.subr.mxu0 0.0
    %475 = vmatpush1.msra.mxu0 0.0
    %476 = vmatprep.subr.mxu0 0.0
    %477 = vmatpush1.msra.mxu0 0.0
    %478 = vmatprep.subr.mxu0 0.0
    %479 = vmatpush1.msra.mxu0 0.0
    %480 = vmatprep.subr.mxu0 0.0
    %481 = vmatpush1.msra.mxu0 0.0
    %482 = vmatprep.subr.mxu0 0.0
    %483 = vmatpush1.msra.mxu0 0.0
    %484 = vmatprep.mubr.f32.mxu0 0.0
    %485 = vmatmul.mubr.f32.gmra.mrb[0].mxu0 %v418
    %v486 = vpop.f32.mrb[0].mxu0
    %v487 = vadd.f32 0.0, %v486
    %v488 = vpop.f32.mrb[0].mxu0
    %489 = vdwg.mxu0
    %v490 = vadd.f32 %v416, %v487
    %v491 = vmul.f32 %v490, 0.5
    %v492 = vtanh.pop %v491
    %v493 = vmul.f32 %v492, 0.5
    %v494 = vadd.f32 %v493, 0.5
    %v496 = vlaneseq
    %v497 = vshrl.u32 %v496, 7
    %v498 = vsub.s32 0, %v497
    %v499 = vrot.slane %v208, %v498
    %500 = vrot.lane.b32.xlu0 %v499, 64
    %v501 = vpop.permute.xlu0 %500
    %v503 = vadd.f32 %v487, %v501
    %505 = vrot.lane.b32.xlu0 %v503, 64
    %v506 = vpop.permute.xlu0 %505
    %v508 = vmul.f32 %v494, %v506
    %510 = vrot.lane.b32.xlu0 %v508, 64
    %v511 = vpop.permute.xlu0 %510
    %v513 = vadd.f32 %v416, %v511
    %v514 = vtanh.pop %v513
    %v515 = vsub.f32 0.0, %v514
    %517 = vrot.lane.b32.xlu0 %v515, 96
    %v518 = vpop.permute.xlu0 %517
    %v520 = vmul.f32 %v494, %v518
    %522 = vrot.lane.b32.xlu0 %v520, 32
    %v523 = vpop.permute.xlu0 %522
    %v525 = vadd.f32 %v514, %v523
    %v527 = vrot.slane %v406, 6
    %v529 = vadd.f32 %v295, %v527
    %v530 = vmul.f32 %v529, 0.5
    %v531 = vtanh.pop %v530
    %v532 = vmul.f32 %v531, 0.5
    %v533 = vadd.f32 %v532, 0.5
    %534 = vrot.lane.b32.xlu0 %v312, 64
    %v535 = vpop.permute.xlu0 %534
    %v537 = vadd.f32 %v406, %v535
    %v539 = vrot.slane %v537, 6
    %540 = vrot.lane.b32.xlu0 %v539, 64
    %v541 = vpop.permute.xlu0 %540
    %v543 = vmul.f32 %v533, %v541
    %545 = vrot.lane.b32.xlu0 %v543, 64
    %v546 = vpop.permute.xlu0 %545
    %v548 = vadd.f32 %v295, %v546
    %v549 = vtanh.pop %v548
    %v551 = vrot.slane %v549, 2
    %v553 = vsub.f32 %v332, %v551
    %v555 = vrot.slane %v553, 6
    %556 = vrot.lane.b32.xlu0 %v555, 96
    %v557 = vpop.permute.xlu0 %556
    %v559 = vmul.f32 %v533, %v557
    %561 = vrot.lane.b32.xlu0 %v559, 32
    %v562 = vpop.permute.xlu0 %561
    %v564 = vadd.f32 %v549, %v562
    %v566 = vrot.slane %v564, 2
    %567 = vrot.lane.b32.xlu0 %v566, 64
    %v568 = vpop.permute.xlu0 %567
    %v569 = vsel %vm336, %v568, 0
    %571 = vmatprep.subr.mxu0 %v196
    %572 = vmatpush1.msra.mxu0 %v195
    %573 = vmatprep.subr.mxu0 %v198
    %574 = vmatpush1.msra.mxu0 %v197
    %575 = vmatprep.subr.mxu0 %v200
    %576 = vmatpush1.msra.mxu0 %v199
    %577 = vmatprep.subr.mxu0 %v202
    %578 = vmatpush1.msra.mxu0 %v201
    %579 = vmatprep.subr.mxu0 0.0
    %580 = vmatpush1.msra.mxu0 0.0
    %581 = vmatprep.subr.mxu0 0.0
    %582 = vmatpush1.msra.mxu0 0.0
    %583 = vmatprep.subr.mxu0 0.0
    %584 = vmatpush1.msra.mxu0 0.0
    %585 = vmatprep.subr.mxu0 0.0
    %586 = vmatpush1.msra.mxu0 0.0
    %587 = vmatprep.subr.mxu0 0.0
    %588 = vmatpush1.msra.mxu0 0.0
    %589 = vmatprep.subr.mxu0 0.0
    %590 = vmatpush1.msra.mxu0 0.0
    %591 = vmatprep.subr.mxu0 0.0
    %592 = vmatpush1.msra.mxu0 0.0
    %593 = vmatprep.subr.mxu0 0.0
    %594 = vmatpush1.msra.mxu0 0.0
    %595 = vmatprep.subr.mxu0 0.0
    %596 = vmatpush1.msra.mxu0 0.0
    %597 = vmatprep.subr.mxu0 0.0
    %598 = vmatpush1.msra.mxu0 0.0
    %599 = vmatprep.subr.mxu0 0.0
    %600 = vmatpush1.msra.mxu0 0.0
    %601 = vmatprep.subr.mxu0 0.0
    %602 = vmatpush1.msra.mxu0 0.0
    %603 = vmatprep.subr.mxu0 0.0
    %604 = vmatpush1.msra.mxu0 0.0
    %605 = vmatprep.subr.mxu0 0.0
    %606 = vmatpush1.msra.mxu0 0.0
    %607 = vmatprep.subr.mxu0 0.0
    %608 = vmatpush1.msra.mxu0 0.0
    %609 = vmatprep.subr.mxu0 0.0
    %610 = vmatpush1.msra.mxu0 0.0
    %611 = vmatprep.subr.mxu0 0.0
    %612 = vmatpush1.msra.mxu0 0.0
    %613 = vmatprep.subr.mxu0 0.0
    %614 = vmatpush1.msra.mxu0 0.0
    %615 = vmatprep.subr.mxu0 0.0
    %616 = vmatpush1.msra.mxu0 0.0
    %617 = vmatprep.subr.mxu0 0.0
    %618 = vmatpush1.msra.mxu0 0.0
    %619 = vmatprep.subr.mxu0 0.0
    %620 = vmatpush1.msra.mxu0 0.0
    %621 = vmatprep.subr.mxu0 0.0
    %622 = vmatpush1.msra.mxu0 0.0
    %623 = vmatprep.subr.mxu0 0.0
    %624 = vmatpush1.msra.mxu0 0.0
    %625 = vmatprep.subr.mxu0 0.0
    %626 = vmatpush1.msra.mxu0 0.0
    %627 = vmatprep.subr.mxu0 0.0
    %628 = vmatpush1.msra.mxu0 0.0
    %629 = vmatprep.subr.mxu0 0.0
    %630 = vmatpush1.msra.mxu0 0.0
    %631 = vmatprep.subr.mxu0 0.0
    %632 = vmatpush1.msra.mxu0 0.0
    %633 = vmatprep.subr.mxu0 0.0
    %634 = vmatpush1.msra.mxu0 0.0
    %635 = vmatprep.mubr.f32.mxu0 0.0
    %636 = vmatmul.mubr.f32.gmra.mrb[0].mxu0 %v569
    %v637 = vpop.f32.mrb[0].mxu0
    %v638 = vadd.f32 0.0, %v637
    %v639 = vpop.f32.mrb[0].mxu0
    %v640 = vadd.f32 0.0, %v639
    %641 = vdwg.mxu0
    %v642 = vadd.f32 %v640, %v414
    %644 = vrot.lane.b32.xlu0 %v525, 64
    %v645 = vpop.permute.xlu0 %644
    %v646 = vsel %vm336, %v645, 0
    %648 = vmatprep.subr.mxu0 0.0
    %649 = vmatpush1.msra.mxu0 %v203
    %650 = vmatprep.subr.mxu0 0.0
    %651 = vmatpush1.msra.mxu0 %v204
    %652 = vmatprep.subr.mxu0 0.0
    %653 = vmatpush1.msra.mxu0 %v205
    %654 = vmatprep.subr.mxu0 0.0
    %655 = vmatpush1.msra.mxu0 %v206
    %656 = vmatprep.subr.mxu0 0.0
    %657 = vmatpush1.msra.mxu0 0.0
    %658 = vmatprep.subr.mxu0 0.0
    %659 = vmatpush1.msra.mxu0 0.0
    %660 = vmatprep.subr.mxu0 0.0
    %661 = vmatpush1.msra.mxu0 0.0
    %662 = vmatprep.subr.mxu0 0.0
    %663 = vmatpush1.msra.mxu0 0.0
    %664 = vmatprep.subr.mxu0 0.0
    %665 = vmatpush1.msra.mxu0 0.0
    %666 = vmatprep.subr.mxu0 0.0
    %667 = vmatpush1.msra.mxu0 0.0
    %668 = vmatprep.subr.mxu0 0.0
    %669 = vmatpush1.msra.mxu0 0.0
    %670 = vmatprep.subr.mxu0 0.0
    %671 = vmatpush1.msra.mxu0 0.0
    %672 = vmatprep.subr.mxu0 0.0
    %673 = vmatpush1.msra.mxu0 0.0
    %674 = vmatprep.subr.mxu0 0.0
    %675 = vmatpush1.msra.mxu0 0.0
    %676 = vmatprep.subr.mxu0 0.0
    %677 = vmatpush1.msra.mxu0 0.0
    %678 = vmatprep.subr.mxu0 0.0
    %679 = vmatpush1.msra.mxu0 0.0
    %680 = vmatprep.subr.mxu0 0.0
    %681 = vmatpush1.msra.mxu0 0.0
    %682 = vmatprep.subr.mxu0 0.0
    %683 = vmatpush1.msra.mxu0 0.0
    %684 = vmatprep.subr.mxu0 0.0
    %685 = vmatpush1.msra.mxu0 0.0
    %686 = vmatprep.subr.mxu0 0.0
    %687 = vmatpush1.msra.mxu0 0.0
    %688 = vmatprep.subr.mxu0 0.0
    %689 = vmatpush1.msra.mxu0 0.0
    %690 = vmatprep.subr.mxu0 0.0
    %691 = vmatpush1.msra.mxu0 0.0
    %692 = vmatprep.subr.mxu0 0.0
    %693 = vmatpush1.msra.mxu0 0.0
    %694 = vmatprep.subr.mxu0 0.0
    %695 = vmatpush1.msra.mxu0 0.0
    %696 = vmatprep.subr.mxu0 0.0
    %697 = vmatpush1.msra.mxu0 0.0
    %698 = vmatprep.subr.mxu0 0.0
    %699 = vmatpush1.msra.mxu0 0.0
    %700 = vmatprep.subr.mxu0 0.0
    %701 = vmatpush1.msra.mxu0 0.0
    %702 = vmatprep.subr.mxu0 0.0
    %703 = vmatpush1.msra.mxu0 0.0
    %704 = vmatprep.subr.mxu0 0.0
    %705 = vmatpush1.msra.mxu0 0.0
    %706 = vmatprep.subr.mxu0 0.0
    %707 = vmatpush1.msra.mxu0 0.0
    %708 = vmatprep.subr.mxu0 0.0
    %709 = vmatpush1.msra.mxu0 0.0
    %710 = vmatprep.subr.mxu0 0.0
    %711 = vmatpush1.msra.mxu0 0.0
    %712 = vmatprep.mubr.f32.mxu0 0.0
    %713 = vmatmul.mubr.f32.gmra.mrb[0].mxu0 %v646
    %v714 = vpop.f32.mrb[0].mxu0
    %v715 = vadd.f32 0.0, %v714
    %v716 = vpop.f32.mrb[0].mxu0
    %717 = vdwg.mxu0
    %v718 = vadd.f32 %v642, %v715
    %v719 = vmul.f32 %v718, 0.5
    %v720 = vtanh.pop %v719
    %v721 = vmul.f32 %v720, 0.5
    %v722 = vadd.f32 %v721, 0.5
    %v723 = vadd.f32 %v715, %v501
    %725 = vrot.lane.b32.xlu0 %v723, 64
    %v726 = vpop.permute.xlu0 %725
    %v728 = vmul.f32 %v722, %v726
    %730 = vrot.lane.b32.xlu0 %v728, 64
    %v731 = vpop.permute.xlu0 %730
    %v733 = vadd.f32 %v642, %v731
    %v734 = vtanh.pop %v733
    %v735 = vsub.f32 %v525, %v734
    %737 = vrot.lane.b32.xlu0 %v735, 96
    %v738 = vpop.permute.xlu0 %737
    %v740 = vmul.f32 %v722, %v738
    %742 = vrot.lane.b32.xlu0 %v740, 32
    %v743 = vpop.permute.xlu0 %742
    %v745 = vadd.f32 %v734, %v743
    %v747 = vrot.slane %v638, 4
    %v749 = vadd.f32 %v295, %v747
    %v750 = vmul.f32 %v749, 0.5
    %v751 = vtanh.pop %v750
    %v752 = vmul.f32 %v751, 0.5
    %v753 = vadd.f32 %v752, 0.5
    %v754 = vadd.f32 %v638, %v535
    %v756 = vrot.slane %v754, 4
    %757 = vrot.lane.b32.xlu0 %v756, 64
    %v758 = vpop.permute.xlu0 %757
    %v760 = vmul.f32 %v753, %v758
    %762 = vrot.lane.b32.xlu0 %v760, 64
    %v763 = vpop.permute.xlu0 %762
    %v765 = vadd.f32 %v295, %v763
    %v766 = vtanh.pop %v765
    %v768 = vrot.slane %v766, 2
    %v770 = vsub.f32 %v564, %v768
    %v772 = vrot.slane %v770, 6
    %773 = vrot.lane.b32.xlu0 %v772, 96
    %v774 = vpop.permute.xlu0 %773
    %v776 = vmul.f32 %v753, %v774
    %778 = vrot.lane.b32.xlu0 %v776, 32
    %v779 = vpop.permute.xlu0 %778
    %v781 = vadd.f32 %v766, %v779
    %v783 = vrot.slane %v781, 4
    %784 = vrot.lane.b32.xlu0 %v783, 64
    %v785 = vpop.permute.xlu0 %784
    %v786 = vsel %vm336, %v785, 0
    %788 = vmatprep.subr.mxu0 %v196
    %789 = vmatpush1.msra.mxu0 %v195
    %790 = vmatprep.subr.mxu0 %v198
    %791 = vmatpush1.msra.mxu0 %v197
    %792 = vmatprep.subr.mxu0 %v200
    %793 = vmatpush1.msra.mxu0 %v199
    %794 = vmatprep.subr.mxu0 %v202
    %795 = vmatpush1.msra.mxu0 %v201
    %796 = vmatprep.subr.mxu0 0.0
    %797 = vmatpush1.msra.mxu0 0.0
    %798 = vmatprep.subr.mxu0 0.0
    %799 = vmatpush1.msra.mxu0 0.0
    %800 = vmatprep.subr.mxu0 0.0
    %801 = vmatpush1.msra.mxu0 0.0
    %802 = vmatprep.subr.mxu0 0.0
    %803 = vmatpush1.msra.mxu0 0.0
    %804 = vmatprep.subr.mxu0 0.0
    %805 = vmatpush1.msra.mxu0 0.0
    %806 = vmatprep.subr.mxu0 0.0
    %807 = vmatpush1.msra.mxu0 0.0
    %808 = vmatprep.subr.mxu0 0.0
    %809 = vmatpush1.msra.mxu0 0.0
    %810 = vmatprep.subr.mxu0 0.0
    %811 = vmatpush1.msra.mxu0 0.0
    %812 = vmatprep.subr.mxu0 0.0
    %813 = vmatpush1.msra.mxu0 0.0
    %814 = vmatprep.subr.mxu0 0.0
    %815 = vmatpush1.msra.mxu0 0.0
    %816 = vmatprep.subr.mxu0 0.0
    %817 = vmatpush1.msra.mxu0 0.0
    %818 = vmatprep.subr.mxu0 0.0
    %819 = vmatpush1.msra.mxu0 0.0
    %820 = vmatprep.subr.mxu0 0.0
    %821 = vmatpush1.msra.mxu0 0.0
    %822 = vmatprep.subr.mxu0 0.0
    %823 = vmatpush1.msra.mxu0 0.0
    %824 = vmatprep.subr.mxu0 0.0
    %825 = vmatpush1.msra.mxu0 0.0
    %826 = vmatprep.subr.mxu0 0.0
    %827 = vmatpush1.msra.mxu0 0.0
    %828 = vmatprep.subr.mxu0 0.0
    %829 = vmatpush1.msra.mxu0 0.0
    %830 = vmatprep.subr.mxu0 0.0
    %831 = vmatpush1.msra.mxu0 0.0
    %832 = vmatprep.subr.mxu0 0.0
    %833 = vmatpush1.msra.mxu0 0.0
    %834 = vmatprep.subr.mxu0 0.0
    %835 = vmatpush1.msra.mxu0 0.0
    %836 = vmatprep.subr.mxu0 0.0
    %837 = vmatpush1.msra.mxu0 0.0
    %838 = vmatprep.subr.mxu0 0.0
    %839 = vmatpush1.msra.mxu0 0.0
    %840 = vmatprep.subr.mxu0 0.0
    %841 = vmatpush1.msra.mxu0 0.0
    %842 = vmatprep.subr.mxu0 0.0
    %843 = vmatpush1.msra.mxu0 0.0
    %844 = vmatprep.subr.mxu0 0.0
    %845 = vmatpush1.msra.mxu0 0.0
    %846 = vmatprep.subr.mxu0 0.0
    %847 = vmatpush1.msra.mxu0 0.0
    %848 = vmatprep.subr.mxu0 0.0
    %849 = vmatpush1.msra.mxu0 0.0
    %850 = vmatprep.subr.mxu0 0.0
    %851 = vmatpush1.msra.mxu0 0.0
    %852 = vmatprep.mubr.f32.mxu0 0.0
    %853 = vmatmul.mubr.f32.gmra.mrb[0].mxu0 %v786
    %v854 = vpop.f32.mrb[0].mxu0
    %v855 = vadd.f32 0.0, %v854
    %v856 = vpop.f32.mrb[0].mxu0
    %v857 = vadd.f32 0.0, %v856
    %858 = vdwg.mxu0
    %v859 = vadd.f32 %v857, %v414
    %861 = vrot.lane.b32.xlu0 %v745, 64
    %v862 = vpop.permute.xlu0 %861
    %v863 = vsel %vm336, %v862, 0
    %865 = vmatprep.subr.mxu0 0.0
    %866 = vmatpush1.msra.mxu0 %v203
    %867 = vmatprep.subr.mxu0 0.0
    %868 = vmatpush1.msra.mxu0 %v204
    %869 = vmatprep.subr.mxu0 0.0
    %870 = vmatpush1.msra.mxu0 %v205
    %871 = vmatprep.subr.mxu0 0.0
    %872 = vmatpush1.msra.mxu0 %v206
    %873 = vmatprep.subr.mxu0 0.0
    %874 = vmatpush1.msra.mxu0 0.0
    %875 = vmatprep.subr.mxu0 0.0
    %876 = vmatpush1.msra.mxu0 0.0
    %877 = vmatprep.subr.mxu0 0.0
    %878 = vmatpush1.msra.mxu0 0.0
    %879 = vmatprep.subr.mxu0 0.0
    %880 = vmatpush1.msra.mxu0 0.0
    %881 = vmatprep.subr.mxu0 0.0
    %882 = vmatpush1.msra.mxu0 0.0
    %883 = vmatprep.subr.mxu0 0.0
    %884 = vmatpush1.msra.mxu0 0.0
    %885 = vmatprep.subr.mxu0 0.0
    %886 = vmatpush1.msra.mxu0 0.0
    %887 = vmatprep.subr.mxu0 0.0
    %888 = vmatpush1.msra.mxu0 0.0
    %889 = vmatprep.subr.mxu0 0.0
    %890 = vmatpush1.msra.mxu0 0.0
    %891 = vmatprep.subr.mxu0 0.0
    %892 = vmatpush1.msra.mxu0 0.0
    %893 = vmatprep.subr.mxu0 0.0
    %894 = vmatpush1.msra.mxu0 0.0
    %895 = vmatprep.subr.mxu0 0.0
    %896 = vmatpush1.msra.mxu0 0.0
    %897 = vmatprep.subr.mxu0 0.0
    %898 = vmatpush1.msra.mxu0 0.0
    %899 = vmatprep.subr.mxu0 0.0
    %900 = vmatpush1.msra.mxu0 0.0
    %901 = vmatprep.subr.mxu0 0.0
    %902 = vmatpush1.msra.mxu0 0.0
    %903 = vmatprep.subr.mxu0 0.0
    %904 = vmatpush1.msra.mxu0 0.0
    %905 = vmatprep.subr.mxu0 0.0
    %906 = vmatpush1.msra.mxu0 0.0
    %907 = vmatprep.subr.mxu0 0.0
    %908 = vmatpush1.msra.mxu0 0.0
    %909 = vmatprep.subr.mxu0 0.0
    %910 = vmatpush1.msra.mxu0 0.0
    %911 = vmatprep.subr.mxu0 0.0
    %912 = vmatpush1.msra.mxu0 0.0
    %913 = vmatprep.subr.mxu0 0.0
    %914 = vmatpush1.msra.mxu0 0.0
    %915 = vmatprep.subr.mxu0 0.0
    %916 = vmatpush1.msra.mxu0 0.0
    %917 = vmatprep.subr.mxu0 0.0
    %918 = vmatpush1.msra.mxu0 0.0
    %919 = vmatprep.subr.mxu0 0.0
    %920 = vmatpush1.msra.mxu0 0.0
    %921 = vmatprep.subr.mxu0 0.0
    %922 = vmatpush1.msra.mxu0 0.0
    %923 = vmatprep.subr.mxu0 0.0
    %924 = vmatpush1.msra.mxu0 0.0
    %925 = vmatprep.subr.mxu0 0.0
    %926 = vmatpush1.msra.mxu0 0.0
    %927 = vmatprep.subr.mxu0 0.0
    %928 = vmatpush1.msra.mxu0 0.0
    %929 = vmatprep.mubr.f32.mxu0 0.0
    %930 = vmatmul.mubr.f32.gmra.mrb[0].mxu0 %v863
    %v931 = vpop.f32.mrb[0].mxu0
    %v932 = vadd.f32 0.0, %v931
    %v933 = vpop.f32.mrb[0].mxu0
    %934 = vdwg.mxu0
    %v935 = vadd.f32 %v859, %v932
    %v936 = vmul.f32 %v935, 0.5
    %v937 = vtanh.pop %v936
    %v938 = vmul.f32 %v937, 0.5
    %v939 = vadd.f32 %v938, 0.5
    %v940 = vadd.f32 %v932, %v501
    %942 = vrot.lane.b32.xlu0 %v940, 64
    %v943 = vpop.permute.xlu0 %942
    %v945 = vmul.f32 %v939, %v943
    %947 = vrot.lane.b32.xlu0 %v945, 64
    %v948 = vpop.permute.xlu0 %947
    %v950 = vadd.f32 %v859, %v948
    %v951 = vtanh.pop %v950
    %v952 = vsub.f32 %v745, %v951
    %954 = vrot.lane.b32.xlu0 %v952, 96
    %v955 = vpop.permute.xlu0 %954
    %v957 = vmul.f32 %v939, %v955
    %959 = vrot.lane.b32.xlu0 %v957, 32
    %v960 = vpop.permute.xlu0 %959
    %v962 = vadd.f32 %v951, %v960
    %v964 = vrot.slane %v855, 2
    %v966 = vadd.f32 %v295, %v964
    %v967 = vmul.f32 %v966, 0.5
    %v968 = vtanh.pop %v967
    %v969 = vmul.f32 %v968, 0.5
    %v970 = vadd.f32 %v969, 0.5
    %v971 = vadd.f32 %v855, %v535
    %v973 = vrot.slane %v971, 2
    %974 = vrot.lane.b32.xlu0 %v973, 64
    %v975 = vpop.permute.xlu0 %974
    %v977 = vmul.f32 %v970, %v975
    %979 = vrot.lane.b32.xlu0 %v977, 64
    %v980 = vpop.permute.xlu0 %979
    %v982 = vadd.f32 %v295, %v980
    %v983 = vtanh.pop %v982
    %v985 = vrot.slane %v983, 2
    %v987 = vsub.f32 %v781, %v985
    %v989 = vrot.slane %v987, 6
    %990 = vrot.lane.b32.xlu0 %v989, 96
    %v991 = vpop.permute.xlu0 %990
    %v993 = vmul.f32 %v970, %v991
    %995 = vrot.lane.b32.xlu0 %v993, 32
    %v996 = vpop.permute.xlu0 %995
    %v998 = vadd.f32 %v983, %v996
    %v1000 = vrot.slane %v998, 6
    %1001 = vrot.lane.b32.xlu0 %v1000, 64
    %v1002 = vpop.permute.xlu0 %1001
    %v1003 = vsel %vm336, %v1002, 0
    %1005 = vmatprep.subr.mxu0 %v196
    %1006 = vmatpush1.msra.mxu0 %v195
    %1007 = vmatprep.subr.mxu0 %v198
    %1008 = vmatpush1.msra.mxu0 %v197
    %1009 = vmatprep.subr.mxu0 %v200
    %1010 = vmatpush1.msra.mxu0 %v199
    %1011 = vmatprep.subr.mxu0 %v202
    %1012 = vmatpush1.msra.mxu0 %v201
    %1013 = vmatprep.subr.mxu0 0.0
    %1014 = vmatpush1.msra.mxu0 0.0
    %1015 = vmatprep.subr.mxu0 0.0
    %1016 = vmatpush1.msra.mxu0 0.0
    %1017 = vmatprep.subr.mxu0 0.0
    %1018 = vmatpush1.msra.mxu0 0.0
    %1019 = vmatprep.subr.mxu0 0.0
    %1020 = vmatpush1.msra.mxu0 0.0
    %1021 = vmatprep.subr.mxu0 0.0
    %1022 = vmatpush1.msra.mxu0 0.0
    %1023 = vmatprep.subr.mxu0 0.0
    %1024 = vmatpush1.msra.mxu0 0.0
    %1025 = vmatprep.subr.mxu0 0.0
    %1026 = vmatpush1.msra.mxu0 0.0
    %1027 = vmatprep.subr.mxu0 0.0
    %1028 = vmatpush1.msra.mxu0 0.0
    %1029 = vmatprep.subr.mxu0 0.0
    %1030 = vmatpush1.msra.mxu0 0.0
    %1031 = vmatprep.subr.mxu0 0.0
    %1032 = vmatpush1.msra.mxu0 0.0
    %1033 = vmatprep.subr.mxu0 0.0
    %1034 = vmatpush1.msra.mxu0 0.0
    %1035 = vmatprep.subr.mxu0 0.0
    %1036 = vmatpush1.msra.mxu0 0.0
    %1037 = vmatprep.subr.mxu0 0.0
    %1038 = vmatpush1.msra.mxu0 0.0
    %1039 = vmatprep.subr.mxu0 0.0
    %1040 = vmatpush1.msra.mxu0 0.0
    %1041 = vmatprep.subr.mxu0 0.0
    %1042 = vmatpush1.msra.mxu0 0.0
    %1043 = vmatprep.subr.mxu0 0.0
    %1044 = vmatpush1.msra.mxu0 0.0
    %1045 = vmatprep.subr.mxu0 0.0
    %1046 = vmatpush1.msra.mxu0 0.0
    %1047 = vmatprep.subr.mxu0 0.0
    %1048 = vmatpush1.msra.mxu0 0.0
    %1049 = vmatprep.subr.mxu0 0.0
    %1050 = vmatpush1.msra.mxu0 0.0
    %1051 = vmatprep.subr.mxu0 0.0
    %1052 = vmatpush1.msra.mxu0 0.0
    %1053 = vmatprep.subr.mxu0 0.0
    %1054 = vmatpush1.msra.mxu0 0.0
    %1055 = vmatprep.subr.mxu0 0.0
    %1056 = vmatpush1.msra.mxu0 0.0
    %1057 = vmatprep.subr.mxu0 0.0
    %1058 = vmatpush1.msra.mxu0 0.0
    %1059 = vmatprep.subr.mxu0 0.0
    %1060 = vmatpush1.msra.mxu0 0.0
    %1061 = vmatprep.subr.mxu0 0.0
    %1062 = vmatpush1.msra.mxu0 0.0
    %1063 = vmatprep.subr.mxu0 0.0
    %1064 = vmatpush1.msra.mxu0 0.0
    %1065 = vmatprep.subr.mxu0 0.0
    %1066 = vmatpush1.msra.mxu0 0.0
    %1067 = vmatprep.subr.mxu0 0.0
    %1068 = vmatpush1.msra.mxu0 0.0
    %1069 = vmatprep.mubr.f32.mxu0 0.0
    %1070 = vmatmul.mubr.f32.gmra.mrb[0].mxu0 %v1003
    %v1071 = vpop.f32.mrb[0].mxu0
    %v1072 = vadd.f32 0.0, %v1071
    %v1073 = vpop.f32.mrb[0].mxu0
    %v1074 = vadd.f32 0.0, %v1073
    %1075 = vdwg.mxu0
    %v1076 = vadd.f32 %v1074, %v414
    %1078 = vrot.lane.b32.xlu0 %v962, 64
    %v1079 = vpop.permute.xlu0 %1078
    %v1080 = vsel %vm336, %v1079, 0
    %1082 = vmatprep.subr.mxu0 0.0
    %1083 = vmatpush1.msra.mxu0 %v203
    %1084 = vmatprep.subr.mxu0 0.0
    %1085 = vmatpush1.msra.mxu0 %v204
    %1086 = vmatprep.subr.mxu0 0.0
    %1087 = vmatpush1.msra.mxu0 %v205
    %1088 = vmatprep.subr.mxu0 0.0
    %1089 = vmatpush1.msra.mxu0 %v206
    %1090 = vmatprep.subr.mxu0 0.0
    %1091 = vmatpush1.msra.mxu0 0.0
    %1092 = vmatprep.subr.mxu0 0.0
    %1093 = vmatpush1.msra.mxu0 0.0
    %1094 = vmatprep.subr.mxu0 0.0
    %1095 = vmatpush1.msra.mxu0 0.0
    %1096 = vmatprep.subr.mxu0 0.0
    %1097 = vmatpush1.msra.mxu0 0.0
    %1098 = vmatprep.subr.mxu0 0.0
    %1099 = vmatpush1.msra.mxu0 0.0
    %1100 = vmatprep.subr.mxu0 0.0
    %1101 = vmatpush1.msra.mxu0 0.0
    %1102 = vmatprep.subr.mxu0 0.0
    %1103 = vmatpush1.msra.mxu0 0.0
    %1104 = vmatprep.subr.mxu0 0.0
    %1105 = vmatpush1.msra.mxu0 0.0
    %1106 = vmatprep.subr.mxu0 0.0
    %1107 = vmatpush1.msra.mxu0 0.0
    %1108 = vmatprep.subr.mxu0 0.0
    %1109 = vmatpush1.msra.mxu0 0.0
    %1110 = vmatprep.subr.mxu0 0.0
    %1111 = vmatpush1.msra.mxu0 0.0
    %1112 = vmatprep.subr.mxu0 0.0
    %1113 = vmatpush1.msra.mxu0 0.0
    %1114 = vmatprep.subr.mxu0 0.0
    %1115 = vmatpush1.msra.mxu0 0.0
    %1116 = vmatprep.subr.mxu0 0.0
    %1117 = vmatpush1.msra.mxu0 0.0
    %1118 = vmatprep.subr.mxu0 0.0
    %1119 = vmatpush1.msra.mxu0 0.0
    %1120 = vmatprep.subr.mxu0 0.0
    %1121 = vmatpush1.msra.mxu0 0.0
    %1122 = vmatprep.subr.mxu0 0.0
    %1123 = vmatpush1.msra.mxu0 0.0
    %1124 = vmatprep.subr.mxu0 0.0
    %1125 = vmatpush1.msra.mxu0 0.0
    %1126 = vmatprep.subr.mxu0 0.0
    %1127 = vmatpush1.msra.mxu0 0.0
    %1128 = vmatprep.subr.mxu0 0.0
    %1129 = vmatpush1.msra.mxu0 0.0
    %1130 = vmatprep.subr.mxu0 0.0
    %1131 = vmatpush1.msra.mxu0 0.0
    %1132 = vmatprep.subr.mxu0 0.0
    %1133 = vmatpush1.msra.mxu0 0.0
    %1134 = vmatprep.subr.mxu0 0.0
    %1135 = vmatpush1.msra.mxu0 0.0
    %1136 = vmatprep.subr.mxu0 0.0
    %1137 = vmatpush1.msra.mxu0 0.0
    %1138 = vmatprep.subr.mxu0 0.0
    %1139 = vmatpush1.msra.mxu0 0.0
    %1140 = vmatprep.subr.mxu0 0.0
    %1141 = vmatpush1.msra.mxu0 0.0
    %1142 = vmatprep.subr.mxu0 0.0
    %1143 = vmatpush1.msra.mxu0 0.0
    %1144 = vmatprep.subr.mxu0 0.0
    %1145 = vmatpush1.msra.mxu0 0.0
    %1146 = vmatprep.mubr.f32.mxu0 0.0
    %1147 = vmatmul.mubr.f32.gmra.mrb[0].mxu0 %v1080
    %v1148 = vpop.f32.mrb[0].mxu0
    %v1149 = vadd.f32 0.0, %v1148
    %v1150 = vpop.f32.mrb[0].mxu0
    %1151 = vdwg.mxu0
    %v1152 = vadd.f32 %v1076, %v1149
    %v1153 = vmul.f32 %v1152, 0.5
    %v1154 = vtanh.pop %v1153
    %v1155 = vmul.f32 %v1154, 0.5
    %v1156 = vadd.f32 %v1155, 0.5
    %v1157 = vadd.f32 %v1149, %v501
    %1159 = vrot.lane.b32.xlu0 %v1157, 64
    %v1160 = vpop.permute.xlu0 %1159
    %v1162 = vmul.f32 %v1156, %v1160
    %1164 = vrot.lane.b32.xlu0 %v1162, 64
    %v1165 = vpop.permute.xlu0 %1164
    %v1167 = vadd.f32 %v1076, %v1165
    %v1168 = vtanh.pop %v1167
    %v1169 = vsub.f32 %v962, %v1168
    %1171 = vrot.lane.b32.xlu0 %v1169, 96
    %v1172 = vpop.permute.xlu0 %1171
    %v1174 = vmul.f32 %v1156, %v1172
    %1176 = vrot.lane.b32.xlu0 %v1174, 32
    %v1177 = vpop.permute.xlu0 %1176
    %v1179 = vadd.f32 %v1168, %v1177
    %v1180 = vadd.f32 %v300, %v1072
    %v1181 = vmul.f32 %v1180, 0.5
    %v1182 = vtanh.pop %v1181
    %v1183 = vmul.f32 %v1182, 0.5
    %v1184 = vadd.f32 %v1183, 0.5
    %v1185 = vadd.f32 %v1072, %v535
    %1187 = vrot.lane.b32.xlu0 %v1185, 64
    %v1188 = vpop.permute.xlu0 %1187
    %v1190 = vmul.f32 %v1184, %v1188
    %1192 = vrot.lane.b32.xlu0 %v1190, 64
    %v1193 = vpop.permute.xlu0 %1192
    %v1195 = vadd.f32 %v300, %v1193
    %v1196 = vtanh.pop %v1195
    %v1198 = vrot.slane %v1196, 2
    %v1200 = vsub.f32 %v998, %v1198
    %v1202 = vrot.slane %v1200, 6
    %1203 = vrot.lane.b32.xlu0 %v1202, 96
    %v1204 = vpop.permute.xlu0 %1203
    %v1206 = vmul.f32 %v1184, %v1204
    %1208 = vrot.lane.b32.xlu0 %v1206, 32
    %v1209 = vpop.permute.xlu0 %1208
    %v1211 = vadd.f32 %v1196, %v1209
    %1213 = vrot.lane.b32.xlu0 %v1211, 64
    %v1214 = vpop.permute.xlu0 %1213
    %v1215 = vsel %vm336, %v1214, 0
    %1217 = vmatprep.subr.mxu0 %v196
    %1218 = vmatpush1.msra.mxu0 %v195
    %1219 = vmatprep.subr.mxu0 %v198
    %1220 = vmatpush1.msra.mxu0 %v197
    %1221 = vmatprep.subr.mxu0 %v200
    %1222 = vmatpush1.msra.mxu0 %v199
    %1223 = vmatprep.subr.mxu0 %v202
    %1224 = vmatpush1.msra.mxu0 %v201
    %1225 = vmatprep.subr.mxu0 0.0
    %1226 = vmatpush1.msra.mxu0 0.0
    %1227 = vmatprep.subr.mxu0 0.0
    %1228 = vmatpush1.msra.mxu0 0.0
    %1229 = vmatprep.subr.mxu0 0.0
    %1230 = vmatpush1.msra.mxu0 0.0
    %1231 = vmatprep.subr.mxu0 0.0
    %1232 = vmatpush1.msra.mxu0 0.0
    %1233 = vmatprep.subr.mxu0 0.0
    %1234 = vmatpush1.msra.mxu0 0.0
    %1235 = vmatprep.subr.mxu0 0.0
    %1236 = vmatpush1.msra.mxu0 0.0
    %1237 = vmatprep.subr.mxu0 0.0
    %1238 = vmatpush1.msra.mxu0 0.0
    %1239 = vmatprep.subr.mxu0 0.0
    %1240 = vmatpush1.msra.mxu0 0.0
    %1241 = vmatprep.subr.mxu0 0.0
    %1242 = vmatpush1.msra.mxu0 0.0
    %1243 = vmatprep.subr.mxu0 0.0
    %1244 = vmatpush1.msra.mxu0 0.0
    %1245 = vmatprep.subr.mxu0 0.0
    %1246 = vmatpush1.msra.mxu0 0.0
    %1247 = vmatprep.subr.mxu0 0.0
    %1248 = vmatpush1.msra.mxu0 0.0
    %1249 = vmatprep.subr.mxu0 0.0
    %1250 = vmatpush1.msra.mxu0 0.0
    %1251 = vmatprep.subr.mxu0 0.0
    %1252 = vmatpush1.msra.mxu0 0.0
    %1253 = vmatprep.subr.mxu0 0.0
    %1254 = vmatpush1.msra.mxu0 0.0
    %1255 = vmatprep.subr.mxu0 0.0
    %1256 = vmatpush1.msra.mxu0 0.0
    %1257 = vmatprep.subr.mxu0 0.0
    %1258 = vmatpush1.msra.mxu0 0.0
    %1259 = vmatprep.subr.mxu0 0.0
    %1260 = vmatpush1.msra.mxu0 0.0
    %1261 = vmatprep.subr.mxu0 0.0
    %1262 = vmatpush1.msra.mxu0 0.0
    %1263 = vmatprep.subr.mxu0 0.0
    %1264 = vmatpush1.msra.mxu0 0.0
    %1265 = vmatprep.subr.mxu0 0.0
    %1266 = vmatpush1.msra.mxu0 0.0
    %1267 = vmatprep.subr.mxu0 0.0
    %1268 = vmatpush1.msra.mxu0 0.0
    %1269 = vmatprep.subr.mxu0 0.0
    %1270 = vmatpush1.msra.mxu0 0.0
    %1271 = vmatprep.subr.mxu0 0.0
    %1272 = vmatpush1.msra.mxu0 0.0
    %1273 = vmatprep.subr.mxu0 0.0
    %1274 = vmatpush1.msra.mxu0 0.0
    %1275 = vmatprep.subr.mxu0 0.0
    %1276 = vmatpush1.msra.mxu0 0.0
    %1277 = vmatprep.subr.mxu0 0.0
    %1278 = vmatpush1.msra.mxu0 0.0
    %1279 = vmatprep.subr.mxu0 0.0
    %1280 = vmatpush1.msra.mxu0 0.0
    %1281 = vmatprep.mubr.f32.mxu0 0.0
    %1282 = vmatmul.mubr.f32.gmra.mrb[0].mxu0 %v1215
    %v1283 = vpop.f32.mrb[0].mxu0
    %v1284 = vadd.f32 0.0, %v1283
    %v1285 = vpop.f32.mrb[0].mxu0
    %v1286 = vadd.f32 0.0, %v1285
    %1287 = vdwg.mxu0
    %v1288 = vadd.f32 %v1286, %v414
    %1290 = vrot.lane.b32.xlu0 %v1179, 64
    %v1291 = vpop.permute.xlu0 %1290
    %v1292 = vsel %vm336, %v1291, 0
    %1294 = vmatprep.subr.mxu0 0.0
    %1295 = vmatpush1.msra.mxu0 %v203
    %1296 = vmatprep.subr.mxu0 0.0
    %1297 = vmatpush1.msra.mxu0 %v204
    %1298 = vmatprep.subr.mxu0 0.0
    %1299 = vmatpush1.msra.mxu0 %v205
    %1300 = vmatprep.subr.mxu0 0.0
    %1301 = vmatpush1.msra.mxu0 %v206
    %1302 = vmatprep.subr.mxu0 0.0
    %1303 = vmatpush1.msra.mxu0 0.0
    %1304 = vmatprep.subr.mxu0 0.0
    %1305 = vmatpush1.msra.mxu0 0.0
    %1306 = vmatprep.subr.mxu0 0.0
    %1307 = vmatpush1.msra.mxu0 0.0
    %1308 = vmatprep.subr.mxu0 0.0
    %1309 = vmatpush1.msra.mxu0 0.0
    %1310 = vmatprep.subr.mxu0 0.0
    %1311 = vmatpush1.msra.mxu0 0.0
    %1312 = vmatprep.subr.mxu0 0.0
    %1313 = vmatpush1.msra.mxu0 0.0
    %1314 = vmatprep.subr.mxu0 0.0
    %1315 = vmatpush1.msra.mxu0 0.0
    %1316 = vmatprep.subr.mxu0 0.0
    %1317 = vmatpush1.msra.mxu0 0.0
    %1318 = vmatprep.subr.mxu0 0.0
    %1319 = vmatpush1.msra.mxu0 0.0
    %1320 = vmatprep.subr.mxu0 0.0
    %1321 = vmatpush1.msra.mxu0 0.0
    %1322 = vmatprep.subr.mxu0 0.0
    %1323 = vmatpush1.msra.mxu0 0.0
    %1324 = vmatprep.subr.mxu0 0.0
    %1325 = vmatpush1.msra.mxu0 0.0
    %1326 = vmatprep.subr.mxu0 0.0
    %1327 = vmatpush1.msra.mxu0 0.0
    %1328 = vmatprep.subr.mxu0 0.0
    %1329 = vmatpush1.msra.mxu0 0.0
    %1330 = vmatprep.subr.mxu0 0.0
    %1331 = vmatpush1.msra.mxu0 0.0
    %1332 = vmatprep.subr.mxu0 0.0
    %1333 = vmatpush1.msra.mxu0 0.0
    %1334 = vmatprep.subr.mxu0 0.0
    %1335 = vmatpush1.msra.mxu0 0.0
    %1336 = vmatprep.subr.mxu0 0.0
    %1337 = vmatpush1.msra.mxu0 0.0
    %1338 = vmatprep.subr.mxu0 0.0
    %1339 = vmatpush1.msra.mxu0 0.0
    %1340 = vmatprep.subr.mxu0 0.0
    %1341 = vmatpush1.msra.mxu0 0.0
    %1342 = vmatprep.subr.mxu0 0.0
    %1343 = vmatpush1.msra.mxu0 0.0
    %1344 = vmatprep.subr.mxu0 0.0
    %1345 = vmatpush1.msra.mxu0 0.0
    %1346 = vmatprep.subr.mxu0 0.0
    %1347 = vmatpush1.msra.mxu0 0.0
    %1348 = vmatprep.subr.mxu0 0.0
    %1349 = vmatpush1.msra.mxu0 0.0
    %1350 = vmatprep.subr.mxu0 0.0
    %1351 = vmatpush1.msra.mxu0 0.0
    %1352 = vmatprep.subr.mxu0 0.0
    %1353 = vmatpush1.msra.mxu0 0.0
    %1354 = vmatprep.subr.mxu0 0.0
    %1355 = vmatpush1.msra.mxu0 0.0
    %1356 = vmatprep.subr.mxu0 0.0
    %1357 = vmatpush1.msra.mxu0 0.0
    %1358 = vmatprep.mubr.f32.mxu0 0.0
    %1359 = vmatmul.mubr.f32.gmra.mrb[0].mxu0 %v1292
    %v1360 = vpop.f32.mrb[0].mxu0
    %v1361 = vadd.f32 0.0, %v1360
    %v1362 = vpop.f32.mrb[0].mxu0
    %1363 = vdwg.mxu0
    %v1364 = vadd.f32 %v1288, %v1361
    %v1365 = vmul.f32 %v1364, 0.5
    %v1366 = vtanh.pop %v1365
    %v1367 = vmul.f32 %v1366, 0.5
    %v1368 = vadd.f32 %v1367, 0.5
    %v1369 = vadd.f32 %v1361, %v501
    %1371 = vrot.lane.b32.xlu0 %v1369, 64
    %v1372 = vpop.permute.xlu0 %1371
    %v1374 = vmul.f32 %v1368, %v1372
    %1376 = vrot.lane.b32.xlu0 %v1374, 64
    %v1377 = vpop.permute.xlu0 %1376
    %v1379 = vadd.f32 %v1288, %v1377
    %v1380 = vtanh.pop %v1379
    %v1381 = vsub.f32 %v1179, %v1380
    %1383 = vrot.lane.b32.xlu0 %v1381, 96
    %v1384 = vpop.permute.xlu0 %1383
    %v1386 = vmul.f32 %v1368, %v1384
    %1388 = vrot.lane.b32.xlu0 %v1386, 32
    %v1389 = vpop.permute.xlu0 %1388
    %v1391 = vadd.f32 %v1380, %v1389
    %v1393 = vrot.slane %v1284, 6
    %v1395 = vadd.f32 %v300, %v1393
    %v1396 = vmul.f32 %v1395, 0.5
    %v1397 = vtanh.pop %v1396
    %v1398 = vmul.f32 %v1397, 0.5
    %v1399 = vadd.f32 %v1398, 0.5
    %v1400 = vadd.f32 %v1284, %v535
    %v1402 = vrot.slane %v1400, 6
    %1403 = vrot.lane.b32.xlu0 %v1402, 64
    %v1404 = vpop.permute.xlu0 %1403
    %v1406 = vmul.f32 %v1399, %v1404
    %1408 = vrot.lane.b32.xlu0 %v1406, 64
    %v1409 = vpop.permute.xlu0 %1408
    %v1411 = vadd.f32 %v300, %v1409
    %v1412 = vtanh.pop %v1411
    %v1414 = vrot.slane %v1412, 2
    %v1416 = vsub.f32 %v1211, %v1414
    %v1418 = vrot.slane %v1416, 6
    %1419 = vrot.lane.b32.xlu0 %v1418, 96
    %v1420 = vpop.permute.xlu0 %1419
    %v1422 = vmul.f32 %v1399, %v1420
    %1424 = vrot.lane.b32.xlu0 %v1422, 32
    %v1425 = vpop.permute.xlu0 %1424
    %v1427 = vadd.f32 %v1412, %v1425
    %v1429 = vrot.slane %v1427, 2
    %1430 = vrot.lane.b32.xlu0 %v1429, 64
    %v1431 = vpop.permute.xlu0 %1430
    %v1432 = vsel %vm336, %v1431, 0
    %1434 = vmatprep.subr.mxu0 %v196
    %1435 = vmatpush1.msra.mxu0 %v195
    %1436 = vmatprep.subr.mxu0 %v198
    %1437 = vmatpush1.msra.mxu0 %v197
    %1438 = vmatprep.subr.mxu0 %v200
    %1439 = vmatpush1.msra.mxu0 %v199
    %1440 = vmatprep.subr.mxu0 %v202
    %1441 = vmatpush1.msra.mxu0 %v201
    %1442 = vmatprep.subr.mxu0 0.0
    %1443 = vmatpush1.msra.mxu0 0.0
    %1444 = vmatprep.subr.mxu0 0.0
    %1445 = vmatpush1.msra.mxu0 0.0
    %1446 = vmatprep.subr.mxu0 0.0
    %1447 = vmatpush1.msra.mxu0 0.0
    %1448 = vmatprep.subr.mxu0 0.0
    %1449 = vmatpush1.msra.mxu0 0.0
    %1450 = vmatprep.subr.mxu0 0.0
    %1451 = vmatpush1.msra.mxu0 0.0
    %1452 = vmatprep.subr.mxu0 0.0
    %1453 = vmatpush1.msra.mxu0 0.0
    %1454 = vmatprep.subr.mxu0 0.0
    %1455 = vmatpush1.msra.mxu0 0.0
    %1456 = vmatprep.subr.mxu0 0.0
    %1457 = vmatpush1.msra.mxu0 0.0
    %1458 = vmatprep.subr.mxu0 0.0
    %1459 = vmatpush1.msra.mxu0 0.0
    %1460 = vmatprep.subr.mxu0 0.0
    %1461 = vmatpush1.msra.mxu0 0.0
    %1462 = vmatprep.subr.mxu0 0.0
    %1463 = vmatpush1.msra.mxu0 0.0
    %1464 = vmatprep.subr.mxu0 0.0
    %1465 = vmatpush1.msra.mxu0 0.0
    %1466 = vmatprep.subr.mxu0 0.0
    %1467 = vmatpush1.msra.mxu0 0.0
    %1468 = vmatprep.subr.mxu0 0.0
    %1469 = vmatpush1.msra.mxu0 0.0
    %1470 = vmatprep.subr.mxu0 0.0
    %1471 = vmatpush1.msra.mxu0 0.0
    %1472 = vmatprep.subr.mxu0 0.0
    %1473 = vmatpush1.msra.mxu0 0.0
    %1474 = vmatprep.subr.mxu0 0.0
    %1475 = vmatpush1.msra.mxu0 0.0
    %1476 = vmatprep.subr.mxu0 0.0
    %1477 = vmatpush1.msra.mxu0 0.0
    %1478 = vmatprep.subr.mxu0 0.0
    %1479 = vmatpush1.msra.mxu0 0.0
    %1480 = vmatprep.subr.mxu0 0.0
    %1481 = vmatpush1.msra.mxu0 0.0
    %1482 = vmatprep.subr.mxu0 0.0
    %1483 = vmatpush1.msra.mxu0 0.0
    %1484 = vmatprep.subr.mxu0 0.0
    %1485 = vmatpush1.msra.mxu0 0.0
    %1486 = vmatprep.subr.mxu0 0.0
    %1487 = vmatpush1.msra.mxu0 0.0
    %1488 = vmatprep.subr.mxu0 0.0
    %1489 = vmatpush1.msra.mxu0 0.0
    %1490 = vmatprep.subr.mxu0 0.0
    %1491 = vmatpush1.msra.mxu0 0.0
    %1492 = vmatprep.subr.mxu0 0.0
    %1493 = vmatpush1.msra.mxu0 0.0
    %1494 = vmatprep.subr.mxu0 0.0
    %1495 = vmatpush1.msra.mxu0 0.0
    %1496 = vmatprep.subr.mxu0 0.0
    %1497 = vmatpush1.msra.mxu0 0.0
    %1498 = vmatprep.mubr.f32.mxu0 0.0
    %1499 = vmatmul.mubr.f32.gmra.mrb[0].mxu0 %v1432
    %v1500 = vpop.f32.mrb[0].mxu0
    %v1501 = vadd.f32 0.0, %v1500
    %v1502 = vpop.f32.mrb[0].mxu0
    %v1503 = vadd.f32 0.0, %v1502
    %1504 = vdwg.mxu0
    %v1505 = vadd.f32 %v1503, %v414
    %1507 = vrot.lane.b32.xlu0 %v1391, 64
    %v1508 = vpop.permute.xlu0 %1507
    %v1509 = vsel %vm336, %v1508, 0
    %1511 = vmatprep.subr.mxu0 0.0
    %1512 = vmatpush1.msra.mxu0 %v203
    %1513 = vmatprep.subr.mxu0 0.0
    %1514 = vmatpush1.msra.mxu0 %v204
    %1515 = vmatprep.subr.mxu0 0.0
    %1516 = vmatpush1.msra.mxu0 %v205
    %1517 = vmatprep.subr.mxu0 0.0
    %1518 = vmatpush1.msra.mxu0 %v206
    %1519 = vmatprep.subr.mxu0 0.0
    %1520 = vmatpush1.msra.mxu0 0.0
    %1521 = vmatprep.subr.mxu0 0.0
    %1522 = vmatpush1.msra.mxu0 0.0
    %1523 = vmatprep.subr.mxu0 0.0
    %1524 = vmatpush1.msra.mxu0 0.0
    %1525 = vmatprep.subr.mxu0 0.0
    %1526 = vmatpush1.msra.mxu0 0.0
    %1527 = vmatprep.subr.mxu0 0.0
    %1528 = vmatpush1.msra.mxu0 0.0
    %1529 = vmatprep.subr.mxu0 0.0
    %1530 = vmatpush1.msra.mxu0 0.0
    %1531 = vmatprep.subr.mxu0 0.0
    %1532 = vmatpush1.msra.mxu0 0.0
    %1533 = vmatprep.subr.mxu0 0.0
    %1534 = vmatpush1.msra.mxu0 0.0
    %1535 = vmatprep.subr.mxu0 0.0
    %1536 = vmatpush1.msra.mxu0 0.0
    %1537 = vmatprep.subr.mxu0 0.0
    %1538 = vmatpush1.msra.mxu0 0.0
    %1539 = vmatprep.subr.mxu0 0.0
    %1540 = vmatpush1.msra.mxu0 0.0
    %1541 = vmatprep.subr.mxu0 0.0
    %1542 = vmatpush1.msra.mxu0 0.0
    %1543 = vmatprep.subr.mxu0 0.0
    %1544 = vmatpush1.msra.mxu0 0.0
    %1545 = vmatprep.subr.mxu0 0.0
    %1546 = vmatpush1.msra.mxu0 0.0
    %1547 = vmatprep.subr.mxu0 0.0
    %1548 = vmatpush1.msra.mxu0 0.0
    %1549 = vmatprep.subr.mxu0 0.0
    %1550 = vmatpush1.msra.mxu0 0.0
    %1551 = vmatprep.subr.mxu0 0.0
    %1552 = vmatpush1.msra.mxu0 0.0
    %1553 = vmatprep.subr.mxu0 0.0
    %1554 = vmatpush1.msra.mxu0 0.0
    %1555 = vmatprep.subr.mxu0 0.0
    %1556 = vmatpush1.msra.mxu0 0.0
    %1557 = vmatprep.subr.mxu0 0.0
    %1558 = vmatpush1.msra.mxu0 0.0
    %1559 = vmatprep.subr.mxu0 0.0
    %1560 = vmatpush1.msra.mxu0 0.0
    %1561 = vmatprep.subr.mxu0 0.0
    %1562 = vmatpush1.msra.mxu0 0.0
    %1563 = vmatprep.subr.mxu0 0.0
    %1564 = vmatpush1.msra.mxu0 0.0
    %1565 = vmatprep.subr.mxu0 0.0
    %1566 = vmatpush1.msra.mxu0 0.0
    %1567 = vmatprep.subr.mxu0 0.0
    %1568 = vmatpush1.msra.mxu0 0.0
    %1569 = vmatprep.subr.mxu0 0.0
    %1570 = vmatpush1.msra.mxu0 0.0
    %1571 = vmatprep.subr.mxu0 0.0
    %1572 = vmatpush1.msra.mxu0 0.0
    %1573 = vmatprep.subr.mxu0 0.0
    %1574 = vmatpush1.msra.mxu0 0.0
    %1575 = vmatprep.mubr.f32.mxu0 0.0
    %1576 = vmatmul.mubr.f32.gmra.mrb[0].mxu0 %v1509
    %v1577 = vpop.f32.mrb[0].mxu0
    %v1578 = vadd.f32 0.0, %v1577
    %v1579 = vpop.f32.mrb[0].mxu0
    %1580 = vdwg.mxu0
    %v1581 = vadd.f32 %v1505, %v1578
    %v1582 = vmul.f32 %v1581, 0.5
    %v1583 = vtanh.pop %v1582
    %v1584 = vmul.f32 %v1583, 0.5
    %v1585 = vadd.f32 %v1584, 0.5
    %v1586 = vadd.f32 %v1578, %v501
    %1588 = vrot.lane.b32.xlu0 %v1586, 64
    %v1589 = vpop.permute.xlu0 %1588
    %v1591 = vmul.f32 %v1585, %v1589
    %1593 = vrot.lane.b32.xlu0 %v1591, 64
    %v1594 = vpop.permute.xlu0 %1593
    %v1596 = vadd.f32 %v1505, %v1594
    %v1597 = vtanh.pop %v1596
    %v1598 = vsub.f32 %v1391, %v1597
    %1600 = vrot.lane.b32.xlu0 %v1598, 96
    %v1601 = vpop.permute.xlu0 %1600
    %v1603 = vmul.f32 %v1585, %v1601
    %1605 = vrot.lane.b32.xlu0 %v1603, 32
    %v1606 = vpop.permute.xlu0 %1605
    %v1608 = vadd.f32 %v1597, %v1606
    %v1610 = vrot.slane %v1501, 4
    %v1612 = vadd.f32 %v300, %v1610
    %v1613 = vmul.f32 %v1612, 0.5
    %v1614 = vtanh.pop %v1613
    %v1615 = vmul.f32 %v1614, 0.5
    %v1616 = vadd.f32 %v1615, 0.5
    %v1617 = vadd.f32 %v1501, %v535
    %v1619 = vrot.slane %v1617, 4
    %1620 = vrot.lane.b32.xlu0 %v1619, 64
    %v1621 = vpop.permute.xlu0 %1620
    %v1623 = vmul.f32 %v1616, %v1621
    %1625 = vrot.lane.b32.xlu0 %v1623, 64
    %v1626 = vpop.permute.xlu0 %1625
    %v1628 = vadd.f32 %v300, %v1626
    %v1629 = vtanh.pop %v1628
    %v1631 = vrot.slane %v1629, 2
    %v1633 = vsub.f32 %v1427, %v1631
    %v1635 = vrot.slane %v1633, 6
    %1636 = vrot.lane.b32.xlu0 %v1635, 96
    %v1637 = vpop.permute.xlu0 %1636
    %v1639 = vmul.f32 %v1616, %v1637
    %1641 = vrot.lane.b32.xlu0 %v1639, 32
    %v1642 = vpop.permute.xlu0 %1641
    %v1644 = vadd.f32 %v1629, %v1642
    %v1646 = vrot.slane %v1644, 4
    %1647 = vrot.lane.b32.xlu0 %v1646, 64
    %v1648 = vpop.permute.xlu0 %1647
    %v1649 = vsel %vm336, %v1648, 0
    %1651 = vmatprep.subr.mxu0 %v196
    %1652 = vmatpush1.msra.mxu0 %v195
    %1653 = vmatprep.subr.mxu0 %v198
    %1654 = vmatpush1.msra.mxu0 %v197
    %1655 = vmatprep.subr.mxu0 %v200
    %1656 = vmatpush1.msra.mxu0 %v199
    %1657 = vmatprep.subr.mxu0 %v202
    %1658 = vmatpush1.msra.mxu0 %v201
    %1659 = vmatprep.subr.mxu0 0.0
    %1660 = vmatpush1.msra.mxu0 0.0
    %1661 = vmatprep.subr.mxu0 0.0
    %1662 = vmatpush1.msra.mxu0 0.0
    %1663 = vmatprep.subr.mxu0 0.0
    %1664 = vmatpush1.msra.mxu0 0.0
    %1665 = vmatprep.subr.mxu0 0.0
    %1666 = vmatpush1.msra.mxu0 0.0
    %1667 = vmatprep.subr.mxu0 0.0
    %1668 = vmatpush1.msra.mxu0 0.0
    %1669 = vmatprep.subr.mxu0 0.0
    %1670 = vmatpush1.msra.mxu0 0.0
    %1671 = vmatprep.subr.mxu0 0.0
    %1672 = vmatpush1.msra.mxu0 0.0
    %1673 = vmatprep.subr.mxu0 0.0
    %1674 = vmatpush1.msra.mxu0 0.0
    %1675 = vmatprep.subr.mxu0 0.0
    %1676 = vmatpush1.msra.mxu0 0.0
    %1677 = vmatprep.subr.mxu0 0.0
    %1678 = vmatpush1.msra.mxu0 0.0
    %1679 = vmatprep.subr.mxu0 0.0
    %1680 = vmatpush1.msra.mxu0 0.0
    %1681 = vmatprep.subr.mxu0 0.0
    %1682 = vmatpush1.msra.mxu0 0.0
    %1683 = vmatprep.subr.mxu0 0.0
    %1684 = vmatpush1.msra.mxu0 0.0
    %1685 = vmatprep.subr.mxu0 0.0
    %1686 = vmatpush1.msra.mxu0 0.0
    %1687 = vmatprep.subr.mxu0 0.0
    %1688 = vmatpush1.msra.mxu0 0.0
    %1689 = vmatprep.subr.mxu0 0.0
    %1690 = vmatpush1.msra.mxu0 0.0
    %1691 = vmatprep.subr.mxu0 0.0
    %1692 = vmatpush1.msra.mxu0 0.0
    %1693 = vmatprep.subr.mxu0 0.0
    %1694 = vmatpush1.msra.mxu0 0.0
    %1695 = vmatprep.subr.mxu0 0.0
    %1696 = vmatpush1.msra.mxu0 0.0
    %1697 = vmatprep.subr.mxu0 0.0
    %1698 = vmatpush1.msra.mxu0 0.0
    %1699 = vmatprep.subr.mxu0 0.0
    %1700 = vmatpush1.msra.mxu0 0.0
    %1701 = vmatprep.subr.mxu0 0.0
    %1702 = vmatpush1.msra.mxu0 0.0
    %1703 = vmatprep.subr.mxu0 0.0
    %1704 = vmatpush1.msra.mxu0 0.0
    %1705 = vmatprep.subr.mxu0 0.0
    %1706 = vmatpush1.msra.mxu0 0.0
    %1707 = vmatprep.subr.mxu0 0.0
    %1708 = vmatpush1.msra.mxu0 0.0
    %1709 = vmatprep.subr.mxu0 0.0
    %1710 = vmatpush1.msra.mxu0 0.0
    %1711 = vmatprep.subr.mxu0 0.0
    %1712 = vmatpush1.msra.mxu0 0.0
    %1713 = vmatprep.subr.mxu0 0.0
    %1714 = vmatpush1.msra.mxu0 0.0
    %1715 = vmatprep.mubr.f32.mxu0 0.0
    %1716 = vmatmul.mubr.f32.gmra.mrb[0].mxu0 %v1649
    %v1717 = vpop.f32.mrb[0].mxu0
    %v1718 = vadd.f32 0.0, %v1717
    %v1719 = vpop.f32.mrb[0].mxu0
    %v1720 = vadd.f32 0.0, %v1719
    %1721 = vdwg.mxu0
    %v1722 = vadd.f32 %v1720, %v414
    %1724 = vrot.lane.b32.xlu0 %v1608, 64
    %v1725 = vpop.permute.xlu0 %1724
    %v1726 = vsel %vm336, %v1725, 0
    %1728 = vmatprep.subr.mxu0 0.0
    %1729 = vmatpush1.msra.mxu0 %v203
    %1730 = vmatprep.subr.mxu0 0.0
    %1731 = vmatpush1.msra.mxu0 %v204
    %1732 = vmatprep.subr.mxu0 0.0
    %1733 = vmatpush1.msra.mxu0 %v205
    %1734 = vmatprep.subr.mxu0 0.0
    %1735 = vmatpush1.msra.mxu0 %v206
    %1736 = vmatprep.subr.mxu0 0.0
    %1737 = vmatpush1.msra.mxu0 0.0
    %1738 = vmatprep.subr.mxu0 0.0
    %1739 = vmatpush1.msra.mxu0 0.0
    %1740 = vmatprep.subr.mxu0 0.0
    %1741 = vmatpush1.msra.mxu0 0.0
    %1742 = vmatprep.subr.mxu0 0.0
    %1743 = vmatpush1.msra.mxu0 0.0
    %1744 = vmatprep.subr.mxu0 0.0
    %1745 = vmatpush1.msra.mxu0 0.0
    %1746 = vmatprep.subr.mxu0 0.0
    %1747 = vmatpush1.msra.mxu0 0.0
    %1748 = vmatprep.subr.mxu0 0.0
    %1749 = vmatpush1.msra.mxu0 0.0
    %1750 = vmatprep.subr.mxu0 0.0
    %1751 = vmatpush1.msra.mxu0 0.0
    %1752 = vmatprep.subr.mxu0 0.0
    %1753 = vmatpush1.msra.mxu0 0.0
    %1754 = vmatprep.subr.mxu0 0.0
    %1755 = vmatpush1.msra.mxu0 0.0
    %1756 = vmatprep.subr.mxu0 0.0
    %1757 = vmatpush1.msra.mxu0 0.0
    %1758 = vmatprep.subr.mxu0 0.0
    %1759 = vmatpush1.msra.mxu0 0.0
    %1760 = vmatprep.subr.mxu0 0.0
    %1761 = vmatpush1.msra.mxu0 0.0
    %1762 = vmatprep.subr.mxu0 0.0
    %1763 = vmatpush1.msra.mxu0 0.0
    %1764 = vmatprep.subr.mxu0 0.0
    %1765 = vmatpush1.msra.mxu0 0.0
    %1766 = vmatprep.subr.mxu0 0.0
    %1767 = vmatpush1.msra.mxu0 0.0
    %1768 = vmatprep.subr.mxu0 0.0
    %1769 = vmatpush1.msra.mxu0 0.0
    %1770 = vmatprep.subr.mxu0 0.0
    %1771 = vmatpush1.msra.mxu0 0.0
    %1772 = vmatprep.subr.mxu0 0.0
    %1773 = vmatpush1.msra.mxu0 0.0
    %1774 = vmatprep.subr.mxu0 0.0
    %1775 = vmatpush1.msra.mxu0 0.0
    %1776 = vmatprep.subr.mxu0 0.0
    %1777 = vmatpush1.msra.mxu0 0.0
    %1778 = vmatprep.subr.mxu0 0.0
    %1779 = vmatpush1.msra.mxu0 0.0
    %1780 = vmatprep.subr.mxu0 0.0
    %1781 = vmatpush1.msra.mxu0 0.0
    %1782 = vmatprep.subr.mxu0 0.0
    %1783 = vmatpush1.msra.mxu0 0.0
    %1784 = vmatprep.subr.mxu0 0.0
    %1785 = vmatpush1.msra.mxu0 0.0
    %1786 = vmatprep.subr.mxu0 0.0
    %1787 = vmatpush1.msra.mxu0 0.0
    %1788 = vmatprep.subr.mxu0 0.0
    %1789 = vmatpush1.msra.mxu0 0.0
    %1790 = vmatprep.subr.mxu0 0.0
    %1791 = vmatpush1.msra.mxu0 0.0
    %1792 = vmatprep.mubr.f32.mxu0 0.0
    %1793 = vmatmul.mubr.f32.gmra.mrb[0].mxu0 %v1726
    %v1794 = vpop.f32.mrb[0].mxu0
    %v1795 = vadd.f32 0.0, %v1794
    %v1796 = vpop.f32.mrb[0].mxu0
    %1797 = vdwg.mxu0
    %v1798 = vadd.f32 %v1722, %v1795
    %v1799 = vmul.f32 %v1798, 0.5
    %v1800 = vtanh.pop %v1799
    %v1801 = vmul.f32 %v1800, 0.5
    %v1802 = vadd.f32 %v1801, 0.5
    %v1803 = vadd.f32 %v1795, %v501
    %1805 = vrot.lane.b32.xlu0 %v1803, 64
    %v1806 = vpop.permute.xlu0 %1805
    %v1808 = vmul.f32 %v1802, %v1806
    %1810 = vrot.lane.b32.xlu0 %v1808, 64
    %v1811 = vpop.permute.xlu0 %1810
    %v1813 = vadd.f32 %v1722, %v1811
    %v1814 = vtanh.pop %v1813
    %v1815 = vsub.f32 %v1608, %v1814
    %1817 = vrot.lane.b32.xlu0 %v1815, 96
    %v1818 = vpop.permute.xlu0 %1817
    %v1820 = vmul.f32 %v1802, %v1818
    %1822 = vrot.lane.b32.xlu0 %v1820, 32
    %v1823 = vpop.permute.xlu0 %1822
    %v1825 = vadd.f32 %v1814, %v1823
    %v1827 = vrot.slane %v1718, 2
    %v1829 = vadd.f32 %v300, %v1827
    %v1830 = vmul.f32 %v1829, 0.5
    %v1831 = vtanh.pop %v1830
    %v1832 = vmul.f32 %v1831, 0.5
    %v1833 = vadd.f32 %v1832, 0.5
    %v1834 = vadd.f32 %v1718, %v535
    %v1836 = vrot.slane %v1834, 2
    %1837 = vrot.lane.b32.xlu0 %v1836, 64
    %v1838 = vpop.permute.xlu0 %1837
    %v1840 = vmul.f32 %v1833, %v1838
    %1842 = vrot.lane.b32.xlu0 %v1840, 64
    %v1843 = vpop.permute.xlu0 %1842
    %v1845 = vadd.f32 %v300, %v1843
    %v1846 = vtanh.pop %v1845
    %v1848 = vrot.slane %v1846, 2
    %v1850 = vsub.f32 %v1644, %v1848
    %v1852 = vrot.slane %v1850, 6
    %1853 = vrot.lane.b32.xlu0 %v1852, 96
    %v1854 = vpop.permute.xlu0 %1853
    %v1856 = vmul.f32 %v1833, %v1854
    %1858 = vrot.lane.b32.xlu0 %v1856, 32
    %v1859 = vpop.permute.xlu0 %1858
    %v1861 = vadd.f32 %v1846, %v1859
    %v1863 = vrot.slane %v1861, 6
    %1864 = vrot.lane.b32.xlu0 %v1863, 64
    %v1865 = vpop.permute.xlu0 %1864
    %v1866 = vsel %vm336, %v1865, 0
    %1868 = vmatprep.subr.mxu0 %v196
    %1869 = vmatpush1.msra.mxu0 %v195
    %1870 = vmatprep.subr.mxu0 %v198
    %1871 = vmatpush1.msra.mxu0 %v197
    %1872 = vmatprep.subr.mxu0 %v200
    %1873 = vmatpush1.msra.mxu0 %v199
    %1874 = vmatprep.subr.mxu0 %v202
    %1875 = vmatpush1.msra.mxu0 %v201
    %1876 = vmatprep.subr.mxu0 0.0
    %1877 = vmatpush1.msra.mxu0 0.0
    %1878 = vmatprep.subr.mxu0 0.0
    %1879 = vmatpush1.msra.mxu0 0.0
    %1880 = vmatprep.subr.mxu0 0.0
    %1881 = vmatpush1.msra.mxu0 0.0
    %1882 = vmatprep.subr.mxu0 0.0
    %1883 = vmatpush1.msra.mxu0 0.0
    %1884 = vmatprep.subr.mxu0 0.0
    %1885 = vmatpush1.msra.mxu0 0.0
    %1886 = vmatprep.subr.mxu0 0.0
    %1887 = vmatpush1.msra.mxu0 0.0
    %1888 = vmatprep.subr.mxu0 0.0
    %1889 = vmatpush1.msra.mxu0 0.0
    %1890 = vmatprep.subr.mxu0 0.0
    %1891 = vmatpush1.msra.mxu0 0.0
    %1892 = vmatprep.subr.mxu0 0.0
    %1893 = vmatpush1.msra.mxu0 0.0
    %1894 = vmatprep.subr.mxu0 0.0
    %1895 = vmatpush1.msra.mxu0 0.0
    %1896 = vmatprep.subr.mxu0 0.0
    %1897 = vmatpush1.msra.mxu0 0.0
    %1898 = vmatprep.subr.mxu0 0.0
    %1899 = vmatpush1.msra.mxu0 0.0
    %1900 = vmatprep.subr.mxu0 0.0
    %1901 = vmatpush1.msra.mxu0 0.0
    %1902 = vmatprep.subr.mxu0 0.0
    %1903 = vmatpush1.msra.mxu0 0.0
    %1904 = vmatprep.subr.mxu0 0.0
    %1905 = vmatpush1.msra.mxu0 0.0
    %1906 = vmatprep.subr.mxu0 0.0
    %1907 = vmatpush1.msra.mxu0 0.0
    %1908 = vmatprep.subr.mxu0 0.0
    %1909 = vmatpush1.msra.mxu0 0.0
    %1910 = vmatprep.subr.mxu0 0.0
    %1911 = vmatpush1.msra.mxu0 0.0
    %1912 = vmatprep.subr.mxu0 0.0
    %1913 = vmatpush1.msra.mxu0 0.0
    %1914 = vmatprep.subr.mxu0 0.0
    %1915 = vmatpush1.msra.mxu0 0.0
    %1916 = vmatprep.subr.mxu0 0.0
    %1917 = vmatpush1.msra.mxu0 0.0
    %1918 = vmatprep.subr.mxu0 0.0
    %1919 = vmatpush1.msra.mxu0 0.0
    %1920 = vmatprep.subr.mxu0 0.0
    %1921 = vmatpush1.msra.mxu0 0.0
    %1922 = vmatprep.subr.mxu0 0.0
    %1923 = vmatpush1.msra.mxu0 0.0
    %1924 = vmatprep.subr.mxu0 0.0
    %1925 = vmatpush1.msra.mxu0 0.0
    %1926 = vmatprep.subr.mxu0 0.0
    %1927 = vmatpush1.msra.mxu0 0.0
    %1928 = vmatprep.subr.mxu0 0.0
    %1929 = vmatpush1.msra.mxu0 0.0
    %1930 = vmatprep.subr.mxu0 0.0
    %1931 = vmatpush1.msra.mxu0 0.0
    %1932 = vmatprep.mubr.f32.mxu0 0.0
    %1933 = vmatmul.mubr.f32.gmra.mrb[0].mxu0 %v1866
    %v1934 = vpop.f32.mrb[0].mxu0
    %v1935 = vpop.f32.mrb[0].mxu0
    %v1936 = vadd.f32 0.0, %v1935
    %1937 = vdwg.mxu0
    %v1938 = vadd.f32 %v1936, %v414
    %1940 = vrot.lane.b32.xlu0 %v1825, 64
    %v1941 = vpop.permute.xlu0 %1940
    %v1942 = vsel %vm336, %v1941, 0
    %1944 = vmatprep.subr.mxu0 0.0
    %1945 = vmatpush1.msra.mxu0 %v203
    %1946 = vmatprep.subr.mxu0 0.0
    %1947 = vmatpush1.msra.mxu0 %v204
    %1948 = vmatprep.subr.mxu0 0.0
    %1949 = vmatpush1.msra.mxu0 %v205
    %1950 = vmatprep.subr.mxu0 0.0
    %1951 = vmatpush1.msra.mxu0 %v206
    %1952 = vmatprep.subr.mxu0 0.0
    %1953 = vmatpush1.msra.mxu0 0.0
    %1954 = vmatprep.subr.mxu0 0.0
    %1955 = vmatpush1.msra.mxu0 0.0
    %1956 = vmatprep.subr.mxu0 0.0
    %1957 = vmatpush1.msra.mxu0 0.0
    %1958 = vmatprep.subr.mxu0 0.0
    %1959 = vmatpush1.msra.mxu0 0.0
    %1960 = vmatprep.subr.mxu0 0.0
    %1961 = vmatpush1.msra.mxu0 0.0
    %1962 = vmatprep.subr.mxu0 0.0
    %1963 = vmatpush1.msra.mxu0 0.0
    %1964 = vmatprep.subr.mxu0 0.0
    %1965 = vmatpush1.msra.mxu0 0.0
    %1966 = vmatprep.subr.mxu0 0.0
    %1967 = vmatpush1.msra.mxu0 0.0
    %1968 = vmatprep.subr.mxu0 0.0
    %1969 = vmatpush1.msra.mxu0 0.0
    %1970 = vmatprep.subr.mxu0 0.0
    %1971 = vmatpush1.msra.mxu0 0.0
    %1972 = vmatprep.subr.mxu0 0.0
    %1973 = vmatpush1.msra.mxu0 0.0
    %1974 = vmatprep.subr.mxu0 0.0
    %1975 = vmatpush1.msra.mxu0 0.0
    %1976 = vmatprep.subr.mxu0 0.0
    %1977 = vmatpush1.msra.mxu0 0.0
    %1978 = vmatprep.subr.mxu0 0.0
    %1979 = vmatpush1.msra.mxu0 0.0
    %1980 = vmatprep.subr.mxu0 0.0
    %1981 = vmatpush1.msra.mxu0 0.0
    %1982 = vmatprep.subr.mxu0 0.0
    %1983 = vmatpush1.msra.mxu0 0.0
    %1984 = vmatprep.subr.mxu0 0.0
    %1985 = vmatpush1.msra.mxu0 0.0
    %1986 = vmatprep.subr.mxu0 0.0
    %1987 = vmatpush1.msra.mxu0 0.0
    %1988 = vmatprep.subr.mxu0 0.0
    %1989 = vmatpush1.msra.mxu0 0.0
    %1990 = vmatprep.subr.mxu0 0.0
    %1991 = vmatpush1.msra.mxu0 0.0
    %1992 = vmatprep.subr.mxu0 0.0
    %1993 = vmatpush1.msra.mxu0 0.0
    %1994 = vmatprep.subr.mxu0 0.0
    %1995 = vmatpush1.msra.mxu0 0.0
    %1996 = vmatprep.subr.mxu0 0.0
    %1997 = vmatpush1.msra.mxu0 0.0
    %1998 = vmatprep.subr.mxu0 0.0
    %1999 = vmatpush1.msra.mxu0 0.0
    %2000 = vmatprep.subr.mxu0 0.0
    %2001 = vmatpush1.msra.mxu0 0.0
    %2002 = vmatprep.subr.mxu0 0.0
    %2003 = vmatpush1.msra.mxu0 0.0
    %2004 = vmatprep.subr.mxu0 0.0
    %2005 = vmatpush1.msra.mxu0 0.0
    %2006 = vmatprep.subr.mxu0 0.0
    %2007 = vmatpush1.msra.mxu0 0.0
    %2008 = vmatprep.mubr.f32.mxu0 0.0
    %2009 = vmatmul.mubr.f32.gmra.mrb[0].mxu0 %v1942
    %v2010 = vpop.f32.mrb[0].mxu0
    %v2011 = vadd.f32 0.0, %v2010
    %v2012 = vpop.f32.mrb[0].mxu0
    %2013 = vdwg.mxu0
    %v2014 = vadd.f32 %v1938, %v2011
    %v2015 = vmul.f32 %v2014, 0.5
    %v2016 = vtanh.pop %v2015
    %v2017 = vmul.f32 %v2016, 0.5
    %v2018 = vadd.f32 %v2017, 0.5
    %v2019 = vadd.f32 %v2011, %v501
    %2021 = vrot.lane.b32.xlu0 %v2019, 64
    %v2022 = vpop.permute.xlu0 %2021
    %v2024 = vmul.f32 %v2018, %v2022
    %2026 = vrot.lane.b32.xlu0 %v2024, 64
    %v2027 = vpop.permute.xlu0 %2026
    %v2029 = vadd.f32 %v1938, %v2027
    %v2030 = vtanh.pop %v2029
    %v2031 = vsub.f32 %v1825, %v2030
    %2033 = vrot.lane.b32.xlu0 %v2031, 96
    %v2034 = vpop.permute.xlu0 %2033
    %v2036 = vmul.f32 %v2018, %v2034
    %2038 = vrot.lane.b32.xlu0 %v2036, 32
    %v2039 = vpop.permute.xlu0 %2038
    %v2041 = vadd.f32 %v2030, %v2039
    %v2042 = vld [vmem:[%s9] sm:$0xff]
    %v2043 = vld [vmem:[%s9 + $0x8] sm:$0xff]
    %v2044 = vld [vmem:[%s9 + $0x10] sm:$0xff]
    %v2045 = vld [vmem:[%s9 + $0x18] sm:$0xff]
    %v2046 = vld [vmem:[%s10] sm:$0x1]
    %v2048 = vlaneseq
    %v2049 = vshrl.u32 %v2048, 7
    %v2050 = vsub.s32 0, %v2049
    %v2051 = vrot.slane %v2046, %v2050
    %2054 = vrot.lane.b32.xlu0 %v2041, 64
    %v2055 = vpop.permute.xlu0 %2054
    %v2056 = vsel %vm336, %v2055, 0
    %2058 = vmatprep.subr.mxu0 0.0
    %2059 = vmatpush1.msra.mxu0 %v2042
    %2060 = vmatprep.subr.mxu0 0.0
    %2061 = vmatpush1.msra.mxu0 %v2043
    %2062 = vmatprep.subr.mxu0 0.0
    %2063 = vmatpush1.msra.mxu0 %v2044
    %2064 = vmatprep.subr.mxu0 0.0
    %2065 = vmatpush1.msra.mxu0 %v2045
    %2066 = vmatprep.subr.mxu0 0.0
    %2067 = vmatpush1.msra.mxu0 0.0
    %2068 = vmatprep.subr.mxu0 0.0
    %2069 = vmatpush1.msra.mxu0 0.0
    %2070 = vmatprep.subr.mxu0 0.0
    %2071 = vmatpush1.msra.mxu0 0.0
    %2072 = vmatprep.subr.mxu0 0.0
    %2073 = vmatpush1.msra.mxu0 0.0
    %2074 = vmatprep.subr.mxu0 0.0
    %2075 = vmatpush1.msra.mxu0 0.0
    %2076 = vmatprep.subr.mxu0 0.0
    %2077 = vmatpush1.msra.mxu0 0.0
    %2078 = vmatprep.subr.mxu0 0.0
    %2079 = vmatpush1.msra.mxu0 0.0
    %2080 = vmatprep.subr.mxu0 0.0
    %2081 = vmatpush1.msra.mxu0 0.0
    %2082 = vmatprep.subr.mxu0 0.0
    %2083 = vmatpush1.msra.mxu0 0.0
    %2084 = vmatprep.subr.mxu0 0.0
    %2085 = vmatpush1.msra.mxu0 0.0
    %2086 = vmatprep.subr.mxu0 0.0
    %2087 = vmatpush1.msra.mxu0 0.0
    %2088 = vmatprep.subr.mxu0 0.0
    %2089 = vmatpush1.msra.mxu0 0.0
    %2090 = vmatprep.subr.mxu0 0.0
    %2091 = vmatpush1.msra.mxu0 0.0
    %2092 = vmatprep.subr.mxu0 0.0
    %2093 = vmatpush1.msra.mxu0 0.0
    %2094 = vmatprep.subr.mxu0 0.0
    %2095 = vmatpush1.msra.mxu0 0.0
    %2096 = vmatprep.subr.mxu0 0.0
    %2097 = vmatpush1.msra.mxu0 0.0
    %2098 = vmatprep.subr.mxu0 0.0
    %2099 = vmatpush1.msra.mxu0 0.0
    %2100 = vmatprep.subr.mxu0 0.0
    %2101 = vmatpush1.msra.mxu0 0.0
    %2102 = vmatprep.subr.mxu0 0.0
    %2103 = vmatpush1.msra.mxu0 0.0
    %2104 = vmatprep.subr.mxu0 0.0
    %2105 = vmatpush1.msra.mxu0 0.0
    %2106 = vmatprep.subr.mxu0 0.0
    %2107 = vmatpush1.msra.mxu0 0.0
    %2108 = vmatprep.subr.mxu0 0.0
    %2109 = vmatpush1.msra.mxu0 0.0
    %2110 = vmatprep.subr.mxu0 0.0
    %2111 = vmatpush1.msra.mxu0 0.0
    %2112 = vmatprep.subr.mxu0 0.0
    %2113 = vmatpush1.msra.mxu0 0.0
    %2114 = vmatprep.subr.mxu0 0.0
    %2115 = vmatpush1.msra.mxu0 0.0
    %2116 = vmatprep.subr.mxu0 0.0
    %2117 = vmatpush1.msra.mxu0 0.0
    %2118 = vmatprep.subr.mxu0 0.0
    %2119 = vmatpush1.msra.mxu0 0.0
    %2120 = vmatprep.subr.mxu0 0.0
    %2121 = vmatpush1.msra.mxu0 0.0
    %2122 = vmatprep.mubr.f32.mxu0 0.0
    %2123 = vmatmul.mubr.f32.gmra.mrb[0].mxu0 %v2056
    %v2124 = vpop.f32.mrb[0].mxu0
    %v2125 = vadd.f32 %v2051, %v2124
    %v2126 = vpop.f32.mrb[0].mxu0
    %2127 = vdwg.mxu0
    %v2128 = vld [vmem:[#allocation11] sm:$0x1]
    %v2129 = vld [vmem:[#allocation12] sm:$0x1]
    %v2130 = vld [vmem:[%s14] sm:$0xff]
    %v2131 = vld [vmem:[%s14 + $0x8] sm:$0xff]
    %v2132 = vld [vmem:[%s14 + $0x10] sm:$0xff]
    %v2133 = vld [vmem:[%s14 + $0x18] sm:$0xff]
    %v2134 = vld [vmem:[#allocation15] sm:$0x1]
    %v2135 = vld [vmem:[%s16] sm:$0xff]
    %v2136 = vld [vmem:[%s16 + $0x8] sm:$0xff]
    %v2137 = vld [vmem:[%s16 + $0x10] sm:$0xff]
    %v2138 = vld [vmem:[%s16 + $0x18] sm:$0xff]
    %v2139 = vld [vmem:[#allocation17] sm:$0x1]
    %v2140 = vld [vmem:[%s18] sm:$0xff]
    %v2141 = vld [vmem:[%s18 + $0x8] sm:$0xff]
    %v2142 = vld [vmem:[%s18 + $0x10] sm:$0xff]
    %v2143 = vld [vmem:[%s18 + $0x18] sm:$0xff]
    %v2144 = vld [vmem:[#allocation18] sm:$0x1]
    %s2145 = sld [smem:[#allocation2]]
    %v2146 = vstv %s2145
    %v2147 = vmul.f32 %v2146, %v2128
    %v2148 = vadd.f32 %v2147, %v2129
    %s2149 = sld [smem:[#allocation2 + $0x1]]
    %v2150 = vstv %s2149
    %v2151 = vmul.f32 %v2150, %v2128
    %v2152 = vadd.f32 %v2151, %v2129
    %s2153 = sld [smem:[#allocation2 + $0x2]]
    %v2154 = vstv %s2153
    %v2155 = vmul.f32 %v2154, %v2128
    %v2156 = vadd.f32 %v2155, %v2129
    %s2157 = sld [smem:[#allocation2 + $0x3]]
    %v2158 = vstv %s2157
    %v2159 = vmul.f32 %v2158, %v2128
    %v2160 = vadd.f32 %v2159, %v2129
    %s2161 = sld [smem:[#allocation2 + $0x4]]
    %v2162 = vstv %s2161
    %v2163 = vmul.f32 %v2162, %v2128
    %v2164 = vadd.f32 %v2163, %v2129
    %s2165 = sld [smem:[#allocation2 + $0x5]]
    %v2166 = vstv %s2165
    %v2167 = vmul.f32 %v2166, %v2128
    %v2168 = vadd.f32 %v2167, %v2129
    %s2169 = sld [smem:[#allocation2 + $0x6]]
    %v2170 = vstv %s2169
    %v2171 = vmul.f32 %v2170, %v2128
    %v2172 = vadd.f32 %v2171, %v2129
    %s2173 = ssub.f32 %s2149, %s2145
    %s2174 = ssub.f32 %s2153, %s2149
    %s2175 = ssub.f32 %s2157, %s2153
    %s2176 = ssub.f32 %s2161, %s2157
    %s2177 = ssub.f32 %s2165, %s2161
    %s2178 = ssub.f32 %s2169, %s2165
    %s2179 = sld [smem:[#allocation2 + $0x7]]
    %s2180 = ssub.f32 %s2179, %s2169
    %v2181 = vld [vmem:[#allocation14] sm:$0xf]
    %v2183 = vsel %vm217, %v2125, 0
    %v2186 = vsel %vm224, %v2181, 0
    %2188 = vmatprep.subr.mxu0 0.0
    %2189 = vmatpush1.msra.mxu0 %v2186
    %2190 = vmatprep.subr.mxu0 0.0
    %2191 = vmatpush1.msra.mxu0 0.0
    %2192 = vmatprep.subr.mxu0 0.0
    %2193 = vmatpush1.msra.mxu0 0.0
    %2194 = vmatprep.subr.mxu0 0.0
    %2195 = vmatpush1.msra.mxu0 0.0
    %2196 = vmatprep.subr.mxu0 0.0
    %2197 = vmatpush1.msra.mxu0 0.0
    %2198 = vmatprep.subr.mxu0 0.0
    %2199 = vmatpush1.msra.mxu0 0.0
    %2200 = vmatprep.subr.mxu0 0.0
    %2201 = vmatpush1.msra.mxu0 0.0
    %2202 = vmatprep.subr.mxu0 0.0
    %2203 = vmatpush1.msra.mxu0 0.0
    %2204 = vmatprep.subr.mxu0 0.0
    %2205 = vmatpush1.msra.mxu0 0.0
    %2206 = vmatprep.subr.mxu0 0.0
    %2207 = vmatpush1.msra.mxu0 0.0
    %2208 = vmatprep.subr.mxu0 0.0
    %2209 = vmatpush1.msra.mxu0 0.0
    %2210 = vmatprep.subr.mxu0 0.0
    %2211 = vmatpush1.msra.mxu0 0.0
    %2212 = vmatprep.subr.mxu0 0.0
    %2213 = vmatpush1.msra.mxu0 0.0
    %2214 = vmatprep.subr.mxu0 0.0
    %2215 = vmatpush1.msra.mxu0 0.0
    %2216 = vmatprep.subr.mxu0 0.0
    %2217 = vmatpush1.msra.mxu0 0.0
    %2218 = vmatprep.subr.mxu0 0.0
    %2219 = vmatpush1.msra.mxu0 0.0
    %2220 = vmatprep.subr.mxu0 0.0
    %2221 = vmatpush1.msra.mxu0 0.0
    %2222 = vmatprep.subr.mxu0 0.0
    %2223 = vmatpush1.msra.mxu0 0.0
    %2224 = vmatprep.subr.mxu0 0.0
    %2225 = vmatpush1.msra.mxu0 0.0
    %2226 = vmatprep.subr.mxu0 0.0
    %2227 = vmatpush1.msra.mxu0 0.0
    %2228 = vmatprep.subr.mxu0 0.0
    %2229 = vmatpush1.msra.mxu0 0.0
    %2230 = vmatprep.subr.mxu0 0.0
    %2231 = vmatpush1.msra.mxu0 0.0
    %2232 = vmatprep.subr.mxu0 0.0
    %2233 = vmatpush1.msra.mxu0 0.0
    %2234 = vmatprep.subr.mxu0 0.0
    %2235 = vmatpush1.msra.mxu0 0.0
    %2236 = vmatprep.subr.mxu0 0.0
    %2237 = vmatpush1.msra.mxu0 0.0
    %2238 = vmatprep.subr.mxu0 0.0
    %2239 = vmatpush1.msra.mxu0 0.0
    %2240 = vmatprep.subr.mxu0 0.0
    %2241 = vmatpush1.msra.mxu0 0.0
    %2242 = vmatprep.subr.mxu0 0.0
    %2243 = vmatpush1.msra.mxu0 0.0
    %2244 = vmatprep.subr.mxu0 0.0
    %2245 = vmatpush1.msra.mxu0 0.0
    %2246 = vmatprep.subr.mxu0 0.0
    %2247 = vmatpush1.msra.mxu0 0.0
    %2248 = vmatprep.subr.mxu0 0.0
    %2249 = vmatpush1.msra.mxu0 0.0
    %2250 = vmatprep.subr.mxu0 0.0
    %2251 = vmatpush1.msra.mxu0 0.0
    %2252 = vmatprep.mubr.f32.mxu0 0.0
    %2253 = vmatmul.mubr.f32.gmra.mrb[0].mxu0 %v2183
    %v2254 = vpop.f32.mrb[0].mxu0
    %v2255 = vadd.f32 0.0, %v2254
    %v2256 = vpop.f32.mrb[0].mxu0
    %2257 = vdwg.mxu0
    %vm2258 = vcmask 9216
    %2259 = vst.msk [vmem:[%s20] sm:$0x3] %vm2258, 0.0
    %v2261 = vlaneseq
    %v2262 = vshrl.u32 %v2261, 7
    %v2263 = vsub.s32 0, %v2262
    %v2264 = vrot.slane %v2148, %v2263
    %v2266 = vadd.f32 %v2255, %v2264
    %v2267 = vtanh.pop %v2266
    %v2269 = vlaneseq
    %v2270 = vshrl.u32 %v2269, 7
    %v2271 = vsub.s32 0, %v2270
    %v2272 = vrot.slane %v2134, %v2271
    %v2275 = vsel %vm336, %v2267, 0
    %2277 = vmatprep.subr.mxu0 0.0
    %2278 = vmatpush1.msra.mxu0 %v2130
    %2279 = vmatprep.subr.mxu0 0.0
    %2280 = vmatpush1.msra.mxu0 %v2131
    %2281 = vmatprep.subr.mxu0 0.0
    %2282 = vmatpush1.msra.mxu0 %v2132
    %2283 = vmatprep.subr.mxu0 0.0
    %2284 = vmatpush1.msra.mxu0 %v2133
    %2285 = vmatprep.subr.mxu0 0.0
    %2286 = vmatpush1.msra.mxu0 0.0
    %2287 = vmatprep.subr.mxu0 0.0
    %2288 = vmatpush1.msra.mxu0 0.0
    %2289 = vmatprep.subr.mxu0 0.0
    %2290 = vmatpush1.msra.mxu0 0.0
    %2291 = vmatprep.subr.mxu0 0.0
    %2292 = vmatpush1.msra.mxu0 0.0
    %2293 = vmatprep.subr.mxu0 0.0
    %2294 = vmatpush1.msra.mxu0 0.0
    %2295 = vmatprep.subr.mxu0 0.0
    %2296 = vmatpush1.msra.mxu0 0.0
    %2297 = vmatprep.subr.mxu0 0.0
    %2298 = vmatpush1.msra.mxu0 0.0
    %2299 = vmatprep.subr.mxu0 0.0
    %2300 = vmatpush1.msra.mxu0 0.0
    %2301 = vmatprep.subr.mxu0 0.0
    %2302 = vmatpush1.msra.mxu0 0.0
    %2303 = vmatprep.subr.mxu0 0.0
    %2304 = vmatpush1.msra.mxu0 0.0
    %2305 = vmatprep.subr.mxu0 0.0
    %2306 = vmatpush1.msra.mxu0 0.0
    %2307 = vmatprep.subr.mxu0 0.0
    %2308 = vmatpush1.msra.mxu0 0.0
    %2309 = vmatprep.subr.mxu0 0.0
    %2310 = vmatpush1.msra.mxu0 0.0
    %2311 = vmatprep.subr.mxu0 0.0
    %2312 = vmatpush1.msra.mxu0 0.0
    %2313 = vmatprep.subr.mxu0 0.0
    %2314 = vmatpush1.msra.mxu0 0.0
    %2315 = vmatprep.subr.mxu0 0.0
    %2316 = vmatpush1.msra.mxu0 0.0
    %2317 = vmatprep.subr.mxu0 0.0
    %2318 = vmatpush1.msra.mxu0 0.0
    %2319 = vmatprep.subr.mxu0 0.0
    %2320 = vmatpush1.msra.mxu0 0.0
    %2321 = vmatprep.subr.mxu0 0.0
    %2322 = vmatpush1.msra.mxu0 0.0
    %2323 = vmatprep.subr.mxu0 0.0
    %2324 = vmatpush1.msra.mxu0 0.0
    %2325 = vmatprep.subr.mxu0 0.0
    %2326 = vmatpush1.msra.mxu0 0.0
    %2327 = vmatprep.subr.mxu0 0.0
    %2328 = vmatpush1.msra.mxu0 0.0
    %2329 = vmatprep.subr.mxu0 0.0
    %2330 = vmatpush1.msra.mxu0 0.0
    %2331 = vmatprep.subr.mxu0 0.0
    %2332 = vmatpush1.msra.mxu0 0.0
    %2333 = vmatprep.subr.mxu0 0.0
    %2334 = vmatpush1.msra.mxu0 0.0
    %2335 = vmatprep.subr.mxu0 0.0
    %2336 = vmatpush1.msra.mxu0 0.0
    %2337 = vmatprep.subr.mxu0 0.0
    %2338 = vmatpush1.msra.mxu0 0.0
    %2339 = vmatprep.subr.mxu0 0.0
    %2340 = vmatpush1.msra.mxu0 0.0
    %2341 = vmatprep.mubr.f32.mxu0 0.0
    %2342 = vmatmul.mubr.f32.gmra.mrb[0].mxu0 %v2275
    %v2343 = vpop.f32.mrb[0].mxu0
    %v2344 = vadd.f32 %v2272, %v2343
    %v2345 = vpop.f32.mrb[0].mxu0
    %2346 = vdwg.mxu0
    %v2347 = vtanh.pop %v2344
    %v2349 = vlaneseq
    %v2350 = vshrl.u32 %v2349, 7
    %v2351 = vsub.s32 0, %v2350
    %v2352 = vrot.slane %v2139, %v2351
    %v2355 = vsel %vm336, %v2347, 0
    %2357 = vmatprep.subr.mxu0 0.0
    %2358 = vmatpush1.msra.mxu0 %v2135
    %2359 = vmatprep.subr.mxu0 0.0
    %2360 = vmatpush1.msra.mxu0 %v2136
    %2361 = vmatprep.subr.mxu0 0.0
    %2362 = vmatpush1.msra.mxu0 %v2137
    %2363 = vmatprep.subr.mxu0 0.0
    %2364 = vmatpush1.msra.mxu0 %v2138
    %2365 = vmatprep.subr.mxu0 0.0
    %2366 = vmatpush1.msra.mxu0 0.0
    %2367 = vmatprep.subr.mxu0 0.0
    %2368 = vmatpush1.msra.mxu0 0.0
    %2369 = vmatprep.subr.mxu0 0.0
    %2370 = vmatpush1.msra.mxu0 0.0
    %2371 = vmatprep.subr.mxu0 0.0
    %2372 = vmatpush1.msra.mxu0 0.0
    %2373 = vmatprep.subr.mxu0 0.0
    %2374 = vmatpush1.msra.mxu0 0.0
    %2375 = vmatprep.subr.mxu0 0.0
    %2376 = vmatpush1.msra.mxu0 0.0
    %2377 = vmatprep.subr.mxu0 0.0
    %2378 = vmatpush1.msra.mxu0 0.0
    %2379 = vmatprep.subr.mxu0 0.0
    %2380 = vmatpush1.msra.mxu0 0.0
    %2381 = vmatprep.subr.mxu0 0.0
    %2382 = vmatpush1.msra.mxu0 0.0
    %2383 = vmatprep.subr.mxu0 0.0
    %2384 = vmatpush1.msra.mxu0 0.0
    %2385 = vmatprep.subr.mxu0 0.0
    %2386 = vmatpush1.msra.mxu0 0.0
    %2387 = vmatprep.subr.mxu0 0.0
    %2388 = vmatpush1.msra.mxu0 0.0
    %2389 = vmatprep.subr.mxu0 0.0
    %2390 = vmatpush1.msra.mxu0 0.0
    %2391 = vmatprep.subr.mxu0 0.0
    %2392 = vmatpush1.msra.mxu0 0.0
    %2393 = vmatprep.subr.mxu0 0.0
    %2394 = vmatpush1.msra.mxu0 0.0
    %2395 = vmatprep.subr.mxu0 0.0
    %2396 = vmatpush1.msra.mxu0 0.0
    %2397 = vmatprep.subr.mxu0 0.0
    %2398 = vmatpush1.msra.mxu0 0.0
    %2399 = vmatprep.subr.mxu0 0.0
    %2400 = vmatpush1.msra.mxu0 0.0
    %2401 = vmatprep.subr.mxu0 0.0
    %2402 = vmatpush1.msra.mxu0 0.0
    %2403 = vmatprep.subr.mxu0 0.0
    %2404 = vmatpush1.msra.mxu0 0.0
    %2405 = vmatprep.subr.mxu0 0.0
    %2406 = vmatpush1.msra.mxu0 0.0
    %2407 = vmatprep.subr.mxu0 0.0
    %2408 = vmatpush1.msra.mxu0 0.0
    %2409 = vmatprep.subr.mxu0 0.0
    %2410 = vmatpush1.msra.mxu0 0.0
    %2411 = vmatprep.subr.mxu0 0.0
    %2412 = vmatpush1.msra.mxu0 0.0
    %2413 = vmatprep.subr.mxu0 0.0
    %2414 = vmatpush1.msra.mxu0 0.0
    %2415 = vmatprep.subr.mxu0 0.0
    %2416 = vmatpush1.msra.mxu0 0.0
    %2417 = vmatprep.subr.mxu0 0.0
    %2418 = vmatpush1.msra.mxu0 0.0
    %2419 = vmatprep.subr.mxu0 0.0
    %2420 = vmatpush1.msra.mxu0 0.0
    %2421 = vmatprep.mubr.f32.mxu0 0.0
    %2422 = vmatmul.mubr.f32.gmra.mrb[0].mxu0 %v2355
    %v2423 = vpop.f32.mrb[0].mxu0
    %v2424 = vadd.f32 %v2352, %v2423
    %v2425 = vpop.f32.mrb[0].mxu0
    %2426 = vdwg.mxu0
    %v2427 = vstv %s2173
    %v2428 = vmul.f32 %v2427, %v2424
    %v2429 = vadd.f32 %v2255, %v2428
    %v2431 = vlaneseq
    %v2432 = vshrl.u32 %v2431, 7
    %v2433 = vsub.s32 0, %v2432
    %v2434 = vrot.slane %v2144, %v2433
    %2436 = vmatprep.subr.mxu0 0.0
    %2437 = vmatpush1.msra.mxu0 %v2140
    %2438 = vmatprep.subr.mxu0 0.0
    %2439 = vmatpush1.msra.mxu0 %v2141
    %2440 = vmatprep.subr.mxu0 0.0
    %2441 = vmatpush1.msra.mxu0 %v2142
    %2442 = vmatprep.subr.mxu0 0.0
    %2443 = vmatpush1.msra.mxu0 %v2143
    %2444 = vmatprep.subr.mxu0 0.0
    %2445 = vmatpush1.msra.mxu0 0.0
    %2446 = vmatprep.subr.mxu0 0.0
    %2447 = vmatpush1.msra.mxu0 0.0
    %2448 = vmatprep.subr.mxu0 0.0
    %2449 = vmatpush1.msra.mxu0 0.0
    %2450 = vmatprep.subr.mxu0 0.0
    %2451 = vmatpush1.msra.mxu0 0.0
    %2452 = vmatprep.subr.mxu0 0.0
    %2453 = vmatpush1.msra.mxu0 0.0
    %2454 = vmatprep.subr.mxu0 0.0
    %2455 = vmatpush1.msra.mxu0 0.0
    %2456 = vmatprep.subr.mxu0 0.0
    %2457 = vmatpush1.msra.mxu0 0.0
    %2458 = vmatprep.subr.mxu0 0.0
    %2459 = vmatpush1.msra.mxu0 0.0
    %2460 = vmatprep.subr.mxu0 0.0
    %2461 = vmatpush1.msra.mxu0 0.0
    %2462 = vmatprep.subr.mxu0 0.0
    %2463 = vmatpush1.msra.mxu0 0.0
    %2464 = vmatprep.subr.mxu0 0.0
    %2465 = vmatpush1.msra.mxu0 0.0
    %2466 = vmatprep.subr.mxu0 0.0
    %2467 = vmatpush1.msra.mxu0 0.0
    %2468 = vmatprep.subr.mxu0 0.0
    %2469 = vmatpush1.msra.mxu0 0.0
    %2470 = vmatprep.subr.mxu0 0.0
    %2471 = vmatpush1.msra.mxu0 0.0
    %2472 = vmatprep.subr.mxu0 0.0
    %2473 = vmatpush1.msra.mxu0 0.0
    %2474 = vmatprep.subr.mxu0 0.0
    %2475 = vmatpush1.msra.mxu0 0.0
    %2476 = vmatprep.subr.mxu0 0.0
    %2477 = vmatpush1.msra.mxu0 0.0
    %2478 = vmatprep.subr.mxu0 0.0
    %2479 = vmatpush1.msra.mxu0 0.0
    %2480 = vmatprep.subr.mxu0 0.0
    %2481 = vmatpush1.msra.mxu0 0.0
    %2482 = vmatprep.subr.mxu0 0.0
    %2483 = vmatpush1.msra.mxu0 0.0
    %2484 = vmatprep.subr.mxu0 0.0
    %2485 = vmatpush1.msra.mxu0 0.0
    %2486 = vmatprep.subr.mxu0 0.0
    %2487 = vmatpush1.msra.mxu0 0.0
    %2488 = vmatprep.subr.mxu0 0.0
    %2489 = vmatpush1.msra.mxu0 0.0
    %2490 = vmatprep.subr.mxu0 0.0
    %2491 = vmatpush1.msra.mxu0 0.0
    %2492 = vmatprep.subr.mxu0 0.0
    %2493 = vmatpush1.msra.mxu0 0.0
    %2494 = vmatprep.subr.mxu0 0.0
    %2495 = vmatpush1.msra.mxu0 0.0
    %2496 = vmatprep.subr.mxu0 0.0
    %2497 = vmatpush1.msra.mxu0 0.0
    %2498 = vmatprep.subr.mxu0 0.0
    %2499 = vmatpush1.msra.mxu0 0.0
    %2500 = vmatprep.mubr.f32.mxu0 0.0
    %2501 = vmatmul.mubr.f32.gmra.mrb[0].mxu0 %v2355
    %v2502 = vpop.f32.mrb[0].mxu0
    %v2503 = vadd.f32 %v2434, %v2502
    %v2504 = vpop.f32.mrb[0].mxu0
    %2505 = vdwg.mxu0
    %v2506 = vmul.f32 %v2427, %v2503
    %v2507 = vadd.f32 %v2506, 0.0
    %2509 = vrot.lane.b32.xlu0 %v2507, 2
    %v2510 = vpop.permute.xlu0 %2509
    %vm2512 = vcmask 25616
    %2513 = vst.msk [vmem:[%s20] sm:$0x3] %vm2512, %v2510
    %v2515 = vlaneseq
    %v2516 = vshrl.u32 %v2515, 7
    %v2517 = vsub.s32 0, %v2516
    %v2518 = vrot.slane %v2152, %v2517
    %v2520 = vadd.f32 %v2429, %v2518
    %v2521 = vtanh.pop %v2520
    %v2523 = vsel %vm336, %v2521, 0
    %2525 = vmatprep.subr.mxu0 0.0
    %2526 = vmatpush1.msra.mxu0 %v2130
    %2527 = vmatprep.subr.mxu0 0.0
    %2528 = vmatpush1.msra.mxu0 %v2131
    %2529 = vmatprep.subr.mxu0 0.0
    %2530 = vmatpush1.msra.mxu0 %v2132
    %2531 = vmatprep.subr.mxu0 0.0
    %2532 = vmatpush1.msra.mxu0 %v2133
    %2533 = vmatprep.subr.mxu0 0.0
    %2534 = vmatpush1.msra.mxu0 0.0
    %2535 = vmatprep.subr.mxu0 0.0
    %2536 = vmatpush1.msra.mxu0 0.0
    %2537 = vmatprep.subr.mxu0 0.0
    %2538 = vmatpush1.msra.mxu0 0.0
    %2539 = vmatprep.subr.mxu0 0.0
    %2540 = vmatpush1.msra.mxu0 0.0
    %2541 = vmatprep.subr.mxu0 0.0
    %2542 = vmatpush1.msra.mxu0 0.0
    %2543 = vmatprep.subr.mxu0 0.0
    %2544 = vmatpush1.msra.mxu0 0.0
    %2545 = vmatprep.subr.mxu0 0.0
    %2546 = vmatpush1.msra.mxu0 0.0
    %2547 = vmatprep.subr.mxu0 0.0
    %2548 = vmatpush1.msra.mxu0 0.0
    %2549 = vmatprep.subr.mxu0 0.0
    %2550 = vmatpush1.msra.mxu0 0.0
    %2551 = vmatprep.subr.mxu0 0.0
    %2552 = vmatpush1.msra.mxu0 0.0
    %2553 = vmatprep.subr.mxu0 0.0
    %2554 = vmatpush1.msra.mxu0 0.0
    %2555 = vmatprep.subr.mxu0 0.0
    %2556 = vmatpush1.msra.mxu0 0.0
    %2557 = vmatprep.subr.mxu0 0.0
    %2558 = vmatpush1.msra.mxu0 0.0
    %2559 = vmatprep.subr.mxu0 0.0
    %2560 = vmatpush1.msra.mxu0 0.0
    %2561 = vmatprep.subr.mxu0 0.0
    %2562 = vmatpush1.msra.mxu0 0.0
    %2563 = vmatprep.subr.mxu0 0.0
    %2564 = vmatpush1.msra.mxu0 0.0
    %2565 = vmatprep.subr.mxu0 0.0
    %2566 = vmatpush1.msra.mxu0 0.0
    %2567 = vmatprep.subr.mxu0 0.0
    %2568 = vmatpush1.msra.mxu0 0.0
    %2569 = vmatprep.subr.mxu0 0.0
    %2570 = vmatpush1.msra.mxu0 0.0
    %2571 = vmatprep.subr.mxu0 0.0
    %2572 = vmatpush1.msra.mxu0 0.0
    %2573 = vmatprep.subr.mxu0 0.0
    %2574 = vmatpush1.msra.mxu0 0.0
    %2575 = vmatprep.subr.mxu0 0.0
    %2576 = vmatpush1.msra.mxu0 0.0
    %2577 = vmatprep.subr.mxu0 0.0
    %2578 = vmatpush1.msra.mxu0 0.0
    %2579 = vmatprep.subr.mxu0 0.0
    %2580 = vmatpush1.msra.mxu0 0.0
    %2581 = vmatprep.subr.mxu0 0.0
    %2582 = vmatpush1.msra.mxu0 0.0
    %2583 = vmatprep.subr.mxu0 0.0
    %2584 = vmatpush1.msra.mxu0 0.0
    %2585 = vmatprep.subr.mxu0 0.0
    %2586 = vmatpush1.msra.mxu0 0.0
    %2587 = vmatprep.subr.mxu0 0.0
    %2588 = vmatpush1.msra.mxu0 0.0
    %2589 = vmatprep.mubr.f32.mxu0 0.0
    %2590 = vmatmul.mubr.f32.gmra.mrb[0].mxu0 %v2523
    %v2591 = vpop.f32.mrb[0].mxu0
    %v2592 = vadd.f32 %v2272, %v2591
    %v2593 = vpop.f32.mrb[0].mxu0
    %2594 = vdwg.mxu0
    %v2595 = vtanh.pop %v2592
    %v2597 = vsel %vm336, %v2595, 0
    %2599 = vmatprep.subr.mxu0 0.0
    %2600 = vmatpush1.msra.mxu0 %v2135
    %2601 = vmatprep.subr.mxu0 0.0
    %2602 = vmatpush1.msra.mxu0 %v2136
    %2603 = vmatprep.subr.mxu0 0.0
    %2604 = vmatpush1.msra.mxu0 %v2137
    %2605 = vmatprep.subr.mxu0 0.0
    %2606 = vmatpush1.msra.mxu0 %v2138
    %2607 = vmatprep.subr.mxu0 0.0
    %2608 = vmatpush1.msra.mxu0 0.0
    %2609 = vmatprep.subr.mxu0 0.0
    %2610 = vmatpush1.msra.mxu0 0.0
    %2611 = vmatprep.subr.mxu0 0.0
    %2612 = vmatpush1.msra.mxu0 0.0
    %2613 = vmatprep.subr.mxu0 0.0
    %2614 = vmatpush1.msra.mxu0 0.0
    %2615 = vmatprep.subr.mxu0 0.0
    %2616 = vmatpush1.msra.mxu0 0.0
    %2617 = vmatprep.subr.mxu0 0.0
    %2618 = vmatpush1.msra.mxu0 0.0
    %2619 = vmatprep.subr.mxu0 0.0
    %2620 = vmatpush1.msra.mxu0 0.0
    %2621 = vmatprep.subr.mxu0 0.0
    %2622 = vmatpush1.msra.mxu0 0.0
    %2623 = vmatprep.subr.mxu0 0.0
    %2624 = vmatpush1.msra.mxu0 0.0
    %2625 = vmatprep.subr.mxu0 0.0
    %2626 = vmatpush1.msra.mxu0 0.0
    %2627 = vmatprep.subr.mxu0 0.0
    %2628 = vmatpush1.msra.mxu0 0.0
    %2629 = vmatprep.subr.mxu0 0.0
    %2630 = vmatpush1.msra.mxu0 0.0
    %2631 = vmatprep.subr.mxu0 0.0
    %2632 = vmatpush1.msra.mxu0 0.0
    %2633 = vmatprep.subr.mxu0 0.0
    %2634 = vmatpush1.msra.mxu0 0.0
    %2635 = vmatprep.subr.mxu0 0.0
    %2636 = vmatpush1.msra.mxu0 0.0
    %2637 = vmatprep.subr.mxu0 0.0
    %2638 = vmatpush1.msra.mxu0 0.0
    %2639 = vmatprep.subr.mxu0 0.0
    %2640 = vmatpush1.msra.mxu0 0.0
    %2641 = vmatprep.subr.mxu0 0.0
    %2642 = vmatpush1.msra.mxu0 0.0
    %2643 = vmatprep.subr.mxu0 0.0
    %2644 = vmatpush1.msra.mxu0 0.0
    %2645 = vmatprep.subr.mxu0 0.0
    %2646 = vmatpush1.msra.mxu0 0.0
    %2647 = vmatprep.subr.mxu0 0.0
    %2648 = vmatpush1.msra.mxu0 0.0
    %2649 = vmatprep.subr.mxu0 0.0
    %2650 = vmatpush1.msra.mxu0 0.0
    %2651 = vmatprep.subr.mxu0 0.0
    %2652 = vmatpush1.msra.mxu0 0.0
    %2653 = vmatprep.subr.mxu0 0.0
    %2654 = vmatpush1.msra.mxu0 0.0
    %2655 = vmatprep.subr.mxu0 0.0
    %2656 = vmatpush1.msra.mxu0 0.0
    %2657 = vmatprep.subr.mxu0 0.0
    %2658 = vmatpush1.msra.mxu0 0.0
    %2659 = vmatprep.subr.mxu0 0.0
    %2660 = vmatpush1.msra.mxu0 0.0
    %2661 = vmatprep.subr.mxu0 0.0
    %2662 = vmatpush1.msra.mxu0 0.0
    %2663 = vmatprep.mubr.f32.mxu0 0.0
    %2664 = vmatmul.mubr.f32.gmra.mrb[0].mxu0 %v2597
    %v2665 = vpop.f32.mrb[0].mxu0
    %v2666 = vadd.f32 %v2352, %v2665
    %v2667 = vpop.f32.mrb[0].mxu0
    %2668 = vdwg.mxu0
    %v2669 = vstv %s2174
    %v2670 = vmul.f32 %v2669, %v2666
    %v2671 = vadd.f32 %v2429, %v2670
    %2672 = vmatprep.subr.mxu0 0.0
    %2673 = vmatpush1.msra.mxu0 %v2140
    %2674 = vmatprep.subr.mxu0 0.0
    %2675 = vmatpush1.msra.mxu0 %v2141
    %2676 = vmatprep.subr.mxu0 0.0
    %2677 = vmatpush1.msra.mxu0 %v2142
    %2678 = vmatprep.subr.mxu0 0.0
    %2679 = vmatpush1.msra.mxu0 %v2143
    %2680 = vmatprep.subr.mxu0 0.0
    %2681 = vmatpush1.msra.mxu0 0.0
    %2682 = vmatprep.subr.mxu0 0.0
    %2683 = vmatpush1.msra.mxu0 0.0
    %2684 = vmatprep.subr.mxu0 0.0
    %2685 = vmatpush1.msra.mxu0 0.0
    %2686 = vmatprep.subr.mxu0 0.0
    %2687 = vmatpush1.msra.mxu0 0.0
    %2688 = vmatprep.subr.mxu0 0.0
    %2689 = vmatpush1.msra.mxu0 0.0
    %2690 = vmatprep.subr.mxu0 0.0
    %2691 = vmatpush1.msra.mxu0 0.0
    %2692 = vmatprep.subr.mxu0 0.0
    %2693 = vmatpush1.msra.mxu0 0.0
    %2694 = vmatprep.subr.mxu0 0.0
    %2695 = vmatpush1.msra.mxu0 0.0
    %2696 = vmatprep.subr.mxu0 0.0
    %2697 = vmatpush1.msra.mxu0 0.0
    %2698 = vmatprep.subr.mxu0 0.0
    %2699 = vmatpush1.msra.mxu0 0.0
    %2700 = vmatprep.subr.mxu0 0.0
    %2701 = vmatpush1.msra.mxu0 0.0
    %2702 = vmatprep.subr.mxu0 0.0
    %2703 = vmatpush1.msra.mxu0 0.0
    %2704 = vmatprep.subr.mxu0 0.0
    %2705 = vmatpush1.msra.mxu0 0.0
    %2706 = vmatprep.subr.mxu0 0.0
    %2707 = vmatpush1.msra.mxu0 0.0
    %2708 = vmatprep.subr.mxu0 0.0
    %2709 = vmatpush1.msra.mxu0 0.0
    %2710 = vmatprep.subr.mxu0 0.0
    %2711 = vmatpush1.msra.mxu0 0.0
    %2712 = vmatprep.subr.mxu0 0.0
    %2713 = vmatpush1.msra.mxu0 0.0
    %2714 = vmatprep.subr.mxu0 0.0
    %2715 = vmatpush1.msra.mxu0 0.0
    %2716 = vmatprep.subr.mxu0 0.0
    %2717 = vmatpush1.msra.mxu0 0.0
    %2718 = vmatprep.subr.mxu0 0.0
    %2719 = vmatpush1.msra.mxu0 0.0
    %2720 = vmatprep.subr.mxu0 0.0
    %2721 = vmatpush1.msra.mxu0 0.0
    %2722 = vmatprep.subr.mxu0 0.0
    %2723 = vmatpush1.msra.mxu0 0.0
    %2724 = vmatprep.subr.mxu0 0.0
    %2725 = vmatpush1.msra.mxu0 0.0
    %2726 = vmatprep.subr.mxu0 0.0
    %2727 = vmatpush1.msra.mxu0 0.0
    %2728 = vmatprep.subr.mxu0 0.0
    %2729 = vmatpush1.msra.mxu0 0.0
    %2730 = vmatprep.subr.mxu0 0.0
    %2731 = vmatpush1.msra.mxu0 0.0
    %2732 = vmatprep.subr.mxu0 0.0
    %2733 = vmatpush1.msra.mxu0 0.0
    %2734 = vmatprep.subr.mxu0 0.0
    %2735 = vmatpush1.msra.mxu0 0.0
    %2736 = vmatprep.mubr.f32.mxu0 0.0
    %2737 = vmatmul.mubr.f32.gmra.mrb[0].mxu0 %v2597
    %v2738 = vpop.f32.mrb[0].mxu0
    %v2739 = vadd.f32 %v2434, %v2738
    %v2740 = vpop.f32.mrb[0].mxu0
    %2741 = vdwg.mxu0
    %v2742 = vmul.f32 %v2669, %v2739
    %v2743 = vadd.f32 %v2507, %v2742
    %2745 = vrot.lane.b32.xlu0 %v2743, 4
    %v2746 = vpop.permute.xlu0 %2745
    %vm2748 = vcmask 42016
    %2749 = vst.msk [vmem:[%s20] sm:$0x3] %vm2748, %v2746
    %v2751 = vlaneseq
    %v2752 = vshrl.u32 %v2751, 7
    %v2753 = vsub.s32 0, %v2752
    %v2754 = vrot.slane %v2156, %v2753
    %v2756 = vadd.f32 %v2671, %v2754
    %v2757 = vtanh.pop %v2756
    %v2759 = vsel %vm336, %v2757, 0
    %2761 = vmatprep.subr.mxu0 0.0
    %2762 = vmatpush1.msra.mxu0 %v2130
    %2763 = vmatprep.subr.mxu0 0.0
    %2764 = vmatpush1.msra.mxu0 %v2131
    %2765 = vmatprep.subr.mxu0 0.0
    %2766 = vmatpush1.msra.mxu0 %v2132
    %2767 = vmatprep.subr.mxu0 0.0
    %2768 = vmatpush1.msra.mxu0 %v2133
    %2769 = vmatprep.subr.mxu0 0.0
    %2770 = vmatpush1.msra.mxu0 0.0
    %2771 = vmatprep.subr.mxu0 0.0
    %2772 = vmatpush1.msra.mxu0 0.0
    %2773 = vmatprep.subr.mxu0 0.0
    %2774 = vmatpush1.msra.mxu0 0.0
    %2775 = vmatprep.subr.mxu0 0.0
    %2776 = vmatpush1.msra.mxu0 0.0
    %2777 = vmatprep.subr.mxu0 0.0
    %2778 = vmatpush1.msra.mxu0 0.0
    %2779 = vmatprep.subr.mxu0 0.0
    %2780 = vmatpush1.msra.mxu0 0.0
    %2781 = vmatprep.subr.mxu0 0.0
    %2782 = vmatpush1.msra.mxu0 0.0
    %2783 = vmatprep.subr.mxu0 0.0
    %2784 = vmatpush1.msra.mxu0 0.0
    %2785 = vmatprep.subr.mxu0 0.0
    %2786 = vmatpush1.msra.mxu0 0.0
    %2787 = vmatprep.subr.mxu0 0.0
    %2788 = vmatpush1.msra.mxu0 0.0
    %2789 = vmatprep.subr.mxu0 0.0
    %2790 = vmatpush1.msra.mxu0 0.0
    %2791 = vmatprep.subr.mxu0 0.0
    %2792 = vmatpush1.msra.mxu0 0.0
    %2793 = vmatprep.subr.mxu0 0.0
    %2794 = vmatpush1.msra.mxu0 0.0
    %2795 = vmatprep.subr.mxu0 0.0
    %2796 = vmatpush1.msra.mxu0 0.0
    %2797 = vmatprep.subr.mxu0 0.0
    %2798 = vmatpush1.msra.mxu0 0.0
    %2799 = vmatprep.subr.mxu0 0.0
    %2800 = vmatpush1.msra.mxu0 0.0
    %2801 = vmatprep.subr.mxu0 0.0
    %2802 = vmatpush1.msra.mxu0 0.0
    %2803 = vmatprep.subr.mxu0 0.0
    %2804 = vmatpush1.msra.mxu0 0.0
    %2805 = vmatprep.subr.mxu0 0.0
    %2806 = vmatpush1.msra.mxu0 0.0
    %2807 = vmatprep.subr.mxu0 0.0
    %2808 = vmatpush1.msra.mxu0 0.0
    %2809 = vmatprep.subr.mxu0 0.0
    %2810 = vmatpush1.msra.mxu0 0.0
    %2811 = vmatprep.subr.mxu0 0.0
    %2812 = vmatpush1.msra.mxu0 0.0
    %2813 = vmatprep.subr.mxu0 0.0
    %2814 = vmatpush1.msra.mxu0 0.0
    %2815 = vmatprep.subr.mxu0 0.0
    %2816 = vmatpush1.msra.mxu0 0.0
    %2817 = vmatprep.subr.mxu0 0.0
    %2818 = vmatpush1.msra.mxu0 0.0
    %2819 = vmatprep.subr.mxu0 0.0
    %2820 = vmatpush1.msra.mxu0 0.0
    %2821 = vmatprep.subr.mxu0 0.0
    %2822 = vmatpush1.msra.mxu0 0.0
    %2823 = vmatprep.subr.mxu0 0.0
    %2824 = vmatpush1.msra.mxu0 0.0
    %2825 = vmatprep.mubr.f32.mxu0 0.0
    %2826 = vmatmul.mubr.f32.gmra.mrb[0].mxu0 %v2759
    %v2827 = vpop.f32.mrb[0].mxu0
    %v2828 = vadd.f32 %v2272, %v2827
    %v2829 = vpop.f32.mrb[0].mxu0
    %2830 = vdwg.mxu0
    %v2831 = vtanh.pop %v2828
    %v2833 = vsel %vm336, %v2831, 0
    %2835 = vmatprep.subr.mxu0 0.0
    %2836 = vmatpush1.msra.mxu0 %v2135
    %2837 = vmatprep.subr.mxu0 0.0
    %2838 = vmatpush1.msra.mxu0 %v2136
    %2839 = vmatprep.subr.mxu0 0.0
    %2840 = vmatpush1.msra.mxu0 %v2137
    %2841 = vmatprep.subr.mxu0 0.0
    %2842 = vmatpush1.msra.mxu0 %v2138
    %2843 = vmatprep.subr.mxu0 0.0
    %2844 = vmatpush1.msra.mxu0 0.0
    %2845 = vmatprep.subr.mxu0 0.0
    %2846 = vmatpush1.msra.mxu0 0.0
    %2847 = vmatprep.subr.mxu0 0.0
    %2848 = vmatpush1.msra.mxu0 0.0
    %2849 = vmatprep.subr.mxu0 0.0
    %2850 = vmatpush1.msra.mxu0 0.0
    %2851 = vmatprep.subr.mxu0 0.0
    %2852 = vmatpush1.msra.mxu0 0.0
    %2853 = vmatprep.subr.mxu0 0.0
    %2854 = vmatpush1.msra.mxu0 0.0
    %2855 = vmatprep.subr.mxu0 0.0
    %2856 = vmatpush1.msra.mxu0 0.0
    %2857 = vmatprep.subr.mxu0 0.0
    %2858 = vmatpush1.msra.mxu0 0.0
    %2859 = vmatprep.subr.mxu0 0.0
    %2860 = vmatpush1.msra.mxu0 0.0
    %2861 = vmatprep.subr.mxu0 0.0
    %2862 = vmatpush1.msra.mxu0 0.0
    %2863 = vmatprep.subr.mxu0 0.0
    %2864 = vmatpush1.msra.mxu0 0.0
    %2865 = vmatprep.subr.mxu0 0.0
    %2866 = vmatpush1.msra.mxu0 0.0
    %2867 = vmatprep.subr.mxu0 0.0
    %2868 = vmatpush1.msra.mxu0 0.0
    %2869 = vmatprep.subr.mxu0 0.0
    %2870 = vmatpush1.msra.mxu0 0.0
    %2871 = vmatprep.subr.mxu0 0.0
    %2872 = vmatpush1.msra.mxu0 0.0
    %2873 = vmatprep.subr.mxu0 0.0
    %2874 = vmatpush1.msra.mxu0 0.0
    %2875 = vmatprep.subr.mxu0 0.0
    %2876 = vmatpush1.msra.mxu0 0.0
    %2877 = vmatprep.subr.mxu0 0.0
    %2878 = vmatpush1.msra.mxu0 0.0
    %2879 = vmatprep.subr.mxu0 0.0
    %2880 = vmatpush1.msra.mxu0 0.0
    %2881 = vmatprep.subr.mxu0 0.0
    %2882 = vmatpush1.msra.mxu0 0.0
    %2883 = vmatprep.subr.mxu0 0.0
    %2884 = vmatpush1.msra.mxu0 0.0
    %2885 = vmatprep.subr.mxu0 0.0
    %2886 = vmatpush1.msra.mxu0 0.0
    %2887 = vmatprep.subr.mxu0 0.0
    %2888 = vmatpush1.msra.mxu0 0.0
    %2889 = vmatprep.subr.mxu0 0.0
    %2890 = vmatpush1.msra.mxu0 0.0
    %2891 = vmatprep.subr.mxu0 0.0
    %2892 = vmatpush1.msra.mxu0 0.0
    %2893 = vmatprep.subr.mxu0 0.0
    %2894 = vmatpush1.msra.mxu0 0.0
    %2895 = vmatprep.subr.mxu0 0.0
    %2896 = vmatpush1.msra.mxu0 0.0
    %2897 = vmatprep.subr.mxu0 0.0
    %2898 = vmatpush1.msra.mxu0 0.0
    %2899 = vmatprep.mubr.f32.mxu0 0.0
    %2900 = vmatmul.mubr.f32.gmra.mrb[0].mxu0 %v2833
    %v2901 = vpop.f32.mrb[0].mxu0
    %v2902 = vadd.f32 %v2352, %v2901
    %v2903 = vpop.f32.mrb[0].mxu0
    %2904 = vdwg.mxu0
    %v2905 = vstv %s2175
    %v2906 = vmul.f32 %v2905, %v2902
    %v2907 = vadd.f32 %v2671, %v2906
    %2908 = vmatprep.subr.mxu0 0.0
    %2909 = vmatpush1.msra.mxu0 %v2140
    %2910 = vmatprep.subr.mxu0 0.0
    %2911 = vmatpush1.msra.mxu0 %v2141
    %2912 = vmatprep.subr.mxu0 0.0
    %2913 = vmatpush1.msra.mxu0 %v2142
    %2914 = vmatprep.subr.mxu0 0.0
    %2915 = vmatpush1.msra.mxu0 %v2143
    %2916 = vmatprep.subr.mxu0 0.0
    %2917 = vmatpush1.msra.mxu0 0.0
    %2918 = vmatprep.subr.mxu0 0.0
    %2919 = vmatpush1.msra.mxu0 0.0
    %2920 = vmatprep.subr.mxu0 0.0
    %2921 = vmatpush1.msra.mxu0 0.0
    %2922 = vmatprep.subr.mxu0 0.0
    %2923 = vmatpush1.msra.mxu0 0.0
    %2924 = vmatprep.subr.mxu0 0.0
    %2925 = vmatpush1.msra.mxu0 0.0
    %2926 = vmatprep.subr.mxu0 0.0
    %2927 = vmatpush1.msra.mxu0 0.0
    %2928 = vmatprep.subr.mxu0 0.0
    %2929 = vmatpush1.msra.mxu0 0.0
    %2930 = vmatprep.subr.mxu0 0.0
    %2931 = vmatpush1.msra.mxu0 0.0
    %2932 = vmatprep.subr.mxu0 0.0
    %2933 = vmatpush1.msra.mxu0 0.0
    %2934 = vmatprep.subr.mxu0 0.0
    %2935 = vmatpush1.msra.mxu0 0.0
    %2936 = vmatprep.subr.mxu0 0.0
    %2937 = vmatpush1.msra.mxu0 0.0
    %2938 = vmatprep.subr.mxu0 0.0
    %2939 = vmatpush1.msra.mxu0 0.0
    %2940 = vmatprep.subr.mxu0 0.0
    %2941 = vmatpush1.msra.mxu0 0.0
    %2942 = vmatprep.subr.mxu0 0.0
    %2943 = vmatpush1.msra.mxu0 0.0
    %2944 = vmatprep.subr.mxu0 0.0
    %2945 = vmatpush1.msra.mxu0 0.0
    %2946 = vmatprep.subr.mxu0 0.0
    %2947 = vmatpush1.msra.mxu0 0.0
    %2948 = vmatprep.subr.mxu0 0.0
    %2949 = vmatpush1.msra.mxu0 0.0
    %2950 = vmatprep.subr.mxu0 0.0
    %2951 = vmatpush1.msra.mxu0 0.0
    %2952 = vmatprep.subr.mxu0 0.0
    %2953 = vmatpush1.msra.mxu0 0.0
    %2954 = vmatprep.subr.mxu0 0.0
    %2955 = vmatpush1.msra.mxu0 0.0
    %2956 = vmatprep.subr.mxu0 0.0
    %2957 = vmatpush1.msra.mxu0 0.0
    %2958 = vmatprep.subr.mxu0 0.0
    %2959 = vmatpush1.msra.mxu0 0.0
    %2960 = vmatprep.subr.mxu0 0.0
    %2961 = vmatpush1.msra.mxu0 0.0
    %2962 = vmatprep.subr.mxu0 0.0
    %2963 = vmatpush1.msra.mxu0 0.0
    %2964 = vmatprep.subr.mxu0 0.0
    %2965 = vmatpush1.msra.mxu0 0.0
    %2966 = vmatprep.subr.mxu0 0.0
    %2967 = vmatpush1.msra.mxu0 0.0
    %2968 = vmatprep.subr.mxu0 0.0
    %2969 = vmatpush1.msra.mxu0 0.0
    %2970 = vmatprep.subr.mxu0 0.0
    %2971 = vmatpush1.msra.mxu0 0.0
    %2972 = vmatprep.mubr.f32.mxu0 0.0
    %2973 = vmatmul.mubr.f32.gmra.mrb[0].mxu0 %v2833
    %v2974 = vpop.f32.mrb[0].mxu0
    %v2975 = vadd.f32 %v2434, %v2974
    %v2976 = vpop.f32.mrb[0].mxu0
    %2977 = vdwg.mxu0
    %v2978 = vmul.f32 %v2905, %v2975
    %v2979 = vadd.f32 %v2743, %v2978
    %2981 = vrot.lane.b32.xlu0 %v2979, 6
    %v2982 = vpop.permute.xlu0 %2981
    %vm2984 = vcmask 58416
    %2985 = vst.msk [vmem:[%s20] sm:$0x3] %vm2984, %v2982
    %v2987 = vlaneseq
    %v2988 = vshrl.u32 %v2987, 7
    %v2989 = vsub.s32 0, %v2988
    %v2990 = vrot.slane %v2160, %v2989
    %v2992 = vadd.f32 %v2907, %v2990
    %v2993 = vtanh.pop %v2992
    %v2995 = vsel %vm336, %v2993, 0
    %2997 = vmatprep.subr.mxu0 0.0
    %2998 = vmatpush1.msra.mxu0 %v2130
    %2999 = vmatprep.subr.mxu0 0.0
    %3000 = vmatpush1.msra.mxu0 %v2131
    %3001 = vmatprep.subr.mxu0 0.0
    %3002 = vmatpush1.msra.mxu0 %v2132
    %3003 = vmatprep.subr.mxu0 0.0
    %3004 = vmatpush1.msra.mxu0 %v2133
    %3005 = vmatprep.subr.mxu0 0.0
    %3006 = vmatpush1.msra.mxu0 0.0
    %3007 = vmatprep.subr.mxu0 0.0
    %3008 = vmatpush1.msra.mxu0 0.0
    %3009 = vmatprep.subr.mxu0 0.0
    %3010 = vmatpush1.msra.mxu0 0.0
    %3011 = vmatprep.subr.mxu0 0.0
    %3012 = vmatpush1.msra.mxu0 0.0
    %3013 = vmatprep.subr.mxu0 0.0
    %3014 = vmatpush1.msra.mxu0 0.0
    %3015 = vmatprep.subr.mxu0 0.0
    %3016 = vmatpush1.msra.mxu0 0.0
    %3017 = vmatprep.subr.mxu0 0.0
    %3018 = vmatpush1.msra.mxu0 0.0
    %3019 = vmatprep.subr.mxu0 0.0
    %3020 = vmatpush1.msra.mxu0 0.0
    %3021 = vmatprep.subr.mxu0 0.0
    %3022 = vmatpush1.msra.mxu0 0.0
    %3023 = vmatprep.subr.mxu0 0.0
    %3024 = vmatpush1.msra.mxu0 0.0
    %3025 = vmatprep.subr.mxu0 0.0
    %3026 = vmatpush1.msra.mxu0 0.0
    %3027 = vmatprep.subr.mxu0 0.0
    %3028 = vmatpush1.msra.mxu0 0.0
    %3029 = vmatprep.subr.mxu0 0.0
    %3030 = vmatpush1.msra.mxu0 0.0
    %3031 = vmatprep.subr.mxu0 0.0
    %3032 = vmatpush1.msra.mxu0 0.0
    %3033 = vmatprep.subr.mxu0 0.0
    %3034 = vmatpush1.msra.mxu0 0.0
    %3035 = vmatprep.subr.mxu0 0.0
    %3036 = vmatpush1.msra.mxu0 0.0
    %3037 = vmatprep.subr.mxu0 0.0
    %3038 = vmatpush1.msra.mxu0 0.0
    %3039 = vmatprep.subr.mxu0 0.0
    %3040 = vmatpush1.msra.mxu0 0.0
    %3041 = vmatprep.subr.mxu0 0.0
    %3042 = vmatpush1.msra.mxu0 0.0
    %3043 = vmatprep.subr.mxu0 0.0
    %3044 = vmatpush1.msra.mxu0 0.0
    %3045 = vmatprep.subr.mxu0 0.0
    %3046 = vmatpush1.msra.mxu0 0.0
    %3047 = vmatprep.subr.mxu0 0.0
    %3048 = vmatpush1.msra.mxu0 0.0
    %3049 = vmatprep.subr.mxu0 0.0
    %3050 = vmatpush1.msra.mxu0 0.0
    %3051 = vmatprep.subr.mxu0 0.0
    %3052 = vmatpush1.msra.mxu0 0.0
    %3053 = vmatprep.subr.mxu0 0.0
    %3054 = vmatpush1.msra.mxu0 0.0
    %3055 = vmatprep.subr.mxu0 0.0
    %3056 = vmatpush1.msra.mxu0 0.0
    %3057 = vmatprep.subr.mxu0 0.0
    %3058 = vmatpush1.msra.mxu0 0.0
    %3059 = vmatprep.subr.mxu0 0.0
    %3060 = vmatpush1.msra.mxu0 0.0
    %3061 = vmatprep.mubr.f32.mxu0 0.0
    %3062 = vmatmul.mubr.f32.gmra.mrb[0].mxu0 %v2995
    %v3063 = vpop.f32.mrb[0].mxu0
    %v3064 = vadd.f32 %v2272, %v3063
    %v3065 = vpop.f32.mrb[0].mxu0
    %3066 = vdwg.mxu0
    %v3067 = vtanh.pop %v3064
    %v3069 = vsel %vm336, %v3067, 0
    %3071 = vmatprep.subr.mxu0 0.0
    %3072 = vmatpush1.msra.mxu0 %v2135
    %3073 = vmatprep.subr.mxu0 0.0
    %3074 = vmatpush1.msra.mxu0 %v2136
    %3075 = vmatprep.subr.mxu0 0.0
    %3076 = vmatpush1.msra.mxu0 %v2137
    %3077 = vmatprep.subr.mxu0 0.0
    %3078 = vmatpush1.msra.mxu0 %v2138
    %3079 = vmatprep.subr.mxu0 0.0
    %3080 = vmatpush1.msra.mxu0 0.0
    %3081 = vmatprep.subr.mxu0 0.0
    %3082 = vmatpush1.msra.mxu0 0.0
    %3083 = vmatprep.subr.mxu0 0.0
    %3084 = vmatpush1.msra.mxu0 0.0
    %3085 = vmatprep.subr.mxu0 0.0
    %3086 = vmatpush1.msra.mxu0 0.0
    %3087 = vmatprep.subr.mxu0 0.0
    %3088 = vmatpush1.msra.mxu0 0.0
    %3089 = vmatprep.subr.mxu0 0.0
    %3090 = vmatpush1.msra.mxu0 0.0
    %3091 = vmatprep.subr.mxu0 0.0
    %3092 = vmatpush1.msra.mxu0 0.0
    %3093 = vmatprep.subr.mxu0 0.0
    %3094 = vmatpush1.msra.mxu0 0.0
    %3095 = vmatprep.subr.mxu0 0.0
    %3096 = vmatpush1.msra.mxu0 0.0
    %3097 = vmatprep.subr.mxu0 0.0
    %3098 = vmatpush1.msra.mxu0 0.0
    %3099 = vmatprep.subr.mxu0 0.0
    %3100 = vmatpush1.msra.mxu0 0.0
    %3101 = vmatprep.subr.mxu0 0.0
    %3102 = vmatpush1.msra.mxu0 0.0
    %3103 = vmatprep.subr.mxu0 0.0
    %3104 = vmatpush1.msra.mxu0 0.0
    %3105 = vmatprep.subr.mxu0 0.0
    %3106 = vmatpush1.msra.mxu0 0.0
    %3107 = vmatprep.subr.mxu0 0.0
    %3108 = vmatpush1.msra.mxu0 0.0
    %3109 = vmatprep.subr.mxu0 0.0
    %3110 = vmatpush1.msra.mxu0 0.0
    %3111 = vmatprep.subr.mxu0 0.0
    %3112 = vmatpush1.msra.mxu0 0.0
    %3113 = vmatprep.subr.mxu0 0.0
    %3114 = vmatpush1.msra.mxu0 0.0
    %3115 = vmatprep.subr.mxu0 0.0
    %3116 = vmatpush1.msra.mxu0 0.0
    %3117 = vmatprep.subr.mxu0 0.0
    %3118 = vmatpush1.msra.mxu0 0.0
    %3119 = vmatprep.subr.mxu0 0.0
    %3120 = vmatpush1.msra.mxu0 0.0
    %3121 = vmatprep.subr.mxu0 0.0
    %3122 = vmatpush1.msra.mxu0 0.0
    %3123 = vmatprep.subr.mxu0 0.0
    %3124 = vmatpush1.msra.mxu0 0.0
    %3125 = vmatprep.subr.mxu0 0.0
    %3126 = vmatpush1.msra.mxu0 0.0
    %3127 = vmatprep.subr.mxu0 0.0
    %3128 = vmatpush1.msra.mxu0 0.0
    %3129 = vmatprep.subr.mxu0 0.0
    %3130 = vmatpush1.msra.mxu0 0.0
    %3131 = vmatprep.subr.mxu0 0.0
    %3132 = vmatpush1.msra.mxu0 0.0
    %3133 = vmatprep.subr.mxu0 0.0
    %3134 = vmatpush1.msra.mxu0 0.0
    %3135 = vmatprep.mubr.f32.mxu0 0.0
    %3136 = vmatmul.mubr.f32.gmra.mrb[0].mxu0 %v3069
    %v3137 = vpop.f32.mrb[0].mxu0
    %v3138 = vadd.f32 %v2352, %v3137
    %v3139 = vpop.f32.mrb[0].mxu0
    %3140 = vdwg.mxu0
    %v3141 = vstv %s2176
    %v3142 = vmul.f32 %v3141, %v3138
    %v3143 = vadd.f32 %v2907, %v3142
    %3144 = vmatprep.subr.mxu0 0.0
    %3145 = vmatpush1.msra.mxu0 %v2140
    %3146 = vmatprep.subr.mxu0 0.0
    %3147 = vmatpush1.msra.mxu0 %v2141
    %3148 = vmatprep.subr.mxu0 0.0
    %3149 = vmatpush1.msra.mxu0 %v2142
    %3150 = vmatprep.subr.mxu0 0.0
    %3151 = vmatpush1.msra.mxu0 %v2143
    %3152 = vmatprep.subr.mxu0 0.0
    %3153 = vmatpush1.msra.mxu0 0.0
    %3154 = vmatprep.subr.mxu0 0.0
    %3155 = vmatpush1.msra.mxu0 0.0
    %3156 = vmatprep.subr.mxu0 0.0
    %3157 = vmatpush1.msra.mxu0 0.0
    %3158 = vmatprep.subr.mxu0 0.0
    %3159 = vmatpush1.msra.mxu0 0.0
    %3160 = vmatprep.subr.mxu0 0.0
    %3161 = vmatpush1.msra.mxu0 0.0
    %3162 = vmatprep.subr.mxu0 0.0
    %3163 = vmatpush1.msra.mxu0 0.0
    %3164 = vmatprep.subr.mxu0 0.0
    %3165 = vmatpush1.msra.mxu0 0.0
    %3166 = vmatprep.subr.mxu0 0.0
    %3167 = vmatpush1.msra.mxu0 0.0
    %3168 = vmatprep.subr.mxu0 0.0
    %3169 = vmatpush1.msra.mxu0 0.0
    %3170 = vmatprep.subr.mxu0 0.0
    %3171 = vmatpush1.msra.mxu0 0.0
    %3172 = vmatprep.subr.mxu0 0.0
    %3173 = vmatpush1.msra.mxu0 0.0
    %3174 = vmatprep.subr.mxu0 0.0
    %3175 = vmatpush1.msra.mxu0 0.0
    %3176 = vmatprep.subr.mxu0 0.0
    %3177 = vmatpush1.msra.mxu0 0.0
    %3178 = vmatprep.subr.mxu0 0.0
    %3179 = vmatpush1.msra.mxu0 0.0
    %3180 = vmatprep.subr.mxu0 0.0
    %3181 = vmatpush1.msra.mxu0 0.0
    %3182 = vmatprep.subr.mxu0 0.0
    %3183 = vmatpush1.msra.mxu0 0.0
    %3184 = vmatprep.subr.mxu0 0.0
    %3185 = vmatpush1.msra.mxu0 0.0
    %3186 = vmatprep.subr.mxu0 0.0
    %3187 = vmatpush1.msra.mxu0 0.0
    %3188 = vmatprep.subr.mxu0 0.0
    %3189 = vmatpush1.msra.mxu0 0.0
    %3190 = vmatprep.subr.mxu0 0.0
    %3191 = vmatpush1.msra.mxu0 0.0
    %3192 = vmatprep.subr.mxu0 0.0
    %3193 = vmatpush1.msra.mxu0 0.0
    %3194 = vmatprep.subr.mxu0 0.0
    %3195 = vmatpush1.msra.mxu0 0.0
    %3196 = vmatprep.subr.mxu0 0.0
    %3197 = vmatpush1.msra.mxu0 0.0
    %3198 = vmatprep.subr.mxu0 0.0
    %3199 = vmatpush1.msra.mxu0 0.0
    %3200 = vmatprep.subr.mxu0 0.0
    %3201 = vmatpush1.msra.mxu0 0.0
    %3202 = vmatprep.subr.mxu0 0.0
    %3203 = vmatpush1.msra.mxu0 0.0
    %3204 = vmatprep.subr.mxu0 0.0
    %3205 = vmatpush1.msra.mxu0 0.0
    %3206 = vmatprep.subr.mxu0 0.0
    %3207 = vmatpush1.msra.mxu0 0.0
    %3208 = vmatprep.mubr.f32.mxu0 0.0
    %3209 = vmatmul.mubr.f32.gmra.mrb[0].mxu0 %v3069
    %v3210 = vpop.f32.mrb[0].mxu0
    %v3211 = vadd.f32 %v2434, %v3210
    %v3212 = vpop.f32.mrb[0].mxu0
    %3213 = vdwg.mxu0
    %v3214 = vmul.f32 %v3141, %v3211
    %v3215 = vadd.f32 %v2979, %v3214
    %3217 = vrot.lane.b32.xlu0 %v3215, 8
    %v3218 = vpop.permute.xlu0 %3217
    %vm3220 = vcmask 74816
    %3221 = vst.msk [vmem:[%s20] sm:$0x3] %vm3220, %v3218
    %v3223 = vlaneseq
    %v3224 = vshrl.u32 %v3223, 7
    %v3225 = vsub.s32 0, %v3224
    %v3226 = vrot.slane %v2164, %v3225
    %v3228 = vadd.f32 %v3143, %v3226
    %v3229 = vtanh.pop %v3228
    %v3231 = vsel %vm336, %v3229, 0
    %3233 = vmatprep.subr.mxu0 0.0
    %3234 = vmatpush1.msra.mxu0 %v2130
    %3235 = vmatprep.subr.mxu0 0.0
    %3236 = vmatpush1.msra.mxu0 %v2131
    %3237 = vmatprep.subr.mxu0 0.0
    %3238 = vmatpush1.msra.mxu0 %v2132
    %3239 = vmatprep.subr.mxu0 0.0
    %3240 = vmatpush1.msra.mxu0 %v2133
    %3241 = vmatprep.subr.mxu0 0.0
    %3242 = vmatpush1.msra.mxu0 0.0
    %3243 = vmatprep.subr.mxu0 0.0
    %3244 = vmatpush1.msra.mxu0 0.0
    %3245 = vmatprep.subr.mxu0 0.0
    %3246 = vmatpush1.msra.mxu0 0.0
    %3247 = vmatprep.subr.mxu0 0.0
    %3248 = vmatpush1.msra.mxu0 0.0
    %3249 = vmatprep.subr.mxu0 0.0
    %3250 = vmatpush1.msra.mxu0 0.0
    %3251 = vmatprep.subr.mxu0 0.0
    %3252 = vmatpush1.msra.mxu0 0.0
    %3253 = vmatprep.subr.mxu0 0.0
    %3254 = vmatpush1.msra.mxu0 0.0
    %3255 = vmatprep.subr.mxu0 0.0
    %3256 = vmatpush1.msra.mxu0 0.0
    %3257 = vmatprep.subr.mxu0 0.0
    %3258 = vmatpush1.msra.mxu0 0.0
    %3259 = vmatprep.subr.mxu0 0.0
    %3260 = vmatpush1.msra.mxu0 0.0
    %3261 = vmatprep.subr.mxu0 0.0
    %3262 = vmatpush1.msra.mxu0 0.0
    %3263 = vmatprep.subr.mxu0 0.0
    %3264 = vmatpush1.msra.mxu0 0.0
    %3265 = vmatprep.subr.mxu0 0.0
    %3266 = vmatpush1.msra.mxu0 0.0
    %3267 = vmatprep.subr.mxu0 0.0
    %3268 = vmatpush1.msra.mxu0 0.0
    %3269 = vmatprep.subr.mxu0 0.0
    %3270 = vmatpush1.msra.mxu0 0.0
    %3271 = vmatprep.subr.mxu0 0.0
    %3272 = vmatpush1.msra.mxu0 0.0
    %3273 = vmatprep.subr.mxu0 0.0
    %3274 = vmatpush1.msra.mxu0 0.0
    %3275 = vmatprep.subr.mxu0 0.0
    %3276 = vmatpush1.msra.mxu0 0.0
    %3277 = vmatprep.subr.mxu0 0.0
    %3278 = vmatpush1.msra.mxu0 0.0
    %3279 = vmatprep.subr.mxu0 0.0
    %3280 = vmatpush1.msra.mxu0 0.0
    %3281 = vmatprep.subr.mxu0 0.0
    %3282 = vmatpush1.msra.mxu0 0.0
    %3283 = vmatprep.subr.mxu0 0.0
    %3284 = vmatpush1.msra.mxu0 0.0
    %3285 = vmatprep.subr.mxu0 0.0
    %3286 = vmatpush1.msra.mxu0 0.0
    %3287 = vmatprep.subr.mxu0 0.0
    %3288 = vmatpush1.msra.mxu0 0.0
    %3289 = vmatprep.subr.mxu0 0.0
    %3290 = vmatpush1.msra.mxu0 0.0
    %3291 = vmatprep.subr.mxu0 0.0
    %3292 = vmatpush1.msra.mxu0 0.0
    %3293 = vmatprep.subr.mxu0 0.0
    %3294 = vmatpush1.msra.mxu0 0.0
    %3295 = vmatprep.subr.mxu0 0.0
    %3296 = vmatpush1.msra.mxu0 0.0
    %3297 = vmatprep.mubr.f32.mxu0 0.0
    %3298 = vmatmul.mubr.f32.gmra.mrb[0].mxu0 %v3231
    %v3299 = vpop.f32.mrb[0].mxu0
    %v3300 = vadd.f32 %v2272, %v3299
    %v3301 = vpop.f32.mrb[0].mxu0
    %3302 = vdwg.mxu0
    %v3303 = vtanh.pop %v3300
    %v3305 = vsel %vm336, %v3303, 0
    %3307 = vmatprep.subr.mxu0 0.0
    %3308 = vmatpush1.msra.mxu0 %v2135
    %3309 = vmatprep.subr.mxu0 0.0
    %3310 = vmatpush1.msra.mxu0 %v2136
    %3311 = vmatprep.subr.mxu0 0.0
    %3312 = vmatpush1.msra.mxu0 %v2137
    %3313 = vmatprep.subr.mxu0 0.0
    %3314 = vmatpush1.msra.mxu0 %v2138
    %3315 = vmatprep.subr.mxu0 0.0
    %3316 = vmatpush1.msra.mxu0 0.0
    %3317 = vmatprep.subr.mxu0 0.0
    %3318 = vmatpush1.msra.mxu0 0.0
    %3319 = vmatprep.subr.mxu0 0.0
    %3320 = vmatpush1.msra.mxu0 0.0
    %3321 = vmatprep.subr.mxu0 0.0
    %3322 = vmatpush1.msra.mxu0 0.0
    %3323 = vmatprep.subr.mxu0 0.0
    %3324 = vmatpush1.msra.mxu0 0.0
    %3325 = vmatprep.subr.mxu0 0.0
    %3326 = vmatpush1.msra.mxu0 0.0
    %3327 = vmatprep.subr.mxu0 0.0
    %3328 = vmatpush1.msra.mxu0 0.0
    %3329 = vmatprep.subr.mxu0 0.0
    %3330 = vmatpush1.msra.mxu0 0.0
    %3331 = vmatprep.subr.mxu0 0.0
    %3332 = vmatpush1.msra.mxu0 0.0
    %3333 = vmatprep.subr.mxu0 0.0
    %3334 = vmatpush1.msra.mxu0 0.0
    %3335 = vmatprep.subr.mxu0 0.0
    %3336 = vmatpush1.msra.mxu0 0.0
    %3337 = vmatprep.subr.mxu0 0.0
    %3338 = vmatpush1.msra.mxu0 0.0
    %3339 = vmatprep.subr.mxu0 0.0
    %3340 = vmatpush1.msra.mxu0 0.0
    %3341 = vmatprep.subr.mxu0 0.0
    %3342 = vmatpush1.msra.mxu0 0.0
    %3343 = vmatprep.subr.mxu0 0.0
    %3344 = vmatpush1.msra.mxu0 0.0
    %3345 = vmatprep.subr.mxu0 0.0
    %3346 = vmatpush1.msra.mxu0 0.0
    %3347 = vmatprep.subr.mxu0 0.0
    %3348 = vmatpush1.msra.mxu0 0.0
    %3349 = vmatprep.subr.mxu0 0.0
    %3350 = vmatpush1.msra.mxu0 0.0
    %3351 = vmatprep.subr.mxu0 0.0
    %3352 = vmatpush1.msra.mxu0 0.0
    %3353 = vmatprep.subr.mxu0 0.0
    %3354 = vmatpush1.msra.mxu0 0.0
    %3355 = vmatprep.subr.mxu0 0.0
    %3356 = vmatpush1.msra.mxu0 0.0
    %3357 = vmatprep.subr.mxu0 0.0
    %3358 = vmatpush1.msra.mxu0 0.0
    %3359 = vmatprep.subr.mxu0 0.0
    %3360 = vmatpush1.msra.mxu0 0.0
    %3361 = vmatprep.subr.mxu0 0.0
    %3362 = vmatpush1.msra.mxu0 0.0
    %3363 = vmatprep.subr.mxu0 0.0
    %3364 = vmatpush1.msra.mxu0 0.0
    %3365 = vmatprep.subr.mxu0 0.0
    %3366 = vmatpush1.msra.mxu0 0.0
    %3367 = vmatprep.subr.mxu0 0.0
    %3368 = vmatpush1.msra.mxu0 0.0
    %3369 = vmatprep.subr.mxu0 0.0
    %3370 = vmatpush1.msra.mxu0 0.0
    %3371 = vmatprep.mubr.f32.mxu0 0.0
    %3372 = vmatmul.mubr.f32.gmra.mrb[0].mxu0 %v3305
    %v3373 = vpop.f32.mrb[0].mxu0
    %v3374 = vadd.f32 %v2352, %v3373
    %v3375 = vpop.f32.mrb[0].mxu0
    %3376 = vdwg.mxu0
    %v3377 = vstv %s2177
    %v3378 = vmul.f32 %v3377, %v3374
    %v3379 = vadd.f32 %v3143, %v3378
    %3380 = vmatprep.subr.mxu0 0.0
    %3381 = vmatpush1.msra.mxu0 %v2140
    %3382 = vmatprep.subr.mxu0 0.0
    %3383 = vmatpush1.msra.mxu0 %v2141
    %3384 = vmatprep.subr.mxu0 0.0
    %3385 = vmatpush1.msra.mxu0 %v2142
    %3386 = vmatprep.subr.mxu0 0.0
    %3387 = vmatpush1.msra.mxu0 %v2143
    %3388 = vmatprep.subr.mxu0 0.0
    %3389 = vmatpush1.msra.mxu0 0.0
    %3390 = vmatprep.subr.mxu0 0.0
    %3391 = vmatpush1.msra.mxu0 0.0
    %3392 = vmatprep.subr.mxu0 0.0
    %3393 = vmatpush1.msra.mxu0 0.0
    %3394 = vmatprep.subr.mxu0 0.0
    %3395 = vmatpush1.msra.mxu0 0.0
    %3396 = vmatprep.subr.mxu0 0.0
    %3397 = vmatpush1.msra.mxu0 0.0
    %3398 = vmatprep.subr.mxu0 0.0
    %3399 = vmatpush1.msra.mxu0 0.0
    %3400 = vmatprep.subr.mxu0 0.0
    %3401 = vmatpush1.msra.mxu0 0.0
    %3402 = vmatprep.subr.mxu0 0.0
    %3403 = vmatpush1.msra.mxu0 0.0
    %3404 = vmatprep.subr.mxu0 0.0
    %3405 = vmatpush1.msra.mxu0 0.0
    %3406 = vmatprep.subr.mxu0 0.0
    %3407 = vmatpush1.msra.mxu0 0.0
    %3408 = vmatprep.subr.mxu0 0.0
    %3409 = vmatpush1.msra.mxu0 0.0
    %3410 = vmatprep.subr.mxu0 0.0
    %3411 = vmatpush1.msra.mxu0 0.0
    %3412 = vmatprep.subr.mxu0 0.0
    %3413 = vmatpush1.msra.mxu0 0.0
    %3414 = vmatprep.subr.mxu0 0.0
    %3415 = vmatpush1.msra.mxu0 0.0
    %3416 = vmatprep.subr.mxu0 0.0
    %3417 = vmatpush1.msra.mxu0 0.0
    %3418 = vmatprep.subr.mxu0 0.0
    %3419 = vmatpush1.msra.mxu0 0.0
    %3420 = vmatprep.subr.mxu0 0.0
    %3421 = vmatpush1.msra.mxu0 0.0
    %3422 = vmatprep.subr.mxu0 0.0
    %3423 = vmatpush1.msra.mxu0 0.0
    %3424 = vmatprep.subr.mxu0 0.0
    %3425 = vmatpush1.msra.mxu0 0.0
    %3426 = vmatprep.subr.mxu0 0.0
    %3427 = vmatpush1.msra.mxu0 0.0
    %3428 = vmatprep.subr.mxu0 0.0
    %3429 = vmatpush1.msra.mxu0 0.0
    %3430 = vmatprep.subr.mxu0 0.0
    %3431 = vmatpush1.msra.mxu0 0.0
    %3432 = vmatprep.subr.mxu0 0.0
    %3433 = vmatpush1.msra.mxu0 0.0
    %3434 = vmatprep.subr.mxu0 0.0
    %3435 = vmatpush1.msra.mxu0 0.0
    %3436 = vmatprep.subr.mxu0 0.0
    %3437 = vmatpush1.msra.mxu0 0.0
    %3438 = vmatprep.subr.mxu0 0.0
    %3439 = vmatpush1.msra.mxu0 0.0
    %3440 = vmatprep.subr.mxu0 0.0
    %3441 = vmatpush1.msra.mxu0 0.0
    %3442 = vmatprep.subr.mxu0 0.0
    %3443 = vmatpush1.msra.mxu0 0.0
    %3444 = vmatprep.mubr.f32.mxu0 0.0
    %3445 = vmatmul.mubr.f32.gmra.mrb[0].mxu0 %v3305
    %v3446 = vpop.f32.mrb[0].mxu0
    %v3447 = vadd.f32 %v2434, %v3446
    %v3448 = vpop.f32.mrb[0].mxu0
    %3449 = vdwg.mxu0
    %v3450 = vmul.f32 %v3377, %v3447
    %v3451 = vadd.f32 %v3215, %v3450
    %3453 = vrot.lane.b32.xlu0 %v3451, 10
    %v3454 = vpop.permute.xlu0 %3453
    %vm3456 = vcmask 91216
    %3457 = vst.msk [vmem:[%s20] sm:$0x3] %vm3456, %v3454
    %v3459 = vlaneseq
    %v3460 = vshrl.u32 %v3459, 7
    %v3461 = vsub.s32 0, %v3460
    %v3462 = vrot.slane %v2168, %v3461
    %v3464 = vadd.f32 %v3379, %v3462
    %v3465 = vtanh.pop %v3464
    %v3467 = vsel %vm336, %v3465, 0
    %3469 = vmatprep.subr.mxu0 0.0
    %3470 = vmatpush1.msra.mxu0 %v2130
    %3471 = vmatprep.subr.mxu0 0.0
    %3472 = vmatpush1.msra.mxu0 %v2131
    %3473 = vmatprep.subr.mxu0 0.0
    %3474 = vmatpush1.msra.mxu0 %v2132
    %3475 = vmatprep.subr.mxu0 0.0
    %3476 = vmatpush1.msra.mxu0 %v2133
    %3477 = vmatprep.subr.mxu0 0.0
    %3478 = vmatpush1.msra.mxu0 0.0
    %3479 = vmatprep.subr.mxu0 0.0
    %3480 = vmatpush1.msra.mxu0 0.0
    %3481 = vmatprep.subr.mxu0 0.0
    %3482 = vmatpush1.msra.mxu0 0.0
    %3483 = vmatprep.subr.mxu0 0.0
    %3484 = vmatpush1.msra.mxu0 0.0
    %3485 = vmatprep.subr.mxu0 0.0
    %3486 = vmatpush1.msra.mxu0 0.0
    %3487 = vmatprep.subr.mxu0 0.0
    %3488 = vmatpush1.msra.mxu0 0.0
    %3489 = vmatprep.subr.mxu0 0.0
    %3490 = vmatpush1.msra.mxu0 0.0
    %3491 = vmatprep.subr.mxu0 0.0
    %3492 = vmatpush1.msra.mxu0 0.0
    %3493 = vmatprep.subr.mxu0 0.0
    %3494 = vmatpush1.msra.mxu0 0.0
    %3495 = vmatprep.subr.mxu0 0.0
    %3496 = vmatpush1.msra.mxu0 0.0
    %3497 = vmatprep.subr.mxu0 0.0
    %3498 = vmatpush1.msra.mxu0 0.0
    %3499 = vmatprep.subr.mxu0 0.0
    %3500 = vmatpush1.msra.mxu0 0.0
    %3501 = vmatprep.subr.mxu0 0.0
    %3502 = vmatpush1.msra.mxu0 0.0
    %3503 = vmatprep.subr.mxu0 0.0
    %3504 = vmatpush1.msra.mxu0 0.0
    %3505 = vmatprep.subr.mxu0 0.0
    %3506 = vmatpush1.msra.mxu0 0.0
    %3507 = vmatprep.subr.mxu0 0.0
    %3508 = vmatpush1.msra.mxu0 0.0
    %3509 = vmatprep.subr.mxu0 0.0
    %3510 = vmatpush1.msra.mxu0 0.0
    %3511 = vmatprep.subr.mxu0 0.0
    %3512 = vmatpush1.msra.mxu0 0.0
    %3513 = vmatprep.subr.mxu0 0.0
    %3514 = vmatpush1.msra.mxu0 0.0
    %3515 = vmatprep.subr.mxu0 0.0
    %3516 = vmatpush1.msra.mxu0 0.0
    %3517 = vmatprep.subr.mxu0 0.0
    %3518 = vmatpush1.msra.mxu0 0.0
    %3519 = vmatprep.subr.mxu0 0.0
    %3520 = vmatpush1.msra.mxu0 0.0
    %3521 = vmatprep.subr.mxu0 0.0
    %3522 = vmatpush1.msra.mxu0 0.0
    %3523 = vmatprep.subr.mxu0 0.0
    %3524 = vmatpush1.msra.mxu0 0.0
    %3525 = vmatprep.subr.mxu0 0.0
    %3526 = vmatpush1.msra.mxu0 0.0
    %3527 = vmatprep.subr.mxu0 0.0
    %3528 = vmatpush1.msra.mxu0 0.0
    %3529 = vmatprep.subr.mxu0 0.0
    %3530 = vmatpush1.msra.mxu0 0.0
    %3531 = vmatprep.subr.mxu0 0.0
    %3532 = vmatpush1.msra.mxu0 0.0
    %3533 = vmatprep.mubr.f32.mxu0 0.0
    %3534 = vmatmul.mubr.f32.gmra.mrb[0].mxu0 %v3467
    %v3535 = vpop.f32.mrb[0].mxu0
    %v3536 = vadd.f32 %v2272, %v3535
    %v3537 = vpop.f32.mrb[0].mxu0
    %3538 = vdwg.mxu0
    %v3539 = vtanh.pop %v3536
    %v3541 = vsel %vm336, %v3539, 0
    %3543 = vmatprep.subr.mxu0 0.0
    %3544 = vmatpush1.msra.mxu0 %v2135
    %3545 = vmatprep.subr.mxu0 0.0
    %3546 = vmatpush1.msra.mxu0 %v2136
    %3547 = vmatprep.subr.mxu0 0.0
    %3548 = vmatpush1.msra.mxu0 %v2137
    %3549 = vmatprep.subr.mxu0 0.0
    %3550 = vmatpush1.msra.mxu0 %v2138
    %3551 = vmatprep.subr.mxu0 0.0
    %3552 = vmatpush1.msra.mxu0 0.0
    %3553 = vmatprep.subr.mxu0 0.0
    %3554 = vmatpush1.msra.mxu0 0.0
    %3555 = vmatprep.subr.mxu0 0.0
    %3556 = vmatpush1.msra.mxu0 0.0
    %3557 = vmatprep.subr.mxu0 0.0
    %3558 = vmatpush1.msra.mxu0 0.0
    %3559 = vmatprep.subr.mxu0 0.0
    %3560 = vmatpush1.msra.mxu0 0.0
    %3561 = vmatprep.subr.mxu0 0.0
    %3562 = vmatpush1.msra.mxu0 0.0
    %3563 = vmatprep.subr.mxu0 0.0
    %3564 = vmatpush1.msra.mxu0 0.0
    %3565 = vmatprep.subr.mxu0 0.0
    %3566 = vmatpush1.msra.mxu0 0.0
    %3567 = vmatprep.subr.mxu0 0.0
    %3568 = vmatpush1.msra.mxu0 0.0
    %3569 = vmatprep.subr.mxu0 0.0
    %3570 = vmatpush1.msra.mxu0 0.0
    %3571 = vmatprep.subr.mxu0 0.0
    %3572 = vmatpush1.msra.mxu0 0.0
    %3573 = vmatprep.subr.mxu0 0.0
    %3574 = vmatpush1.msra.mxu0 0.0
    %3575 = vmatprep.subr.mxu0 0.0
    %3576 = vmatpush1.msra.mxu0 0.0
    %3577 = vmatprep.subr.mxu0 0.0
    %3578 = vmatpush1.msra.mxu0 0.0
    %3579 = vmatprep.subr.mxu0 0.0
    %3580 = vmatpush1.msra.mxu0 0.0
    %3581 = vmatprep.subr.mxu0 0.0
    %3582 = vmatpush1.msra.mxu0 0.0
    %3583 = vmatprep.subr.mxu0 0.0
    %3584 = vmatpush1.msra.mxu0 0.0
    %3585 = vmatprep.subr.mxu0 0.0
    %3586 = vmatpush1.msra.mxu0 0.0
    %3587 = vmatprep.subr.mxu0 0.0
    %3588 = vmatpush1.msra.mxu0 0.0
    %3589 = vmatprep.subr.mxu0 0.0
    %3590 = vmatpush1.msra.mxu0 0.0
    %3591 = vmatprep.subr.mxu0 0.0
    %3592 = vmatpush1.msra.mxu0 0.0
    %3593 = vmatprep.subr.mxu0 0.0
    %3594 = vmatpush1.msra.mxu0 0.0
    %3595 = vmatprep.subr.mxu0 0.0
    %3596 = vmatpush1.msra.mxu0 0.0
    %3597 = vmatprep.subr.mxu0 0.0
    %3598 = vmatpush1.msra.mxu0 0.0
    %3599 = vmatprep.subr.mxu0 0.0
    %3600 = vmatpush1.msra.mxu0 0.0
    %3601 = vmatprep.subr.mxu0 0.0
    %3602 = vmatpush1.msra.mxu0 0.0
    %3603 = vmatprep.subr.mxu0 0.0
    %3604 = vmatpush1.msra.mxu0 0.0
    %3605 = vmatprep.subr.mxu0 0.0
    %3606 = vmatpush1.msra.mxu0 0.0
    %3607 = vmatprep.mubr.f32.mxu0 0.0
    %3608 = vmatmul.mubr.f32.gmra.mrb[0].mxu0 %v3541
    %v3609 = vpop.f32.mrb[0].mxu0
    %v3610 = vadd.f32 %v2352, %v3609
    %v3611 = vpop.f32.mrb[0].mxu0
    %3612 = vdwg.mxu0
    %v3613 = vstv %s2178
    %v3614 = vmul.f32 %v3613, %v3610
    %v3615 = vadd.f32 %v3379, %v3614
    %3616 = vmatprep.subr.mxu0 0.0
    %3617 = vmatpush1.msra.mxu0 %v2140
    %3618 = vmatprep.subr.mxu0 0.0
    %3619 = vmatpush1.msra.mxu0 %v2141
    %3620 = vmatprep.subr.mxu0 0.0
    %3621 = vmatpush1.msra.mxu0 %v2142
    %3622 = vmatprep.subr.mxu0 0.0
    %3623 = vmatpush1.msra.mxu0 %v2143
    %3624 = vmatprep.subr.mxu0 0.0
    %3625 = vmatpush1.msra.mxu0 0.0
    %3626 = vmatprep.subr.mxu0 0.0
    %3627 = vmatpush1.msra.mxu0 0.0
    %3628 = vmatprep.subr.mxu0 0.0
    %3629 = vmatpush1.msra.mxu0 0.0
    %3630 = vmatprep.subr.mxu0 0.0
    %3631 = vmatpush1.msra.mxu0 0.0
    %3632 = vmatprep.subr.mxu0 0.0
    %3633 = vmatpush1.msra.mxu0 0.0
    %3634 = vmatprep.subr.mxu0 0.0
    %3635 = vmatpush1.msra.mxu0 0.0
    %3636 = vmatprep.subr.mxu0 0.0
    %3637 = vmatpush1.msra.mxu0 0.0
    %3638 = vmatprep.subr.mxu0 0.0
    %3639 = vmatpush1.msra.mxu0 0.0
    %3640 = vmatprep.subr.mxu0 0.0
    %3641 = vmatpush1.msra.mxu0 0.0
    %3642 = vmatprep.subr.mxu0 0.0
    %3643 = vmatpush1.msra.mxu0 0.0
    %3644 = vmatprep.subr.mxu0 0.0
    %3645 = vmatpush1.msra.mxu0 0.0
    %3646 = vmatprep.subr.mxu0 0.0
    %3647 = vmatpush1.msra.mxu0 0.0
    %3648 = vmatprep.subr.mxu0 0.0
    %3649 = vmatpush1.msra.mxu0 0.0
    %3650 = vmatprep.subr.mxu0 0.0
    %3651 = vmatpush1.msra.mxu0 0.0
    %3652 = vmatprep.subr.mxu0 0.0
    %3653 = vmatpush1.msra.mxu0 0.0
    %3654 = vmatprep.subr.mxu0 0.0
    %3655 = vmatpush1.msra.mxu0 0.0
    %3656 = vmatprep.subr.mxu0 0.0
    %3657 = vmatpush1.msra.mxu0 0.0
    %3658 = vmatprep.subr.mxu0 0.0
    %3659 = vmatpush1.msra.mxu0 0.0
    %3660 = vmatprep.subr.mxu0 0.0
    %3661 = vmatpush1.msra.mxu0 0.0
    %3662 = vmatprep.subr.mxu0 0.0
    %3663 = vmatpush1.msra.mxu0 0.0
    %3664 = vmatprep.subr.mxu0 0.0
    %3665 = vmatpush1.msra.mxu0 0.0
    %3666 = vmatprep.subr.mxu0 0.0
    %3667 = vmatpush1.msra.mxu0 0.0
    %3668 = vmatprep.subr.mxu0 0.0
    %3669 = vmatpush1.msra.mxu0 0.0
    %3670 = vmatprep.subr.mxu0 0.0
    %3671 = vmatpush1.msra.mxu0 0.0
    %3672 = vmatprep.subr.mxu0 0.0
    %3673 = vmatpush1.msra.mxu0 0.0
    %3674 = vmatprep.subr.mxu0 0.0
    %3675 = vmatpush1.msra.mxu0 0.0
    %3676 = vmatprep.subr.mxu0 0.0
    %3677 = vmatpush1.msra.mxu0 0.0
    %3678 = vmatprep.subr.mxu0 0.0
    %3679 = vmatpush1.msra.mxu0 0.0
    %3680 = vmatprep.mubr.f32.mxu0 0.0
    %3681 = vmatmul.mubr.f32.gmra.mrb[0].mxu0 %v3541
    %v3682 = vpop.f32.mrb[0].mxu0
    %v3683 = vadd.f32 %v2434, %v3682
    %v3684 = vpop.f32.mrb[0].mxu0
    %3685 = vdwg.mxu0
    %v3686 = vmul.f32 %v3613, %v3683
    %v3687 = vadd.f32 %v3451, %v3686
    %3689 = vrot.lane.b32.xlu0 %v3687, 12
    %v3690 = vpop.permute.xlu0 %3689
    %vm3692 = vcmask 107616
    %3693 = vst.msk [vmem:[%s20] sm:$0x3] %vm3692, %v3690
    %v3695 = vlaneseq
    %v3696 = vshrl.u32 %v3695, 7
    %v3697 = vsub.s32 0, %v3696
    %v3698 = vrot.slane %v2172, %v3697
    %v3700 = vadd.f32 %v3615, %v3698
    %v3701 = vtanh.pop %v3700
    %v3703 = vsel %vm336, %v3701, 0
    %3705 = vmatprep.subr.mxu0 0.0
    %3706 = vmatpush1.msra.mxu0 %v2130
    %3707 = vmatprep.subr.mxu0 0.0
    %3708 = vmatpush1.msra.mxu0 %v2131
    %3709 = vmatprep.subr.mxu0 0.0
    %3710 = vmatpush1.msra.mxu0 %v2132
    %3711 = vmatprep.subr.mxu0 0.0
    %3712 = vmatpush1.msra.mxu0 %v2133
    %3713 = vmatprep.subr.mxu0 0.0
    %3714 = vmatpush1.msra.mxu0 0.0
    %3715 = vmatprep.subr.mxu0 0.0
    %3716 = vmatpush1.msra.mxu0 0.0
    %3717 = vmatprep.subr.mxu0 0.0
    %3718 = vmatpush1.msra.mxu0 0.0
    %3719 = vmatprep.subr.mxu0 0.0
    %3720 = vmatpush1.msra.mxu0 0.0
    %3721 = vmatprep.subr.mxu0 0.0
    %3722 = vmatpush1.msra.mxu0 0.0
    %3723 = vmatprep.subr.mxu0 0.0
    %3724 = vmatpush1.msra.mxu0 0.0
    %3725 = vmatprep.subr.mxu0 0.0
    %3726 = vmatpush1.msra.mxu0 0.0
    %3727 = vmatprep.subr.mxu0 0.0
    %3728 = vmatpush1.msra.mxu0 0.0
    %3729 = vmatprep.subr.mxu0 0.0
    %3730 = vmatpush1.msra.mxu0 0.0
    %3731 = vmatprep.subr.mxu0 0.0
    %3732 = vmatpush1.msra.mxu0 0.0
    %3733 = vmatprep.subr.mxu0 0.0
    %3734 = vmatpush1.msra.mxu0 0.0
    %3735 = vmatprep.subr.mxu0 0.0
    %3736 = vmatpush1.msra.mxu0 0.0
    %3737 = vmatprep.subr.mxu0 0.0
    %3738 = vmatpush1.msra.mxu0 0.0
    %3739 = vmatprep.subr.mxu0 0.0
    %3740 = vmatpush1.msra.mxu0 0.0
    %3741 = vmatprep.subr.mxu0 0.0
    %3742 = vmatpush1.msra.mxu0 0.0
    %3743 = vmatprep.subr.mxu0 0.0
    %3744 = vmatpush1.msra.mxu0 0.0
    %3745 = vmatprep.subr.mxu0 0.0
    %3746 = vmatpush1.msra.mxu0 0.0
    %3747 = vmatprep.subr.mxu0 0.0
    %3748 = vmatpush1.msra.mxu0 0.0
    %3749 = vmatprep.subr.mxu0 0.0
    %3750 = vmatpush1.msra.mxu0 0.0
    %3751 = vmatprep.subr.mxu0 0.0
    %3752 = vmatpush1.msra.mxu0 0.0
    %3753 = vmatprep.subr.mxu0 0.0
    %3754 = vmatpush1.msra.mxu0 0.0
    %3755 = vmatprep.subr.mxu0 0.0
    %3756 = vmatpush1.msra.mxu0 0.0
    %3757 = vmatprep.subr.mxu0 0.0
    %3758 = vmatpush1.msra.mxu0 0.0
    %3759 = vmatprep.subr.mxu0 0.0
    %3760 = vmatpush1.msra.mxu0 0.0
    %3761 = vmatprep.subr.mxu0 0.0
    %3762 = vmatpush1.msra.mxu0 0.0
    %3763 = vmatprep.subr.mxu0 0.0
    %3764 = vmatpush1.msra.mxu0 0.0
    %3765 = vmatprep.subr.mxu0 0.0
    %3766 = vmatpush1.msra.mxu0 0.0
    %3767 = vmatprep.subr.mxu0 0.0
    %3768 = vmatpush1.msra.mxu0 0.0
    %3769 = vmatprep.mubr.f32.mxu0 0.0
    %3770 = vmatmul.mubr.f32.gmra.mrb[0].mxu0 %v3703
    %v3771 = vpop.f32.mrb[0].mxu0
    %v3772 = vadd.f32 %v2272, %v3771
    %v3773 = vpop.f32.mrb[0].mxu0
    %3774 = vdwg.mxu0
    %v3775 = vtanh.pop %v3772
    %v3777 = vsel %vm336, %v3775, 0
    %3779 = vmatprep.subr.mxu0 0.0
    %3780 = vmatpush1.msra.mxu0 %v2140
    %3781 = vmatprep.subr.mxu0 0.0
    %3782 = vmatpush1.msra.mxu0 %v2141
    %3783 = vmatprep.subr.mxu0 0.0
    %3784 = vmatpush1.msra.mxu0 %v2142
    %3785 = vmatprep.subr.mxu0 0.0
    %3786 = vmatpush1.msra.mxu0 %v2143
    %3787 = vmatprep.subr.mxu0 0.0
    %3788 = vmatpush1.msra.mxu0 0.0
    %3789 = vmatprep.subr.mxu0 0.0
    %3790 = vmatpush1.msra.mxu0 0.0
    %3791 = vmatprep.subr.mxu0 0.0
    %3792 = vmatpush1.msra.mxu0 0.0
    %3793 = vmatprep.subr.mxu0 0.0
    %3794 = vmatpush1.msra.mxu0 0.0
    %3795 = vmatprep.subr.mxu0 0.0
    %3796 = vmatpush1.msra.mxu0 0.0
    %3797 = vmatprep.subr.mxu0 0.0
    %3798 = vmatpush1.msra.mxu0 0.0
    %3799 = vmatprep.subr.mxu0 0.0
    %3800 = vmatpush1.msra.mxu0 0.0
    %3801 = vmatprep.subr.mxu0 0.0
    %3802 = vmatpush1.msra.mxu0 0.0
    %3803 = vmatprep.subr.mxu0 0.0
    %3804 = vmatpush1.msra.mxu0 0.0
    %3805 = vmatprep.subr.mxu0 0.0
    %3806 = vmatpush1.msra.mxu0 0.0
    %3807 = vmatprep.subr.mxu0 0.0
    %3808 = vmatpush1.msra.mxu0 0.0
    %3809 = vmatprep.subr.mxu0 0.0
    %3810 = vmatpush1.msra.mxu0 0.0
    %3811 = vmatprep.subr.mxu0 0.0
    %3812 = vmatpush1.msra.mxu0 0.0
    %3813 = vmatprep.subr.mxu0 0.0
    %3814 = vmatpush1.msra.mxu0 0.0
    %3815 = vmatprep.subr.mxu0 0.0
    %3816 = vmatpush1.msra.mxu0 0.0
    %3817 = vmatprep.subr.mxu0 0.0
    %3818 = vmatpush1.msra.mxu0 0.0
    %3819 = vmatprep.subr.mxu0 0.0
    %3820 = vmatpush1.msra.mxu0 0.0
    %3821 = vmatprep.subr.mxu0 0.0
    %3822 = vmatpush1.msra.mxu0 0.0
    %3823 = vmatprep.subr.mxu0 0.0
    %3824 = vmatpush1.msra.mxu0 0.0
    %3825 = vmatprep.subr.mxu0 0.0
    %3826 = vmatpush1.msra.mxu0 0.0
    %3827 = vmatprep.subr.mxu0 0.0
    %3828 = vmatpush1.msra.mxu0 0.0
    %3829 = vmatprep.subr.mxu0 0.0
    %3830 = vmatpush1.msra.mxu0 0.0
    %3831 = vmatprep.subr.mxu0 0.0
    %3832 = vmatpush1.msra.mxu0 0.0
    %3833 = vmatprep.subr.mxu0 0.0
    %3834 = vmatpush1.msra.mxu0 0.0
    %3835 = vmatprep.subr.mxu0 0.0
    %3836 = vmatpush1.msra.mxu0 0.0
    %3837 = vmatprep.subr.mxu0 0.0
    %3838 = vmatpush1.msra.mxu0 0.0
    %3839 = vmatprep.subr.mxu0 0.0
    %3840 = vmatpush1.msra.mxu0 0.0
    %3841 = vmatprep.subr.mxu0 0.0
    %3842 = vmatpush1.msra.mxu0 0.0
    %3843 = vmatprep.mubr.f32.mxu0 0.0
    %3844 = vmatmul.mubr.f32.gmra.mrb[0].mxu0 %v3777
    %v3845 = vpop.f32.mrb[0].mxu0
    %v3846 = vadd.f32 %v2434, %v3845
    %v3847 = vpop.f32.mrb[0].mxu0
    %3848 = vdwg.mxu0
    %v3849 = vstv %s2180
    %v3850 = vmul.f32 %v3849, %v3846
    %v3851 = vadd.f32 %v3687, %v3850
    %3853 = vrot.lane.b32.xlu0 %v3851, 14
    %v3854 = vpop.permute.xlu0 %3853
    %vm3856 = vcmask 124016
    %3857 = vst.msk [vmem:[%s20] sm:$0x3] %vm3856, %v3854
    // Predicated region
    $region126: #{latent_node_forward.1} parent=1 // pred_check
      _
    $region127: #{latent_node_forward.1} parent=1 // pred_check_branch
      %3859 = sbr.rel (0) target = $region129
    $region128: #{latent_node_forward.1} parent=1 // pred_region
      _
    $region129: #{latent_node_forward.1} parent=1 // pred_fallthru
      _
    // Predicated region
    $region130: #{latent_node_forward.1} parent=1 // pred_check
      _
    $region131: #{latent_node_forward.1} parent=1 // pred_check_branch
      %3861 = sbr.rel (0) target = $region133
    $region132: #{latent_node_forward.1} parent=1 // pred_region
      _
    $region133: #{latent_node_forward.1} parent=1 // pred_fallthru
      _
    %3862 = vsyncpa [#allocation3], 1
    %3863 = vsyncpa [#allocation7], 1
    %3864 = vsyncpa [#allocation10], 1
    %3865 = vsyncpa [#allocation13], 1
    %3866 = vsyncpa [#allocation16], 1
    %3867 = vsyncpa [#allocation19], 1
    %3868 = vsyncpa [#allocation4], 1

</llo_original>
